<compile_context>
chip_gen: v6e
topology: v6e:2x2x1
jax: 0.10.0
libtpu: 0.0.40
codegen_flags: <defaults>
</compile_context>

<pallas_src>
import numpy as np
import jax
import jax.numpy as jnp
from jax.experimental import pallas as pl
from jax.experimental.pallas import tpu as pltpu

# ---- small, fixed shapes -----------------------------------------------------
B = 2                 # n_samples (kernel compiled for this static batch)
C, H, W = 4, 16, 16   # image_shape
D = C * H * W         # 1024 flattened features
HID = 128             # hidden width of the epsilon network
T = 8                 # number of diffusion steps

# ---- DDPM schedule (sampler.__init__ equivalent), computed on host -----------
_BETAS = np.linspace(1e-4, 0.02, T, dtype=np.float32)
_ALPHAS = 1.0 - _BETAS
_ALPHA_BAR = np.cumprod(_ALPHAS).astype(np.float32)

_COEF1 = (1.0 / np.sqrt(_ALPHAS)).astype(np.float32)                 # 1/sqrt(alpha_t)
_COEF2 = (_BETAS / np.sqrt(1.0 - _ALPHA_BAR)).astype(np.float32)     # beta_t/sqrt(1-abar_t)
_SIGMA = np.sqrt(_BETAS).astype(np.float32)
_SIGMA[0] = 0.0                                                      # no noise at t=0
COEFS = jnp.asarray(np.stack([_COEF1, _COEF2, _SIGMA], axis=1))      # (T, 3) f32

# loss_weight buffer from the module's __init__ (unused by forward, kept for parity)
_SNR = _ALPHA_BAR / (1.0 - _ALPHA_BAR)
LOSS_WEIGHT = jnp.asarray(np.minimum(_SNR, 5.0) / _SNR)


# ---- Pallas kernel: ALL T reverse-diffusion steps fused ----------------------
def fused_sampler_kernel(coefs_ref, x_ref, z_ref, temb_ref,
                         w1_ref, w2_ref, b2_ref, out_ref):
    """coefs_ref: SMEM (T, 3) = [coef1, coef2, sigma] per step; rest VMEM f32.

    For t = T-1 .. 0 (static unrolled loop), keeping x resident on-chip:
        h       = relu(x @ W1 + temb[t])      # temb already has b1 folded in
        eps_hat = h @ W2 + b2
        x       = coef1[t]*(x - coef2[t]*eps_hat) + sigma[t]*z[t]
    """
    w1 = w1_ref[...]          # (D, HID)  — loaded once, resident for all steps
    w2 = w2_ref[...]          # (HID, D)
    b2 = b2_ref[...]          # (1, D)
    x = x_ref[...]            # (B, D)    — x_T

    for i in range(T):                     # static unroll: T = 8
        t = T - 1 - i
        h = jnp.dot(x, w1, preferred_element_type=jnp.float32)          # MXU
        h = jnp.maximum(h + temb_ref[pl.ds(t, 1), :], 0.0)               # (B, HID)
        eps_hat = jnp.dot(h, w2, preferred_element_type=jnp.float32) + b2  # (B, D)

        c1 = coefs_ref[t, 0]
        c2 = coefs_ref[t, 1]
        x = c1 * (x - c2 * eps_hat)
        if t > 0:                          # sigma == 0 at t = 0: skip noise add
            x = x + coefs_ref[t, 2] * z_ref[t]

    # TODO(synk): with B=2 the (B, D) elementwise update uses 2/8 sublanes per
    # vreg; a (16, 128) relayout (or batch padded to a multiple of 8) would be
    # denser, but the matmuls dominate at this size.
    out_ref[...] = x


def run_sampler(coefs, x_T, z_all, temb_fused, w1, w2, b2):
    """Single pallas_call: whole problem (~1.1 MiB) lives in VMEM for all T steps."""
    return pl.pallas_call(
        fused_sampler_kernel,
        out_shape=jax.ShapeDtypeStruct((B, D), jnp.float32),
        in_specs=[
            pl.BlockSpec(memory_space=pltpu.MemorySpace.SMEM),   # coefs (T, 3)
            pl.BlockSpec(memory_space=pltpu.MemorySpace.VMEM),   # x_T   (B, D)
            pl.BlockSpec(memory_space=pltpu.MemorySpace.VMEM),   # z_all (T, B, D)
            pl.BlockSpec(memory_space=pltpu.MemorySpace.VMEM),   # temb  (T, HID)  (b1 folded)
            pl.BlockSpec(memory_space=pltpu.MemorySpace.VMEM),   # W1    (D, HID)
            pl.BlockSpec(memory_space=pltpu.MemorySpace.VMEM),   # W2    (HID, D)
            pl.BlockSpec(memory_space=pltpu.MemorySpace.VMEM),   # b2    (1, D)
        ],
        out_specs=pl.BlockSpec(memory_space=pltpu.MemorySpace.VMEM),
    )(coefs, x_T, z_all, temb_fused, w1, w2, b2)


# ---- deterministic parameter init (network.__init__ equivalent) --------------
def init_params(key):
    k1, k2, k3 = jax.random.split(key, 3)
    w1 = jax.random.normal(k1, (D, HID), jnp.float32) * (1.0 / jnp.sqrt(D))
    b1 = jnp.zeros((1, HID), jnp.float32)
    w2 = jax.random.normal(k2, (HID, D), jnp.float32) * (1.0 / jnp.sqrt(HID))
    b2 = jnp.zeros((1, D), jnp.float32)
    temb_table = jax.random.normal(k3, (T, HID), jnp.float32) * 0.02
    return w1, b1, w2, b2, temb_table


# ---- forward(): x_T ~ N(0,1), run the fused sampler --------------------------
@jax.jit
def _forward_jit(kx, kz, w1, b1, w2, b2, temb_table):
    x_T = jax.random.normal(kx, (B, D), jnp.float32)                   # flat x_T
    z_all = jax.random.normal(kz, (T, B, D), jnp.float32)              # per-step noise
    temb_fused = temb_table + b1                                       # fold b1 once
    x0 = run_sampler(COEFS, x_T, z_all, temb_fused, w1, w2, b2)
    return x0.reshape(B, C, H, W)                                      # back to NCHW


def forward(key, params, n_samples=B):
    assert n_samples == B, "kernel compiled for static batch B"
    w1, b1, w2, b2, temb_table = params
    kx, kz = jax.random.split(key)
    return _forward_jit(kx, kz, w1, b1, w2, b2, temb_table)


if __name__ == "__main__":
    key = jax.random.PRNGKey(0)
    pkey, fkey = jax.random.split(key)
    params = init_params(pkey)

    out = forward(fkey, params, n_samples=B)
    out = jax.block_until_ready(out)

    assert out.shape == (B, C, H, W), out.shape
    assert out.dtype == jnp.float32
    assert bool(jnp.all(jnp.isfinite(out)))
    print("KERNEL_OK")
</pallas_src>

<mosaic_0001>
module attributes {stable_mosaic.version = 11 : i64} {
  func.func @fused_sampler_kernel(%arg0: memref<8x3xf32, #tpu.memory_space<smem>>, %arg1: memref<2x1024xf32, #tpu.memory_space<vmem>>, %arg2: memref<8x2x1024xf32, #tpu.memory_space<vmem>>, %arg3: memref<8x128xf32, #tpu.memory_space<vmem>>, %arg4: memref<1024x128xf32, #tpu.memory_space<vmem>>, %arg5: memref<128x1024xf32, #tpu.memory_space<vmem>>, %arg6: memref<1x1024xf32, #tpu.memory_space<vmem>>, %arg7: memref<2x1024xf32, #tpu.memory_space<vmem>>) attributes {dimension_semantics = [], scalar_prefetch = 0 : i64, scratch_operands = 0 : i64, tpu.core_type = #tpu.core_type<tc>} {
    %c0 = arith.constant 0 : index
    %c0_0 = arith.constant 0 : index
    %0 = vector.load %arg4[%c0, %c0_0] : memref<1024x128xf32, #tpu.memory_space<vmem>>, vector<1024x128xf32>
    %c0_1 = arith.constant 0 : index
    %c0_2 = arith.constant 0 : index
    %1 = vector.load %arg5[%c0_1, %c0_2] : memref<128x1024xf32, #tpu.memory_space<vmem>>, vector<128x1024xf32>
    %c0_3 = arith.constant 0 : index
    %c0_4 = arith.constant 0 : index
    %2 = vector.load %arg6[%c0_3, %c0_4] : memref<1x1024xf32, #tpu.memory_space<vmem>>, vector<1x1024xf32>
    %c0_5 = arith.constant 0 : index
    %c0_6 = arith.constant 0 : index
    %3 = vector.load %arg1[%c0_5, %c0_6] : memref<2x1024xf32, #tpu.memory_space<vmem>>, vector<2x1024xf32>
    %cst = arith.constant dense<0.000000e+00> : vector<2x128xf32>
    %4 = tpu.matmul %3, %0, %cst {dimension_numbers = #tpu.dot_dimension_numbers<[1], [0], [0], [1], [0, 0, 1, 1], [], []>} : vector<2x1024xf32>, vector<1024x128xf32>, vector<2x128xf32> -> vector<2x128xf32>
    %c7 = arith.constant 7 : index
    %c0_7 = arith.constant 0 : index
    %5 = vector.load %arg3[%c7, %c0_7] : memref<8x128xf32, #tpu.memory_space<vmem>>, vector<1x128xf32>
    %6 = vector.broadcast %5 : vector<1x128xf32> to vector<2x128xf32>
    %7 = arith.addf %4, %6 : vector<2x128xf32>
    %cst_8 = arith.constant 0.000000e+00 : f32
    %8 = vector.broadcast %cst_8 : f32 to vector<2x128xf32>
    %9 = arith.maximumf %7, %8 : vector<2x128xf32>
    %cst_9 = arith.constant dense<0.000000e+00> : vector<2x1024xf32>
    %10 = tpu.matmul %9, %1, %cst_9 {dimension_numbers = #tpu.dot_dimension_numbers<[1], [0], [0], [1], [0, 0, 1, 1], [], []>} : vector<2x128xf32>, vector<128x1024xf32>, vector<2x1024xf32> -> vector<2x1024xf32>
    %11 = vector.broadcast %2 : vector<1x1024xf32> to vector<2x1024xf32>
    %12 = arith.addf %10, %11 : vector<2x1024xf32>
    %c7_10 = arith.constant 7 : index
    %c0_11 = arith.constant 0 : index
    %13 = memref.load %arg0[%c7_10, %c0_11] : memref<8x3xf32, #tpu.memory_space<smem>>
    %c7_12 = arith.constant 7 : index
    %c1 = arith.constant 1 : index
    %14 = memref.load %arg0[%c7_12, %c1] : memref<8x3xf32, #tpu.memory_space<smem>>
    %15 = vector.broadcast %14 : f32 to vector<2x1024xf32>
    %16 = arith.mulf %15, %12 : vector<2x1024xf32>
    %17 = arith.subf %3, %16 : vector<2x1024xf32>
    %18 = vector.broadcast %13 : f32 to vector<2x1024xf32>
    %19 = arith.mulf %18, %17 : vector<2x1024xf32>
    %c7_13 = arith.constant 7 : index
    %c2 = arith.constant 2 : index
    %20 = memref.load %arg0[%c7_13, %c2] : memref<8x3xf32, #tpu.memory_space<smem>>
    %c7_14 = arith.constant 7 : index
    %c0_15 = arith.constant 0 : index
    %c0_16 = arith.constant 0 : index
    %21 = vector.load %arg2[%c7_14, %c0_15, %c0_16] : memref<8x2x1024xf32, #tpu.memory_space<vmem>>, vector<1x2x1024xf32>
    %22 = vector.shape_cast %21 : vector<1x2x1024xf32> to vector<2x1024xf32>
    %23 = vector.broadcast %20 : f32 to vector<2x1024xf32>
    %24 = arith.mulf %23, %22 : vector<2x1024xf32>
    %25 = arith.addf %19, %24 : vector<2x1024xf32>
    %cst_17 = arith.constant dense<0.000000e+00> : vector<2x128xf32>
    %26 = tpu.matmul %25, %0, %cst_17 {dimension_numbers = #tpu.dot_dimension_numbers<[1], [0], [0], [1], [0, 0, 1, 1], [], []>} : vector<2x1024xf32>, vector<1024x128xf32>, vector<2x128xf32> -> vector<2x128xf32>
    %c6 = arith.constant 6 : index
    %c0_18 = arith.constant 0 : index
    %27 = vector.load %arg3[%c6, %c0_18] : memref<8x128xf32, #tpu.memory_space<vmem>>, vector<1x128xf32>
    %28 = vector.broadcast %27 : vector<1x128xf32> to vector<2x128xf32>
    %29 = arith.addf %26, %28 : vector<2x128xf32>
    %cst_19 = arith.constant 0.000000e+00 : f32
    %30 = vector.broadcast %cst_19 : f32 to vector<2x128xf32>
    %31 = arith.maximumf %29, %30 : vector<2x128xf32>
    %cst_20 = arith.constant dense<0.000000e+00> : vector<2x1024xf32>
    %32 = tpu.matmul %31, %1, %cst_20 {dimension_numbers = #tpu.dot_dimension_numbers<[1], [0], [0], [1], [0, 0, 1, 1], [], []>} : vector<2x128xf32>, vector<128x1024xf32>, vector<2x1024xf32> -> vector<2x1024xf32>
    %33 = vector.broadcast %2 : vector<1x1024xf32> to vector<2x1024xf32>
    %34 = arith.addf %32, %33 : vector<2x1024xf32>
    %c6_21 = arith.constant 6 : index
    %c0_22 = arith.constant 0 : index
    %35 = memref.load %arg0[%c6_21, %c0_22] : memref<8x3xf32, #tpu.memory_space<smem>>
    %c6_23 = arith.constant 6 : index
    %c1_24 = arith.constant 1 : index
    %36 = memref.load %arg0[%c6_23, %c1_24] : memref<8x3xf32, #tpu.memory_space<smem>>
    %37 = vector.broadcast %36 : f32 to vector<2x1024xf32>
    %38 = arith.mulf %37, %34 : vector<2x1024xf32>
    %39 = arith.subf %25, %38 : vector<2x1024xf32>
    %40 = vector.broadcast %35 : f32 to vector<2x1024xf32>
    %41 = arith.mulf %40, %39 : vector<2x1024xf32>
    %c6_25 = arith.constant 6 : index
    %c2_26 = arith.constant 2 : index
    %42 = memref.load %arg0[%c6_25, %c2_26] : memref<8x3xf32, #tpu.memory_space<smem>>
    %c6_27 = arith.constant 6 : index
    %c0_28 = arith.constant 0 : index
    %c0_29 = arith.constant 0 : index
    %43 = vector.load %arg2[%c6_27, %c0_28, %c0_29] : memref<8x2x1024xf32, #tpu.memory_space<vmem>>, vector<1x2x1024xf32>
    %44 = vector.shape_cast %43 : vector<1x2x1024xf32> to vector<2x1024xf32>
    %45 = vector.broadcast %42 : f32 to vector<2x1024xf32>
    %46 = arith.mulf %45, %44 : vector<2x1024xf32>
    %47 = arith.addf %41, %46 : vector<2x1024xf32>
    %cst_30 = arith.constant dense<0.000000e+00> : vector<2x128xf32>
    %48 = tpu.matmul %47, %0, %cst_30 {dimension_numbers = #tpu.dot_dimension_numbers<[1], [0], [0], [1], [0, 0, 1, 1], [], []>} : vector<2x1024xf32>, vector<1024x128xf32>, vector<2x128xf32> -> vector<2x128xf32>
    %c5 = arith.constant 5 : index
    %c0_31 = arith.constant 0 : index
    %49 = vector.load %arg3[%c5, %c0_31] : memref<8x128xf32, #tpu.memory_space<vmem>>, vector<1x128xf32>
    %50 = vector.broadcast %49 : vector<1x128xf32> to vector<2x128xf32>
    %51 = arith.addf %48, %50 : vector<2x128xf32>
    %cst_32 = arith.constant 0.000000e+00 : f32
    %52 = vector.broadcast %cst_32 : f32 to vector<2x128xf32>
    %53 = arith.maximumf %51, %52 : vector<2x128xf32>
    %cst_33 = arith.constant dense<0.000000e+00> : vector<2x1024xf32>
    %54 = tpu.matmul %53, %1, %cst_33 {dimension_numbers = #tpu.dot_dimension_numbers<[1], [0], [0], [1], [0, 0, 1, 1], [], []>} : vector<2x128xf32>, vector<128x1024xf32>, vector<2x1024xf32> -> vector<2x1024xf32>
    %55 = vector.broadcast %2 : vector<1x1024xf32> to vector<2x1024xf32>
    %56 = arith.addf %54, %55 : vector<2x1024xf32>
    %c5_34 = arith.constant 5 : index
    %c0_35 = arith.constant 0 : index
    %57 = memref.load %arg0[%c5_34, %c0_35] : memref<8x3xf32, #tpu.memory_space<smem>>
    %c5_36 = arith.constant 5 : index
    %c1_37 = arith.constant 1 : index
    %58 = memref.load %arg0[%c5_36, %c1_37] : memref<8x3xf32, #tpu.memory_space<smem>>
    %59 = vector.broadcast %58 : f32 to vector<2x1024xf32>
    %60 = arith.mulf %59, %56 : vector<2x1024xf32>
    %61 = arith.subf %47, %60 : vector<2x1024xf32>
    %62 = vector.broadcast %57 : f32 to vector<2x1024xf32>
    %63 = arith.mulf %62, %61 : vector<2x1024xf32>
    %c5_38 = arith.constant 5 : index
    %c2_39 = arith.constant 2 : index
    %64 = memref.load %arg0[%c5_38, %c2_39] : memref<8x3xf32, #tpu.memory_space<smem>>
    %c5_40 = arith.constant 5 : index
    %c0_41 = arith.constant 0 : index
    %c0_42 = arith.constant 0 : index
    %65 = vector.load %arg2[%c5_40, %c0_41, %c0_42] : memref<8x2x1024xf32, #tpu.memory_space<vmem>>, vector<1x2x1024xf32>
    %66 = vector.shape_cast %65 : vector<1x2x1024xf32> to vector<2x1024xf32>
    %67 = vector.broadcast %64 : f32 to vector<2x1024xf32>
    %68 = arith.mulf %67, %66 : vector<2x1024xf32>
    %69 = arith.addf %63, %68 : vector<2x1024xf32>
    %cst_43 = arith.constant dense<0.000000e+00> : vector<2x128xf32>
    %70 = tpu.matmul %69, %0, %cst_43 {dimension_numbers = #tpu.dot_dimension_numbers<[1], [0], [0], [1], [0, 0, 1, 1], [], []>} : vector<2x1024xf32>, vector<1024x128xf32>, vector<2x128xf32> -> vector<2x128xf32>
    %c4 = arith.constant 4 : index
    %c0_44 = arith.constant 0 : index
    %71 = vector.load %arg3[%c4, %c0_44] : memref<8x128xf32, #tpu.memory_space<vmem>>, vector<1x128xf32>
    %72 = vector.broadcast %71 : vector<1x128xf32> to vector<2x128xf32>
    %73 = arith.addf %70, %72 : vector<2x128xf32>
    %cst_45 = arith.constant 0.000000e+00 : f32
    %74 = vector.broadcast %cst_45 : f32 to vector<2x128xf32>
    %75 = arith.maximumf %73, %74 : vector<2x128xf32>
    %cst_46 = arith.constant dense<0.000000e+00> : vector<2x1024xf32>
    %76 = tpu.matmul %75, %1, %cst_46 {dimension_numbers = #tpu.dot_dimension_numbers<[1], [0], [0], [1], [0, 0, 1, 1], [], []>} : vector<2x128xf32>, vector<128x1024xf32>, vector<2x1024xf32> -> vector<2x1024xf32>
    %77 = vector.broadcast %2 : vector<1x1024xf32> to vector<2x1024xf32>
    %78 = arith.addf %76, %77 : vector<2x1024xf32>
    %c4_47 = arith.constant 4 : index
    %c0_48 = arith.constant 0 : index
    %79 = memref.load %arg0[%c4_47, %c0_48] : memref<8x3xf32, #tpu.memory_space<smem>>
    %c4_49 = arith.constant 4 : index
    %c1_50 = arith.constant 1 : index
    %80 = memref.load %arg0[%c4_49, %c1_50] : memref<8x3xf32, #tpu.memory_space<smem>>
    %81 = vector.broadcast %80 : f32 to vector<2x1024xf32>
    %82 = arith.mulf %81, %78 : vector<2x1024xf32>
    %83 = arith.subf %69, %82 : vector<2x1024xf32>
    %84 = vector.broadcast %79 : f32 to vector<2x1024xf32>
    %85 = arith.mulf %84, %83 : vector<2x1024xf32>
    %c4_51 = arith.constant 4 : index
    %c2_52 = arith.constant 2 : index
    %86 = memref.load %arg0[%c4_51, %c2_52] : memref<8x3xf32, #tpu.memory_space<smem>>
    %c4_53 = arith.constant 4 : index
    %c0_54 = arith.constant 0 : index
    %c0_55 = arith.constant 0 : index
    %87 = vector.load %arg2[%c4_53, %c0_54, %c0_55] : memref<8x2x1024xf32, #tpu.memory_space<vmem>>, vector<1x2x1024xf32>
    %88 = vector.shape_cast %87 : vector<1x2x1024xf32> to vector<2x1024xf32>
    %89 = vector.broadcast %86 : f32 to vector<2x1024xf32>
    %90 = arith.mulf %89, %88 : vector<2x1024xf32>
    %91 = arith.addf %85, %90 : vector<2x1024xf32>
    %cst_56 = arith.constant dense<0.000000e+00> : vector<2x128xf32>
    %92 = tpu.matmul %91, %0, %cst_56 {dimension_numbers = #tpu.dot_dimension_numbers<[1], [0], [0], [1], [0, 0, 1, 1], [], []>} : vector<2x1024xf32>, vector<1024x128xf32>, vector<2x128xf32> -> vector<2x128xf32>
    %c3 = arith.constant 3 : index
    %c0_57 = arith.constant 0 : index
    %93 = vector.load %arg3[%c3, %c0_57] : memref<8x128xf32, #tpu.memory_space<vmem>>, vector<1x128xf32>
    %94 = vector.broadcast %93 : vector<1x128xf32> to vector<2x128xf32>
    %95 = arith.addf %92, %94 : vector<2x128xf32>
    %cst_58 = arith.constant 0.000000e+00 : f32
    %96 = vector.broadcast %cst_58 : f32 to vector<2x128xf32>
    %97 = arith.maximumf %95, %96 : vector<2x128xf32>
    %cst_59 = arith.constant dense<0.000000e+00> : vector<2x1024xf32>
    %98 = tpu.matmul %97, %1, %cst_59 {dimension_numbers = #tpu.dot_dimension_numbers<[1], [0], [0], [1], [0, 0, 1, 1], [], []>} : vector<2x128xf32>, vector<128x1024xf32>, vector<2x1024xf32> -> vector<2x1024xf32>
    %99 = vector.broadcast %2 : vector<1x1024xf32> to vector<2x1024xf32>
    %100 = arith.addf %98, %99 : vector<2x1024xf32>
    %c3_60 = arith.constant 3 : index
    %c0_61 = arith.constant 0 : index
    %101 = memref.load %arg0[%c3_60, %c0_61] : memref<8x3xf32, #tpu.memory_space<smem>>
    %c3_62 = arith.constant 3 : index
    %c1_63 = arith.constant 1 : index
    %102 = memref.load %arg0[%c3_62, %c1_63] : memref<8x3xf32, #tpu.memory_space<smem>>
    %103 = vector.broadcast %102 : f32 to vector<2x1024xf32>
    %104 = arith.mulf %103, %100 : vector<2x1024xf32>
    %105 = arith.subf %91, %104 : vector<2x1024xf32>
    %106 = vector.broadcast %101 : f32 to vector<2x1024xf32>
    %107 = arith.mulf %106, %105 : vector<2x1024xf32>
    %c3_64 = arith.constant 3 : index
    %c2_65 = arith.constant 2 : index
    %108 = memref.load %arg0[%c3_64, %c2_65] : memref<8x3xf32, #tpu.memory_space<smem>>
    %c3_66 = arith.constant 3 : index
    %c0_67 = arith.constant 0 : index
    %c0_68 = arith.constant 0 : index
    %109 = vector.load %arg2[%c3_66, %c0_67, %c0_68] : memref<8x2x1024xf32, #tpu.memory_space<vmem>>, vector<1x2x1024xf32>
    %110 = vector.shape_cast %109 : vector<1x2x1024xf32> to vector<2x1024xf32>
    %111 = vector.broadcast %108 : f32 to vector<2x1024xf32>
    %112 = arith.mulf %111, %110 : vector<2x1024xf32>
    %113 = arith.addf %107, %112 : vector<2x1024xf32>
    %cst_69 = arith.constant dense<0.000000e+00> : vector<2x128xf32>
    %114 = tpu.matmul %113, %0, %cst_69 {dimension_numbers = #tpu.dot_dimension_numbers<[1], [0], [0], [1], [0, 0, 1, 1], [], []>} : vector<2x1024xf32>, vector<1024x128xf32>, vector<2x128xf32> -> vector<2x128xf32>
    %c2_70 = arith.constant 2 : index
    %c0_71 = arith.constant 0 : index
    %115 = vector.load %arg3[%c2_70, %c0_71] : memref<8x128xf32, #tpu.memory_space<vmem>>, vector<1x128xf32>
    %116 = vector.broadcast %115 : vector<1x128xf32> to vector<2x128xf32>
    %117 = arith.addf %114, %116 : vector<2x128xf32>
    %cst_72 = arith.constant 0.000000e+00 : f32
    %118 = vector.broadcast %cst_72 : f32 to vector<2x128xf32>
    %119 = arith.maximumf %117, %118 : vector<2x128xf32>
    %cst_73 = arith.constant dense<0.000000e+00> : vector<2x1024xf32>
    %120 = tpu.matmul %119, %1, %cst_73 {dimension_numbers = #tpu.dot_dimension_numbers<[1], [0], [0], [1], [0, 0, 1, 1], [], []>} : vector<2x128xf32>, vector<128x1024xf32>, vector<2x1024xf32> -> vector<2x1024xf32>
    %121 = vector.broadcast %2 : vector<1x1024xf32> to vector<2x1024xf32>
    %122 = arith.addf %120, %121 : vector<2x1024xf32>
    %c2_74 = arith.constant 2 : index
    %c0_75 = arith.constant 0 : index
    %123 = memref.load %arg0[%c2_74, %c0_75] : memref<8x3xf32, #tpu.memory_space<smem>>
    %c2_76 = arith.constant 2 : index
    %c1_77 = arith.constant 1 : index
    %124 = memref.load %arg0[%c2_76, %c1_77] : memref<8x3xf32, #tpu.memory_space<smem>>
    %125 = vector.broadcast %124 : f32 to vector<2x1024xf32>
    %126 = arith.mulf %125, %122 : vector<2x1024xf32>
    %127 = arith.subf %113, %126 : vector<2x1024xf32>
    %128 = vector.broadcast %123 : f32 to vector<2x1024xf32>
    %129 = arith.mulf %128, %127 : vector<2x1024xf32>
    %c2_78 = arith.constant 2 : index
    %c2_79 = arith.constant 2 : index
    %130 = memref.load %arg0[%c2_78, %c2_79] : memref<8x3xf32, #tpu.memory_space<smem>>
    %c2_80 = arith.constant 2 : index
    %c0_81 = arith.constant 0 : index
    %c0_82 = arith.constant 0 : index
    %131 = vector.load %arg2[%c2_80, %c0_81, %c0_82] : memref<8x2x1024xf32, #tpu.memory_space<vmem>>, vector<1x2x1024xf32>
    %132 = vector.shape_cast %131 : vector<1x2x1024xf32> to vector<2x1024xf32>
    %133 = vector.broadcast %130 : f32 to vector<2x1024xf32>
    %134 = arith.mulf %133, %132 : vector<2x1024xf32>
    %135 = arith.addf %129, %134 : vector<2x1024xf32>
    %cst_83 = arith.constant dense<0.000000e+00> : vector<2x128xf32>
    %136 = tpu.matmul %135, %0, %cst_83 {dimension_numbers = #tpu.dot_dimension_numbers<[1], [0], [0], [1], [0, 0, 1, 1], [], []>} : vector<2x1024xf32>, vector<1024x128xf32>, vector<2x128xf32> -> vector<2x128xf32>
    %c1_84 = arith.constant 1 : index
    %c0_85 = arith.constant 0 : index
    %137 = vector.load %arg3[%c1_84, %c0_85] : memref<8x128xf32, #tpu.memory_space<vmem>>, vector<1x128xf32>
    %138 = vector.broadcast %137 : vector<1x128xf32> to vector<2x128xf32>
    %139 = arith.addf %136, %138 : vector<2x128xf32>
    %cst_86 = arith.constant 0.000000e+00 : f32
    %140 = vector.broadcast %cst_86 : f32 to vector<2x128xf32>
    %141 = arith.maximumf %139, %140 : vector<2x128xf32>
    %cst_87 = arith.constant dense<0.000000e+00> : vector<2x1024xf32>
    %142 = tpu.matmul %141, %1, %cst_87 {dimension_numbers = #tpu.dot_dimension_numbers<[1], [0], [0], [1], [0, 0, 1, 1], [], []>} : vector<2x128xf32>, vector<128x1024xf32>, vector<2x1024xf32> -> vector<2x1024xf32>
    %143 = vector.broadcast %2 : vector<1x1024xf32> to vector<2x1024xf32>
    %144 = arith.addf %142, %143 : vector<2x1024xf32>
    %c1_88 = arith.constant 1 : index
    %c0_89 = arith.constant 0 : index
    %145 = memref.load %arg0[%c1_88, %c0_89] : memref<8x3xf32, #tpu.memory_space<smem>>
    %c1_90 = arith.constant 1 : index
    %c1_91 = arith.constant 1 : index
    %146 = memref.load %arg0[%c1_90, %c1_91] : memref<8x3xf32, #tpu.memory_space<smem>>
    %147 = vector.broadcast %146 : f32 to vector<2x1024xf32>
    %148 = arith.mulf %147, %144 : vector<2x1024xf32>
    %149 = arith.subf %135, %148 : vector<2x1024xf32>
    %150 = vector.broadcast %145 : f32 to vector<2x1024xf32>
    %151 = arith.mulf %150, %149 : vector<2x1024xf32>
    %c1_92 = arith.constant 1 : index
    %c2_93 = arith.constant 2 : index
    %152 = memref.load %arg0[%c1_92, %c2_93] : memref<8x3xf32, #tpu.memory_space<smem>>
    %c1_94 = arith.constant 1 : index
    %c0_95 = arith.constant 0 : index
    %c0_96 = arith.constant 0 : index
    %153 = vector.load %arg2[%c1_94, %c0_95, %c0_96] : memref<8x2x1024xf32, #tpu.memory_space<vmem>>, vector<1x2x1024xf32>
    %154 = vector.shape_cast %153 : vector<1x2x1024xf32> to vector<2x1024xf32>
    %155 = vector.broadcast %152 : f32 to vector<2x1024xf32>
    %156 = arith.mulf %155, %154 : vector<2x1024xf32>
    %157 = arith.addf %151, %156 : vector<2x1024xf32>
    %cst_97 = arith.constant dense<0.000000e+00> : vector<2x128xf32>
    %158 = tpu.matmul %157, %0, %cst_97 {dimension_numbers = #tpu.dot_dimension_numbers<[1], [0], [0], [1], [0, 0, 1, 1], [], []>} : vector<2x1024xf32>, vector<1024x128xf32>, vector<2x128xf32> -> vector<2x128xf32>
    %c0_98 = arith.constant 0 : index
    %c0_99 = arith.constant 0 : index
    %159 = vector.load %arg3[%c0_98, %c0_99] : memref<8x128xf32, #tpu.memory_space<vmem>>, vector<1x128xf32>
    %160 = vector.broadcast %159 : vector<1x128xf32> to vector<2x128xf32>
    %161 = arith.addf %158, %160 : vector<2x128xf32>
    %cst_100 = arith.constant 0.000000e+00 : f32
    %162 = vector.broadcast %cst_100 : f32 to vector<2x128xf32>
    %163 = arith.maximumf %161, %162 : vector<2x128xf32>
    %cst_101 = arith.constant dense<0.000000e+00> : vector<2x1024xf32>
    %164 = tpu.matmul %163, %1, %cst_101 {dimension_numbers = #tpu.dot_dimension_numbers<[1], [0], [0], [1], [0, 0, 1, 1], [], []>} : vector<2x128xf32>, vector<128x1024xf32>, vector<2x1024xf32> -> vector<2x1024xf32>
    %165 = vector.broadcast %2 : vector<1x1024xf32> to vector<2x1024xf32>
    %166 = arith.addf %164, %165 : vector<2x1024xf32>
    %c0_102 = arith.constant 0 : index
    %c0_103 = arith.constant 0 : index
    %167 = memref.load %arg0[%c0_102, %c0_103] : memref<8x3xf32, #tpu.memory_space<smem>>
    %c0_104 = arith.constant 0 : index
    %c1_105 = arith.constant 1 : index
    %168 = memref.load %arg0[%c0_104, %c1_105] : memref<8x3xf32, #tpu.memory_space<smem>>
    %169 = vector.broadcast %168 : f32 to vector<2x1024xf32>
    %170 = arith.mulf %169, %166 : vector<2x1024xf32>
    %171 = arith.subf %157, %170 : vector<2x1024xf32>
    %172 = vector.broadcast %167 : f32 to vector<2x1024xf32>
    %173 = arith.mulf %172, %171 : vector<2x1024xf32>
    %c0_106 = arith.constant 0 : index
    %c0_107 = arith.constant 0 : index
    %174 = vector.load %arg7[%c0_106, %c0_107] : memref<2x1024xf32, #tpu.memory_space<vmem>>, vector<2x1024xf32>
    tpu.vector_store %arg7[%c0_106, %c0_107], %173 {strides = array<i32>} : memref<2x1024xf32, #tpu.memory_space<vmem>>, vector<2x1024xf32>,
    return
  }
}

</mosaic_0001>

<llo_original>
// kernel: _forward_jit.1
$region0: #{_forward_jit.1}
  #allocation0 [shape = 'u32[]', space=smem, size = 0x4, offset = 0x4, fixed_abs, tag = 'smem constant byte address 0x4 - core index']
  #allocation1 [shape = 'u32[144,128]{1,0:T(1,128)}', space=vmem, size = 0x12000, scoped, tag = 'internal scratch']
  %s0 = inlined_call_operand.vmem [shape: f32[8,3], index: 0, kind: input, shape index: {}]
  %s1 = inlined_call_operand.vmem [shape: f32[2,1024], index: 1, kind: input, shape index: {}]
  %s2 = inlined_call_operand.vmem [shape: f32[8,2,1024], index: 2, kind: input, shape index: {}]
  %s3 = inlined_call_operand.vmem [shape: f32[8,128], index: 3, kind: input, shape index: {}]
  %s4 = inlined_call_operand.hbm [shape: f32[1024,128], index: 4, kind: input, shape index: {}]
  %s5 = inlined_call_operand.hbm [shape: f32[128,1024], index: 5, kind: input, shape index: {}]
  %s6 = inlined_call_operand.vmem [shape: f32[1,1024], index: 6, kind: input, shape index: {}]
  %s7 = inlined_call_operand.vmem [shape: f32[2,1024], index: 7, kind: output, shape index: {}]
  %s8 = sld [smem:[#allocation0]]
  $region50: #{_forward_jit.1} parent=0
    _
  %s10 = ssub.s32 1, %s8
  %s11 = scalar_select 0, %s10, %s8
  $region1: #{_forward_jit.1} parent=0
    #allocation2 [shape = 'u8[4096]{0}', space=smem, size = 0x1000, scoped, tag = 'input window, operand 0, single buffered']
    #allocation3 [shape = 's32[1]{0}', space=sflag, size = 0x4, scoped, tag = 'scoped memory for _forward_jit.1']
    #allocation4 [shape = 's32[1]{0}', space=sflag, size = 0x4, scoped, tag = 'scoped memory for _forward_jit.1']
    #allocation5 [shape = 'u8[524288]{0}', space=vmem, size = 0x80000, scoped, tag = 'input window, operand 4, single buffered']
    #allocation6 [shape = 'u8[524288]{0}', space=vmem, size = 0x80000, scoped, tag = 'input window, operand 5, single buffered']
    #allocation7 [shape = 's32[1]{0}', space=sflag, size = 0x4, scoped, tag = 'scoped memory for _forward_jit.1']
    %12 = vsyncpa [#allocation4], 0
    %13 = vsyncpa [#allocation3], 0
    %14 = vsyncpa [#allocation7], 0
    // Predicated region
    $region2: #{_forward_jit.1} parent=1 // pred_check
      _
    $region3: #{_forward_jit.1} parent=1 // pred_check_branch
      %16 = sbr.rel (0) target = $region5
    $region4: #{_forward_jit.1} parent=1 // pred_region
      %s18 = ssub.s32 128, 128
      %19 = vsyncadd [#allocation4], %s18
      %s21 = sshll.u32 %s0, 4
      %s22 = int_to_ptr.vmem [resolvable:$true] %s21
      %24 = dma.vmem_to_smem %s22, 128, [#allocation2], [#allocation4]
    $region5: #{_forward_jit.1} parent=1 // pred_fallthru
      _
    // Predicated region
    $region6: #{_forward_jit.1} parent=1 // pred_check
      _
    $region7: #{_forward_jit.1} parent=1 // pred_check_branch
      %26 = sbr.rel (0) target = $region9
    $region8: #{_forward_jit.1} parent=1 // pred_region
      _
    $region9: #{_forward_jit.1} parent=1 // pred_fallthru
      _
    // Predicated region
    $region10: #{_forward_jit.1} parent=1 // pred_check
      _
    $region11: #{_forward_jit.1} parent=1 // pred_check_branch
      %28 = sbr.rel (0) target = $region13
    $region12: #{_forward_jit.1} parent=1 // pred_region
      _
    $region13: #{_forward_jit.1} parent=1 // pred_fallthru
      _
    // Predicated region
    $region14: #{_forward_jit.1} parent=1 // pred_check
      _
    $region15: #{_forward_jit.1} parent=1 // pred_check_branch
      %30 = sbr.rel (0) target = $region17
    $region16: #{_forward_jit.1} parent=1 // pred_region
      _
    $region17: #{_forward_jit.1} parent=1 // pred_fallthru
      _
    // Predicated region
    $region18: #{_forward_jit.1} parent=1 // pred_check
      _
    $region19: #{_forward_jit.1} parent=1 // pred_check_branch
      %32 = sbr.rel (0) target = $region21
    $region20: #{_forward_jit.1} parent=1 // pred_region
      %s34 = ssub.s32 16384, 16384
      %35 = vsyncadd [#allocation3], %s34
      %s36 = sshll.u32 [#allocation5], 4
      %s37 = int_to_ptr.vmem [resolvable:$true] %s36
      %42 = dma.hbm_to_vmem [thread:$0]  %s4, 16384, %s37, [#allocation3], 128, 128, 8
    $region21: #{_forward_jit.1} parent=1 // pred_fallthru
      _
    // Predicated region
    $region22: #{_forward_jit.1} parent=1 // pred_check
      _
    $region23: #{_forward_jit.1} parent=1 // pred_check_branch
      %44 = sbr.rel (0) target = $region25
    $region24: #{_forward_jit.1} parent=1 // pred_region
      %s46 = ssub.s32 16384, 16384
      %47 = vsyncadd [#allocation7], %s46
      %s48 = sshll.u32 [#allocation6], 4
      %s49 = int_to_ptr.vmem [resolvable:$true] %s48
      %54 = dma.hbm_to_vmem [thread:$0]  %s5, 16384, %s49, [#allocation7], 1024, 1024, 64
    $region25: #{_forward_jit.1} parent=1 // pred_fallthru
      _
    // Predicated region
    $region26: #{_forward_jit.1} parent=1 // pred_check
      _
    $region27: #{_forward_jit.1} parent=1 // pred_check_branch
      %56 = sbr.rel (0) target = $region29
    $region28: #{_forward_jit.1} parent=1 // pred_region
      _
    $region29: #{_forward_jit.1} parent=1 // pred_fallthru
      _
    // Predicated region
    $region30: #{_forward_jit.1} parent=1 // pred_check
      _
    $region31: #{_forward_jit.1} parent=1 // pred_check_branch
      %58 = sbr.rel (0) target = $region33
    $region32: #{_forward_jit.1} parent=1 // pred_region
      %59 = dma.done [#allocation4], 128
    $region33: #{_forward_jit.1} parent=1 // pred_fallthru
      _
    // Predicated region
    $region34: #{_forward_jit.1} parent=1 // pred_check
      _
    $region35: #{_forward_jit.1} parent=1 // pred_check_branch
      %61 = sbr.rel (0) target = $region37
    $region36: #{_forward_jit.1} parent=1 // pred_region
      %62 = dma.done [#allocation3], 16384
    $region37: #{_forward_jit.1} parent=1 // pred_fallthru
      _
    // Predicated region
    $region38: #{_forward_jit.1} parent=1 // pred_check
      _
    $region39: #{_forward_jit.1} parent=1 // pred_check_branch
      %64 = sbr.rel (0) target = $region41
    $region40: #{_forward_jit.1} parent=1 // pred_region
      %65 = dma.done [#allocation7], 16384
    $region41: #{_forward_jit.1} parent=1 // pred_fallthru
      _
    %66 = sfence
    %v67 = vld [vmem:[#allocation5] sm:$0xff]
    %v68 = vld [vmem:[#allocation5 + $0x8] sm:$0xff]
    %v69 = vld [vmem:[#allocation5 + $0x10] sm:$0xff]
    %v70 = vld [vmem:[#allocation5 + $0x18] sm:$0xff]
    %v71 = vld [vmem:[#allocation5 + $0x20] sm:$0xff]
    %v72 = vld [vmem:[#allocation5 + $0x28] sm:$0xff]
    %v73 = vld [vmem:[#allocation5 + $0x30] sm:$0xff]
    %v74 = vld [vmem:[#allocation5 + $0x38] sm:$0xff]
    %v75 = vld [vmem:[#allocation5 + $0x40] sm:$0xff]
    %v76 = vld [vmem:[#allocation5 + $0x48] sm:$0xff]
    %v77 = vld [vmem:[#allocation5 + $0x50] sm:$0xff]
    %v78 = vld [vmem:[#allocation5 + $0x58] sm:$0xff]
    %v79 = vld [vmem:[#allocation5 + $0x60] sm:$0xff]
    %v80 = vld [vmem:[#allocation5 + $0x68] sm:$0xff]
    %v81 = vld [vmem:[#allocation5 + $0x70] sm:$0xff]
    %v82 = vld [vmem:[#allocation5 + $0x78] sm:$0xff]
    %v83 = vld [vmem:[#allocation5 + $0x80] sm:$0xff]
    %v84 = vld [vmem:[#allocation5 + $0x88] sm:$0xff]
    %v85 = vld [vmem:[#allocation5 + $0x90] sm:$0xff]
    %v86 = vld [vmem:[#allocation5 + $0x98] sm:$0xff]
    %v87 = vld [vmem:[#allocation5 + $0xa0] sm:$0xff]
    %v88 = vld [vmem:[#allocation5 + $0xa8] sm:$0xff]
    %v89 = vld [vmem:[#allocation5 + $0xb0] sm:$0xff]
    %v90 = vld [vmem:[#allocation5 + $0xb8] sm:$0xff]
    %v91 = vld [vmem:[#allocation5 + $0xc0] sm:$0xff]
    %v92 = vld [vmem:[#allocation5 + $0xc8] sm:$0xff]
    %v93 = vld [vmem:[#allocation5 + $0xd0] sm:$0xff]
    %v94 = vld [vmem:[#allocation5 + $0xd8] sm:$0xff]
    %v95 = vld [vmem:[#allocation5 + $0xe0] sm:$0xff]
    %v96 = vld [vmem:[#allocation5 + $0xe8] sm:$0xff]
    %v97 = vld [vmem:[#allocation5 + $0xf0] sm:$0xff]
    %v98 = vld [vmem:[#allocation5 + $0xf8] sm:$0xff]
    %v99 = vld [vmem:[#allocation5 + $0x100] sm:$0xff]
    %v100 = vld [vmem:[#allocation5 + $0x108] sm:$0xff]
    %v101 = vld [vmem:[#allocation5 + $0x110] sm:$0xff]
    %v102 = vld [vmem:[#allocation5 + $0x118] sm:$0xff]
    %v103 = vld [vmem:[#allocation5 + $0x120] sm:$0xff]
    %v104 = vld [vmem:[#allocation5 + $0x128] sm:$0xff]
    %v105 = vld [vmem:[#allocation5 + $0x130] sm:$0xff]
    %v106 = vld [vmem:[#allocation5 + $0x138] sm:$0xff]
    %v107 = vld [vmem:[#allocation5 + $0x140] sm:$0xff]
    %v108 = vld [vmem:[#allocation5 + $0x148] sm:$0xff]
    %v109 = vld [vmem:[#allocation5 + $0x150] sm:$0xff]
    %v110 = vld [vmem:[#allocation5 + $0x158] sm:$0xff]
    %v111 = vld [vmem:[#allocation5 + $0x160] sm:$0xff]
    %v112 = vld [vmem:[#allocation5 + $0x168] sm:$0xff]
    %v113 = vld [vmem:[#allocation5 + $0x170] sm:$0xff]
    %v114 = vld [vmem:[#allocation5 + $0x178] sm:$0xff]
    %v115 = vld [vmem:[#allocation5 + $0x180] sm:$0xff]
    %v116 = vld [vmem:[#allocation5 + $0x188] sm:$0xff]
    %v117 = vld [vmem:[#allocation5 + $0x190] sm:$0xff]
    %v118 = vld [vmem:[#allocation5 + $0x198] sm:$0xff]
    %v119 = vld [vmem:[#allocation5 + $0x1a0] sm:$0xff]
    %v120 = vld [vmem:[#allocation5 + $0x1a8] sm:$0xff]
    %v121 = vld [vmem:[#allocation5 + $0x1b0] sm:$0xff]
    %v122 = vld [vmem:[#allocation5 + $0x1b8] sm:$0xff]
    %v123 = vld [vmem:[#allocation5 + $0x1c0] sm:$0xff]
    %v124 = vld [vmem:[#allocation5 + $0x1c8] sm:$0xff]
    %v125 = vld [vmem:[#allocation5 + $0x1d0] sm:$0xff]
    %v126 = vld [vmem:[#allocation5 + $0x1d8] sm:$0xff]
    %v127 = vld [vmem:[#allocation5 + $0x1e0] sm:$0xff]
    %v128 = vld [vmem:[#allocation5 + $0x1e8] sm:$0xff]
    %v129 = vld [vmem:[#allocation5 + $0x1f0] sm:$0xff]
    %v130 = vld [vmem:[#allocation5 + $0x1f8] sm:$0xff]
    %v131 = vld [vmem:[#allocation5 + $0x200] sm:$0xff]
    %v132 = vld [vmem:[#allocation5 + $0x208] sm:$0xff]
    %v133 = vld [vmem:[#allocation5 + $0x210] sm:$0xff]
    %v134 = vld [vmem:[#allocation5 + $0x218] sm:$0xff]
    %v135 = vld [vmem:[#allocation5 + $0x220] sm:$0xff]
    %v136 = vld [vmem:[#allocation5 + $0x228] sm:$0xff]
    %v137 = vld [vmem:[#allocation5 + $0x230] sm:$0xff]
    %v138 = vld [vmem:[#allocation5 + $0x238] sm:$0xff]
    %v139 = vld [vmem:[#allocation5 + $0x240] sm:$0xff]
    %v140 = vld [vmem:[#allocation5 + $0x248] sm:$0xff]
    %v141 = vld [vmem:[#allocation5 + $0x250] sm:$0xff]
    %v142 = vld [vmem:[#allocation5 + $0x258] sm:$0xff]
    %v143 = vld [vmem:[#allocation5 + $0x260] sm:$0xff]
    %v144 = vld [vmem:[#allocation5 + $0x268] sm:$0xff]
    %v145 = vld [vmem:[#allocation5 + $0x270] sm:$0xff]
    %v146 = vld [vmem:[#allocation5 + $0x278] sm:$0xff]
    %v147 = vld [vmem:[#allocation5 + $0x280] sm:$0xff]
    %v148 = vld [vmem:[#allocation5 + $0x288] sm:$0xff]
    %v149 = vld [vmem:[#allocation5 + $0x290] sm:$0xff]
    %v150 = vld [vmem:[#allocation5 + $0x298] sm:$0xff]
    %v151 = vld [vmem:[#allocation5 + $0x2a0] sm:$0xff]
    %v152 = vld [vmem:[#allocation5 + $0x2a8] sm:$0xff]
    %v153 = vld [vmem:[#allocation5 + $0x2b0] sm:$0xff]
    %v154 = vld [vmem:[#allocation5 + $0x2b8] sm:$0xff]
    %v155 = vld [vmem:[#allocation5 + $0x2c0] sm:$0xff]
    %v156 = vld [vmem:[#allocation5 + $0x2c8] sm:$0xff]
    %v157 = vld [vmem:[#allocation5 + $0x2d0] sm:$0xff]
    %v158 = vld [vmem:[#allocation5 + $0x2d8] sm:$0xff]
    %v159 = vld [vmem:[#allocation5 + $0x2e0] sm:$0xff]
    %v160 = vld [vmem:[#allocation5 + $0x2e8] sm:$0xff]
    %v161 = vld [vmem:[#allocation5 + $0x2f0] sm:$0xff]
    %v162 = vld [vmem:[#allocation5 + $0x2f8] sm:$0xff]
    %v163 = vld [vmem:[#allocation5 + $0x300] sm:$0xff]
    %v164 = vld [vmem:[#allocation5 + $0x308] sm:$0xff]
    %v165 = vld [vmem:[#allocation5 + $0x310] sm:$0xff]
    %v166 = vld [vmem:[#allocation5 + $0x318] sm:$0xff]
    %v167 = vld [vmem:[#allocation5 + $0x320] sm:$0xff]
    %v168 = vld [vmem:[#allocation5 + $0x328] sm:$0xff]
    %v169 = vld [vmem:[#allocation5 + $0x330] sm:$0xff]
    %v170 = vld [vmem:[#allocation5 + $0x338] sm:$0xff]
    %v171 = vld [vmem:[#allocation5 + $0x340] sm:$0xff]
    %v172 = vld [vmem:[#allocation5 + $0x348] sm:$0xff]
    %v173 = vld [vmem:[#allocation5 + $0x350] sm:$0xff]
    %v174 = vld [vmem:[#allocation5 + $0x358] sm:$0xff]
    %v175 = vld [vmem:[#allocation5 + $0x360] sm:$0xff]
    %v176 = vld [vmem:[#allocation5 + $0x368] sm:$0xff]
    %v177 = vld [vmem:[#allocation5 + $0x370] sm:$0xff]
    %v178 = vld [vmem:[#allocation5 + $0x378] sm:$0xff]
    %v179 = vld [vmem:[#allocation5 + $0x380] sm:$0xff]
    %v180 = vld [vmem:[#allocation5 + $0x388] sm:$0xff]
    %v181 = vld [vmem:[#allocation5 + $0x390] sm:$0xff]
    %v182 = vld [vmem:[#allocation5 + $0x398] sm:$0xff]
    %v183 = vld [vmem:[#allocation5 + $0x3a0] sm:$0xff]
    %v184 = vld [vmem:[#allocation5 + $0x3a8] sm:$0xff]
    %v185 = vld [vmem:[#allocation5 + $0x3b0] sm:$0xff]
    %v186 = vld [vmem:[#allocation5 + $0x3b8] sm:$0xff]
    %v187 = vld [vmem:[#allocation5 + $0x3c0] sm:$0xff]
    %v188 = vld [vmem:[#allocation5 + $0x3c8] sm:$0xff]
    %v189 = vld [vmem:[#allocation5 + $0x3d0] sm:$0xff]
    %v190 = vld [vmem:[#allocation5 + $0x3d8] sm:$0xff]
    %v191 = vld [vmem:[#allocation5 + $0x3e0] sm:$0xff]
    %v192 = vld [vmem:[#allocation5 + $0x3e8] sm:$0xff]
    %v193 = vld [vmem:[#allocation5 + $0x3f0] sm:$0xff]
    %v194 = vld [vmem:[#allocation5 + $0x3f8] sm:$0xff]
    %v195 = vld [vmem:[#allocation6] sm:$0xff]
    %v196 = vld [vmem:[#allocation6 + $0x8] sm:$0xff]
    %v197 = vld [vmem:[#allocation6 + $0x10] sm:$0xff]
    %v198 = vld [vmem:[#allocation6 + $0x18] sm:$0xff]
    %v199 = vld [vmem:[#allocation6 + $0x20] sm:$0xff]
    %v200 = vld [vmem:[#allocation6 + $0x28] sm:$0xff]
    %v201 = vld [vmem:[#allocation6 + $0x30] sm:$0xff]
    %v202 = vld [vmem:[#allocation6 + $0x38] sm:$0xff]
    %v203 = vld [vmem:[#allocation6 + $0x40] sm:$0xff]
    %v204 = vld [vmem:[#allocation6 + $0x48] sm:$0xff]
    %v205 = vld [vmem:[#allocation6 + $0x50] sm:$0xff]
    %v206 = vld [vmem:[#allocation6 + $0x58] sm:$0xff]
    %v207 = vld [vmem:[#allocation6 + $0x60] sm:$0xff]
    %v208 = vld [vmem:[#allocation6 + $0x68] sm:$0xff]
    %v209 = vld [vmem:[#allocation6 + $0x70] sm:$0xff]
    %v210 = vld [vmem:[#allocation6 + $0x78] sm:$0xff]
    %v211 = vld [vmem:[#allocation6 + $0x80] sm:$0xff]
    %v212 = vld [vmem:[#allocation6 + $0x88] sm:$0xff]
    %v213 = vld [vmem:[#allocation6 + $0x90] sm:$0xff]
    %v214 = vld [vmem:[#allocation6 + $0x98] sm:$0xff]
    %v215 = vld [vmem:[#allocation6 + $0xa0] sm:$0xff]
    %v216 = vld [vmem:[#allocation6 + $0xa8] sm:$0xff]
    %v217 = vld [vmem:[#allocation6 + $0xb0] sm:$0xff]
    %v218 = vld [vmem:[#allocation6 + $0xb8] sm:$0xff]
    %v219 = vld [vmem:[#allocation6 + $0xc0] sm:$0xff]
    %v220 = vld [vmem:[#allocation6 + $0xc8] sm:$0xff]
    %v221 = vld [vmem:[#allocation6 + $0xd0] sm:$0xff]
    %v222 = vld [vmem:[#allocation6 + $0xd8] sm:$0xff]
    %v223 = vld [vmem:[#allocation6 + $0xe0] sm:$0xff]
    %v224 = vld [vmem:[#allocation6 + $0xe8] sm:$0xff]
    %v225 = vld [vmem:[#allocation6 + $0xf0] sm:$0xff]
    %v226 = vld [vmem:[#allocation6 + $0xf8] sm:$0xff]
    %v227 = vld [vmem:[#allocation6 + $0x100] sm:$0xff]
    %v228 = vld [vmem:[#allocation6 + $0x108] sm:$0xff]
    %v229 = vld [vmem:[#allocation6 + $0x110] sm:$0xff]
    %v230 = vld [vmem:[#allocation6 + $0x118] sm:$0xff]
    %v231 = vld [vmem:[#allocation6 + $0x120] sm:$0xff]
    %v232 = vld [vmem:[#allocation6 + $0x128] sm:$0xff]
    %v233 = vld [vmem:[#allocation6 + $0x130] sm:$0xff]
    %v234 = vld [vmem:[#allocation6 + $0x138] sm:$0xff]
    %v235 = vld [vmem:[#allocation6 + $0x140] sm:$0xff]
    %v236 = vld [vmem:[#allocation6 + $0x148] sm:$0xff]
    %v237 = vld [vmem:[#allocation6 + $0x150] sm:$0xff]
    %v238 = vld [vmem:[#allocation6 + $0x158] sm:$0xff]
    %v239 = vld [vmem:[#allocation6 + $0x160] sm:$0xff]
    %v240 = vld [vmem:[#allocation6 + $0x168] sm:$0xff]
    %v241 = vld [vmem:[#allocation6 + $0x170] sm:$0xff]
    %v242 = vld [vmem:[#allocation6 + $0x178] sm:$0xff]
    %v243 = vld [vmem:[#allocation6 + $0x180] sm:$0xff]
    %v244 = vld [vmem:[#allocation6 + $0x188] sm:$0xff]
    %v245 = vld [vmem:[#allocation6 + $0x190] sm:$0xff]
    %v246 = vld [vmem:[#allocation6 + $0x198] sm:$0xff]
    %v247 = vld [vmem:[#allocation6 + $0x1a0] sm:$0xff]
    %v248 = vld [vmem:[#allocation6 + $0x1a8] sm:$0xff]
    %v249 = vld [vmem:[#allocation6 + $0x1b0] sm:$0xff]
    %v250 = vld [vmem:[#allocation6 + $0x1b8] sm:$0xff]
    %v251 = vld [vmem:[#allocation6 + $0x1c0] sm:$0xff]
    %v252 = vld [vmem:[#allocation6 + $0x1c8] sm:$0xff]
    %v253 = vld [vmem:[#allocation6 + $0x1d0] sm:$0xff]
    %v254 = vld [vmem:[#allocation6 + $0x1d8] sm:$0xff]
    %v255 = vld [vmem:[#allocation6 + $0x1e0] sm:$0xff]
    %v256 = vld [vmem:[#allocation6 + $0x1e8] sm:$0xff]
    %v257 = vld [vmem:[#allocation6 + $0x1f0] sm:$0xff]
    %v258 = vld [vmem:[#allocation6 + $0x1f8] sm:$0xff]
    %v259 = vld [vmem:[#allocation6 + $0x200] sm:$0xff]
    %v260 = vld [vmem:[#allocation6 + $0x208] sm:$0xff]
    %v261 = vld [vmem:[#allocation6 + $0x210] sm:$0xff]
    %v262 = vld [vmem:[#allocation6 + $0x218] sm:$0xff]
    %v263 = vld [vmem:[#allocation6 + $0x220] sm:$0xff]
    %v264 = vld [vmem:[#allocation6 + $0x228] sm:$0xff]
    %v265 = vld [vmem:[#allocation6 + $0x230] sm:$0xff]
    %v266 = vld [vmem:[#allocation6 + $0x238] sm:$0xff]
    %v267 = vld [vmem:[#allocation6 + $0x240] sm:$0xff]
    %v268 = vld [vmem:[#allocation6 + $0x248] sm:$0xff]
    %v269 = vld [vmem:[#allocation6 + $0x250] sm:$0xff]
    %v270 = vld [vmem:[#allocation6 + $0x258] sm:$0xff]
    %v271 = vld [vmem:[#allocation6 + $0x260] sm:$0xff]
    %v272 = vld [vmem:[#allocation6 + $0x268] sm:$0xff]
    %v273 = vld [vmem:[#allocation6 + $0x270] sm:$0xff]
    %v274 = vld [vmem:[#allocation6 + $0x278] sm:$0xff]
    %v275 = vld [vmem:[#allocation6 + $0x280] sm:$0xff]
    %v276 = vld [vmem:[#allocation6 + $0x288] sm:$0xff]
    %v277 = vld [vmem:[#allocation6 + $0x290] sm:$0xff]
    %v278 = vld [vmem:[#allocation6 + $0x298] sm:$0xff]
    %v279 = vld [vmem:[#allocation6 + $0x2a0] sm:$0xff]
    %v280 = vld [vmem:[#allocation6 + $0x2a8] sm:$0xff]
    %v281 = vld [vmem:[#allocation6 + $0x2b0] sm:$0xff]
    %v282 = vld [vmem:[#allocation6 + $0x2b8] sm:$0xff]
    %v283 = vld [vmem:[#allocation6 + $0x2c0] sm:$0xff]
    %v284 = vld [vmem:[#allocation6 + $0x2c8] sm:$0xff]
    %v285 = vld [vmem:[#allocation6 + $0x2d0] sm:$0xff]
    %v286 = vld [vmem:[#allocation6 + $0x2d8] sm:$0xff]
    %v287 = vld [vmem:[#allocation6 + $0x2e0] sm:$0xff]
    %v288 = vld [vmem:[#allocation6 + $0x2e8] sm:$0xff]
    %v289 = vld [vmem:[#allocation6 + $0x2f0] sm:$0xff]
    %v290 = vld [vmem:[#allocation6 + $0x2f8] sm:$0xff]
    %v291 = vld [vmem:[#allocation6 + $0x300] sm:$0xff]
    %v292 = vld [vmem:[#allocation6 + $0x308] sm:$0xff]
    %v293 = vld [vmem:[#allocation6 + $0x310] sm:$0xff]
    %v294 = vld [vmem:[#allocation6 + $0x318] sm:$0xff]
    %v295 = vld [vmem:[#allocation6 + $0x320] sm:$0xff]
    %v296 = vld [vmem:[#allocation6 + $0x328] sm:$0xff]
    %v297 = vld [vmem:[#allocation6 + $0x330] sm:$0xff]
    %v298 = vld [vmem:[#allocation6 + $0x338] sm:$0xff]
    %v299 = vld [vmem:[#allocation6 + $0x340] sm:$0xff]
    %v300 = vld [vmem:[#allocation6 + $0x348] sm:$0xff]
    %v301 = vld [vmem:[#allocation6 + $0x350] sm:$0xff]
    %v302 = vld [vmem:[#allocation6 + $0x358] sm:$0xff]
    %v303 = vld [vmem:[#allocation6 + $0x360] sm:$0xff]
    %v304 = vld [vmem:[#allocation6 + $0x368] sm:$0xff]
    %v305 = vld [vmem:[#allocation6 + $0x370] sm:$0xff]
    %v306 = vld [vmem:[#allocation6 + $0x378] sm:$0xff]
    %v307 = vld [vmem:[#allocation6 + $0x380] sm:$0xff]
    %v308 = vld [vmem:[#allocation6 + $0x388] sm:$0xff]
    %v309 = vld [vmem:[#allocation6 + $0x390] sm:$0xff]
    %v310 = vld [vmem:[#allocation6 + $0x398] sm:$0xff]
    %v311 = vld [vmem:[#allocation6 + $0x3a0] sm:$0xff]
    %v312 = vld [vmem:[#allocation6 + $0x3a8] sm:$0xff]
    %v313 = vld [vmem:[#allocation6 + $0x3b0] sm:$0xff]
    %v314 = vld [vmem:[#allocation6 + $0x3b8] sm:$0xff]
    %v315 = vld [vmem:[#allocation6 + $0x3c0] sm:$0xff]
    %v316 = vld [vmem:[#allocation6 + $0x3c8] sm:$0xff]
    %v317 = vld [vmem:[#allocation6 + $0x3d0] sm:$0xff]
    %v318 = vld [vmem:[#allocation6 + $0x3d8] sm:$0xff]
    %v319 = vld [vmem:[#allocation6 + $0x3e0] sm:$0xff]
    %v320 = vld [vmem:[#allocation6 + $0x3e8] sm:$0xff]
    %v321 = vld [vmem:[#allocation6 + $0x3f0] sm:$0xff]
    %v322 = vld [vmem:[#allocation6 + $0x3f8] sm:$0xff]
    %v323 = vld [vmem:[%s6] sm:$0xff]
    %v324 = vld [vmem:[%s1] sm:$0xff]
    %v325 = vld [vmem:[%s1 + $0x8] sm:$0xff]
    %v326 = vld [vmem:[%s3 + $0x7] sm:$0x1]
    %v327 = vlaneseq
    %v328 = vshrl.u32 %v327, 7
    %v329 = vsub.s32 0, %v328
    %v330 = vrot.slane %v326, %v329
    %v333 = vcombine.high %v324, %v324
    %v335 = vunpack.c.l.s4 1983009808
    %v336 = vunpack.c.0.s8 %v335
    %v337 = vlaneseq
    %v338 = vshrl.u32 %v337, 7
    %v339 = vsub.s32 %v336, %v338
    %v340 = vrot.slane %v324, %v339
    %v342 = vunpack.c.l.s4 1983009808
    %v343 = vunpack.c.0.s8 %v342
    %v344 = vlaneseq
    %v345 = vshrl.u32 %v344, 7
    %v346 = vsub.s32 %v343, %v345
    %v347 = vrot.slane %v333, %v346
    %v348 = vcombine.high %v340, %v340
    %v349 = vcombine.high %v347, %v347
    %v350 = vcombine.high %v325, %v325
    %v352 = vunpack.c.l.s4 1983009808
    %v353 = vunpack.c.0.s8 %v352
    %v354 = vlaneseq
    %v355 = vshrl.u32 %v354, 7
    %v356 = vsub.s32 %v353, %v355
    %v357 = vrot.slane %v325, %v356
    %v359 = vunpack.c.l.s4 1983009808
    %v360 = vunpack.c.0.s8 %v359
    %v361 = vlaneseq
    %v362 = vshrl.u32 %v361, 7
    %v363 = vsub.s32 %v360, %v362
    %v364 = vrot.slane %v350, %v363
    %v365 = vcombine.high %v357, %v357
    %v366 = vcombine.high %v364, %v364
    %375 = vmatprep.subr.mxu0 0.0
    %376 = vmatpush1.msra.mxu0 %v82
    %377 = vmatprep.subr.mxu0 0.0
    %378 = vmatpush1.msra.mxu0 %v81
    %379 = vmatprep.subr.mxu0 0.0
    %380 = vmatpush1.msra.mxu0 %v80
    %381 = vmatprep.subr.mxu0 0.0
    %382 = vmatpush1.msra.mxu0 %v79
    %383 = vmatprep.subr.mxu0 0.0
    %384 = vmatpush1.msra.mxu0 %v78
    %385 = vmatprep.subr.mxu0 0.0
    %386 = vmatpush1.msra.mxu0 %v77
    %387 = vmatprep.subr.mxu0 0.0
    %388 = vmatpush1.msra.mxu0 %v76
    %389 = vmatprep.subr.mxu0 0.0
    %390 = vmatpush1.msra.mxu0 %v75
    %391 = vmatprep.subr.mxu0 0.0
    %392 = vmatpush1.msra.mxu0 %v74
    %393 = vmatprep.subr.mxu0 0.0
    %394 = vmatpush1.msra.mxu0 %v73
    %395 = vmatprep.subr.mxu0 0.0
    %396 = vmatpush1.msra.mxu0 %v72
    %397 = vmatprep.subr.mxu0 0.0
    %398 = vmatpush1.msra.mxu0 %v71
    %399 = vmatprep.subr.mxu0 0.0
    %400 = vmatpush1.msra.mxu0 %v70
    %401 = vmatprep.subr.mxu0 0.0
    %402 = vmatpush1.msra.mxu0 %v69
    %403 = vmatprep.subr.mxu0 0.0
    %404 = vmatpush1.msra.mxu0 %v68
    %405 = vmatprep.subr.mxu0 0.0
    %406 = vmatpush1.msra.mxu0 %v67
    %407 = vmatprep.subr.mxu0 0.0
    %408 = vmatpush2.msra.mxu0 %v98
    %409 = vmatprep.subr.mxu0 0.0
    %410 = vmatpush2.msra.mxu0 %v97
    %411 = vmatprep.subr.mxu0 0.0
    %412 = vmatpush2.msra.mxu0 %v96
    %413 = vmatprep.subr.mxu0 0.0
    %414 = vmatpush2.msra.mxu0 %v95
    %415 = vmatprep.subr.mxu0 0.0
    %416 = vmatpush2.msra.mxu0 %v94
    %417 = vmatprep.subr.mxu0 0.0
    %418 = vmatpush2.msra.mxu0 %v93
    %419 = vmatprep.subr.mxu0 0.0
    %420 = vmatpush2.msra.mxu0 %v92
    %421 = vmatprep.subr.mxu0 0.0
    %422 = vmatpush2.msra.mxu0 %v91
    %423 = vmatprep.subr.mxu0 0.0
    %424 = vmatpush2.msra.mxu0 %v90
    %425 = vmatprep.subr.mxu0 0.0
    %426 = vmatpush2.msra.mxu0 %v89
    %427 = vmatprep.subr.mxu0 0.0
    %428 = vmatpush2.msra.mxu0 %v88
    %429 = vmatprep.subr.mxu0 0.0
    %430 = vmatpush2.msra.mxu0 %v87
    %431 = vmatprep.subr.mxu0 0.0
    %432 = vmatpush2.msra.mxu0 %v86
    %433 = vmatprep.subr.mxu0 0.0
    %434 = vmatpush2.msra.mxu0 %v85
    %435 = vmatprep.subr.mxu0 0.0
    %436 = vmatpush2.msra.mxu0 %v84
    %437 = vmatprep.subr.mxu0 0.0
    %438 = vmatpush2.msra.mxu0 %v83
    %439 = vmatprep.mubr.f32.mxu0 %v348
    %440 = vmatmul.mubr.f32.gmra.mxu0 %v340
    %v441 = vpop.f32.mrf.mxu0
    %v442 = vadd.f32 %v330, %v441
    %v443 = vpop.f32.mrf.mxu0
    %444 = vdwg.mxu0
    %445 = vmatprep.subr.mxu0 0.0
    %446 = vmatpush1.msra.mxu0 %v114
    %447 = vmatprep.subr.mxu0 0.0
    %448 = vmatpush1.msra.mxu0 %v113
    %449 = vmatprep.subr.mxu0 0.0
    %450 = vmatpush1.msra.mxu0 %v112
    %451 = vmatprep.subr.mxu0 0.0
    %452 = vmatpush1.msra.mxu0 %v111
    %453 = vmatprep.subr.mxu0 0.0
    %454 = vmatpush1.msra.mxu0 %v110
    %455 = vmatprep.subr.mxu0 0.0
    %456 = vmatpush1.msra.mxu0 %v109
    %457 = vmatprep.subr.mxu0 0.0
    %458 = vmatpush1.msra.mxu0 %v108
    %459 = vmatprep.subr.mxu0 0.0
    %460 = vmatpush1.msra.mxu0 %v107
    %461 = vmatprep.subr.mxu0 0.0
    %462 = vmatpush1.msra.mxu0 %v106
    %463 = vmatprep.subr.mxu0 0.0
    %464 = vmatpush1.msra.mxu0 %v105
    %465 = vmatprep.subr.mxu0 0.0
    %466 = vmatpush1.msra.mxu0 %v104
    %467 = vmatprep.subr.mxu0 0.0
    %468 = vmatpush1.msra.mxu0 %v103
    %469 = vmatprep.subr.mxu0 0.0
    %470 = vmatpush1.msra.mxu0 %v102
    %471 = vmatprep.subr.mxu0 0.0
    %472 = vmatpush1.msra.mxu0 %v101
    %473 = vmatprep.subr.mxu0 0.0
    %474 = vmatpush1.msra.mxu0 %v100
    %475 = vmatprep.subr.mxu0 0.0
    %476 = vmatpush1.msra.mxu0 %v99
    %477 = vmatprep.subr.mxu0 0.0
    %478 = vmatpush2.msra.mxu0 %v130
    %479 = vmatprep.subr.mxu0 0.0
    %480 = vmatpush2.msra.mxu0 %v129
    %481 = vmatprep.subr.mxu0 0.0
    %482 = vmatpush2.msra.mxu0 %v128
    %483 = vmatprep.subr.mxu0 0.0
    %484 = vmatpush2.msra.mxu0 %v127
    %485 = vmatprep.subr.mxu0 0.0
    %486 = vmatpush2.msra.mxu0 %v126
    %487 = vmatprep.subr.mxu0 0.0
    %488 = vmatpush2.msra.mxu0 %v125
    %489 = vmatprep.subr.mxu0 0.0
    %490 = vmatpush2.msra.mxu0 %v124
    %491 = vmatprep.subr.mxu0 0.0
    %492 = vmatpush2.msra.mxu0 %v123
    %493 = vmatprep.subr.mxu0 0.0
    %494 = vmatpush2.msra.mxu0 %v122
    %495 = vmatprep.subr.mxu0 0.0
    %496 = vmatpush2.msra.mxu0 %v121
    %497 = vmatprep.subr.mxu0 0.0
    %498 = vmatpush2.msra.mxu0 %v120
    %499 = vmatprep.subr.mxu0 0.0
    %500 = vmatpush2.msra.mxu0 %v119
    %501 = vmatprep.subr.mxu0 0.0
    %502 = vmatpush2.msra.mxu0 %v118
    %503 = vmatprep.subr.mxu0 0.0
    %504 = vmatpush2.msra.mxu0 %v117
    %505 = vmatprep.subr.mxu0 0.0
    %506 = vmatpush2.msra.mxu0 %v116
    %507 = vmatprep.subr.mxu0 0.0
    %508 = vmatpush2.msra.mxu0 %v115
    %509 = vmatprep.mubr.f32.mxu0 %v349
    %510 = vmatmul.mubr.f32.gmra.mxu0 %v347
    %v511 = vpop.f32.mrf.mxu0
    %v512 = vadd.f32 %v442, %v511
    %v513 = vpop.f32.mrf.mxu0
    %514 = vdwg.mxu0
    %515 = vmatprep.subr.mxu0 0.0
    %516 = vmatpush1.msra.mxu0 %v146
    %517 = vmatprep.subr.mxu0 0.0
    %518 = vmatpush1.msra.mxu0 %v145
    %519 = vmatprep.subr.mxu0 0.0
    %520 = vmatpush1.msra.mxu0 %v144
    %521 = vmatprep.subr.mxu0 0.0
    %522 = vmatpush1.msra.mxu0 %v143
    %523 = vmatprep.subr.mxu0 0.0
    %524 = vmatpush1.msra.mxu0 %v142
    %525 = vmatprep.subr.mxu0 0.0
    %526 = vmatpush1.msra.mxu0 %v141
    %527 = vmatprep.subr.mxu0 0.0
    %528 = vmatpush1.msra.mxu0 %v140
    %529 = vmatprep.subr.mxu0 0.0
    %530 = vmatpush1.msra.mxu0 %v139
    %531 = vmatprep.subr.mxu0 0.0
    %532 = vmatpush1.msra.mxu0 %v138
    %533 = vmatprep.subr.mxu0 0.0
    %534 = vmatpush1.msra.mxu0 %v137
    %535 = vmatprep.subr.mxu0 0.0
    %536 = vmatpush1.msra.mxu0 %v136
    %537 = vmatprep.subr.mxu0 0.0
    %538 = vmatpush1.msra.mxu0 %v135
    %539 = vmatprep.subr.mxu0 0.0
    %540 = vmatpush1.msra.mxu0 %v134
    %541 = vmatprep.subr.mxu0 0.0
    %542 = vmatpush1.msra.mxu0 %v133
    %543 = vmatprep.subr.mxu0 0.0
    %544 = vmatpush1.msra.mxu0 %v132
    %545 = vmatprep.subr.mxu0 0.0
    %546 = vmatpush1.msra.mxu0 %v131
    %547 = vmatprep.subr.mxu0 0.0
    %548 = vmatpush2.msra.mxu0 %v162
    %549 = vmatprep.subr.mxu0 0.0
    %550 = vmatpush2.msra.mxu0 %v161
    %551 = vmatprep.subr.mxu0 0.0
    %552 = vmatpush2.msra.mxu0 %v160
    %553 = vmatprep.subr.mxu0 0.0
    %554 = vmatpush2.msra.mxu0 %v159
    %555 = vmatprep.subr.mxu0 0.0
    %556 = vmatpush2.msra.mxu0 %v158
    %557 = vmatprep.subr.mxu0 0.0
    %558 = vmatpush2.msra.mxu0 %v157
    %559 = vmatprep.subr.mxu0 0.0
    %560 = vmatpush2.msra.mxu0 %v156
    %561 = vmatprep.subr.mxu0 0.0
    %562 = vmatpush2.msra.mxu0 %v155
    %563 = vmatprep.subr.mxu0 0.0
    %564 = vmatpush2.msra.mxu0 %v154
    %565 = vmatprep.subr.mxu0 0.0
    %566 = vmatpush2.msra.mxu0 %v153
    %567 = vmatprep.subr.mxu0 0.0
    %568 = vmatpush2.msra.mxu0 %v152
    %569 = vmatprep.subr.mxu0 0.0
    %570 = vmatpush2.msra.mxu0 %v151
    %571 = vmatprep.subr.mxu0 0.0
    %572 = vmatpush2.msra.mxu0 %v150
    %573 = vmatprep.subr.mxu0 0.0
    %574 = vmatpush2.msra.mxu0 %v149
    %575 = vmatprep.subr.mxu0 0.0
    %576 = vmatpush2.msra.mxu0 %v148
    %577 = vmatprep.subr.mxu0 0.0
    %578 = vmatpush2.msra.mxu0 %v147
    %579 = vmatprep.mubr.f32.mxu0 %v365
    %580 = vmatmul.mubr.f32.gmra.mxu0 %v357
    %v581 = vpop.f32.mrf.mxu0
    %v582 = vadd.f32 %v512, %v581
    %v583 = vpop.f32.mrf.mxu0
    %584 = vdwg.mxu0
    %585 = vmatprep.subr.mxu0 0.0
    %586 = vmatpush1.msra.mxu0 %v178
    %587 = vmatprep.subr.mxu0 0.0
    %588 = vmatpush1.msra.mxu0 %v177
    %589 = vmatprep.subr.mxu0 0.0
    %590 = vmatpush1.msra.mxu0 %v176
    %591 = vmatprep.subr.mxu0 0.0
    %592 = vmatpush1.msra.mxu0 %v175
    %593 = vmatprep.subr.mxu0 0.0
    %594 = vmatpush1.msra.mxu0 %v174
    %595 = vmatprep.subr.mxu0 0.0
    %596 = vmatpush1.msra.mxu0 %v173
    %597 = vmatprep.subr.mxu0 0.0
    %598 = vmatpush1.msra.mxu0 %v172
    %599 = vmatprep.subr.mxu0 0.0
    %600 = vmatpush1.msra.mxu0 %v171
    %601 = vmatprep.subr.mxu0 0.0
    %602 = vmatpush1.msra.mxu0 %v170
    %603 = vmatprep.subr.mxu0 0.0
    %604 = vmatpush1.msra.mxu0 %v169
    %605 = vmatprep.subr.mxu0 0.0
    %606 = vmatpush1.msra.mxu0 %v168
    %607 = vmatprep.subr.mxu0 0.0
    %608 = vmatpush1.msra.mxu0 %v167
    %609 = vmatprep.subr.mxu0 0.0
    %610 = vmatpush1.msra.mxu0 %v166
    %611 = vmatprep.subr.mxu0 0.0
    %612 = vmatpush1.msra.mxu0 %v165
    %613 = vmatprep.subr.mxu0 0.0
    %614 = vmatpush1.msra.mxu0 %v164
    %615 = vmatprep.subr.mxu0 0.0
    %616 = vmatpush1.msra.mxu0 %v163
    %617 = vmatprep.subr.mxu0 0.0
    %618 = vmatpush2.msra.mxu0 %v194
    %619 = vmatprep.subr.mxu0 0.0
    %620 = vmatpush2.msra.mxu0 %v193
    %621 = vmatprep.subr.mxu0 0.0
    %622 = vmatpush2.msra.mxu0 %v192
    %623 = vmatprep.subr.mxu0 0.0
    %624 = vmatpush2.msra.mxu0 %v191
    %625 = vmatprep.subr.mxu0 0.0
    %626 = vmatpush2.msra.mxu0 %v190
    %627 = vmatprep.subr.mxu0 0.0
    %628 = vmatpush2.msra.mxu0 %v189
    %629 = vmatprep.subr.mxu0 0.0
    %630 = vmatpush2.msra.mxu0 %v188
    %631 = vmatprep.subr.mxu0 0.0
    %632 = vmatpush2.msra.mxu0 %v187
    %633 = vmatprep.subr.mxu0 0.0
    %634 = vmatpush2.msra.mxu0 %v186
    %635 = vmatprep.subr.mxu0 0.0
    %636 = vmatpush2.msra.mxu0 %v185
    %637 = vmatprep.subr.mxu0 0.0
    %638 = vmatpush2.msra.mxu0 %v184
    %639 = vmatprep.subr.mxu0 0.0
    %640 = vmatpush2.msra.mxu0 %v183
    %641 = vmatprep.subr.mxu0 0.0
    %642 = vmatpush2.msra.mxu0 %v182
    %643 = vmatprep.subr.mxu0 0.0
    %644 = vmatpush2.msra.mxu0 %v181
    %645 = vmatprep.subr.mxu0 0.0
    %646 = vmatpush2.msra.mxu0 %v180
    %647 = vmatprep.subr.mxu0 0.0
    %648 = vmatpush2.msra.mxu0 %v179
    %649 = vmatprep.mubr.f32.mxu0 %v366
    %650 = vmatmul.mubr.f32.gmra.mxu0 %v364
    %v651 = vpop.f32.mrf.mxu0
    %v652 = vadd.f32 %v582, %v651
    %v653 = vpop.f32.mrf.mxu0
    %654 = vdwg.mxu0
    %v655 = vmax.f32 %v652, 0.0
    %v657 = vlaneseq
    %v658 = vshrl.u32 %v657, 7
    %v659 = vsub.s32 0, %v658
    %v660 = vrot.slane %v323, %v659
    %v661 = vlaneseq
    %v662 = vshrl.u32 %v661, 7
    %v663 = vsub.s32 1, %v662
    %v664 = vrot.slane %v323, %v663
    %v665 = vlaneseq
    %v666 = vshrl.u32 %v665, 7
    %v667 = vsub.s32 2, %v666
    %v668 = vrot.slane %v323, %v667
    %v669 = vlaneseq
    %v670 = vshrl.u32 %v669, 7
    %v671 = vsub.s32 3, %v670
    %v672 = vrot.slane %v323, %v671
    %v673 = vlaneseq
    %v674 = vshrl.u32 %v673, 7
    %v675 = vsub.s32 4, %v674
    %v676 = vrot.slane %v323, %v675
    %v677 = vlaneseq
    %v678 = vshrl.u32 %v677, 7
    %v679 = vsub.s32 5, %v678
    %v680 = vrot.slane %v323, %v679
    %v681 = vlaneseq
    %v682 = vshrl.u32 %v681, 7
    %v683 = vsub.s32 6, %v682
    %v684 = vrot.slane %v323, %v683
    %v685 = vlaneseq
    %v686 = vshrl.u32 %v685, 7
    %v687 = vsub.s32 7, %v686
    %v688 = vrot.slane %v323, %v687
    %697 = vmatprep.subr.mxu0 %v316
    %698 = vmatpush1.msra.mxu0 %v315
    %699 = vmatprep.subr.mxu0 %v308
    %700 = vmatpush1.msra.mxu0 %v307
    %701 = vmatprep.subr.mxu0 %v300
    %702 = vmatpush1.msra.mxu0 %v299
    %703 = vmatprep.subr.mxu0 %v292
    %704 = vmatpush1.msra.mxu0 %v291
    %705 = vmatprep.subr.mxu0 %v284
    %706 = vmatpush1.msra.mxu0 %v283
    %707 = vmatprep.subr.mxu0 %v276
    %708 = vmatpush1.msra.mxu0 %v275
    %709 = vmatprep.subr.mxu0 %v268
    %710 = vmatpush1.msra.mxu0 %v267
    %711 = vmatprep.subr.mxu0 %v260
    %712 = vmatpush1.msra.mxu0 %v259
    %713 = vmatprep.subr.mxu0 %v252
    %714 = vmatpush1.msra.mxu0 %v251
    %715 = vmatprep.subr.mxu0 %v244
    %716 = vmatpush1.msra.mxu0 %v243
    %717 = vmatprep.subr.mxu0 %v236
    %718 = vmatpush1.msra.mxu0 %v235
    %719 = vmatprep.subr.mxu0 %v228
    %720 = vmatpush1.msra.mxu0 %v227
    %721 = vmatprep.subr.mxu0 %v220
    %722 = vmatpush1.msra.mxu0 %v219
    %723 = vmatprep.subr.mxu0 %v212
    %724 = vmatpush1.msra.mxu0 %v211
    %725 = vmatprep.subr.mxu0 %v204
    %726 = vmatpush1.msra.mxu0 %v203
    %727 = vmatprep.subr.mxu0 %v196
    %728 = vmatpush1.msra.mxu0 %v195
    %729 = vmatprep.subr.mxu0 0.0
    %730 = vmatpush2.msra.mxu0 0.0
    %731 = vmatprep.subr.mxu0 0.0
    %732 = vmatpush2.msra.mxu0 0.0
    %733 = vmatprep.subr.mxu0 0.0
    %734 = vmatpush2.msra.mxu0 0.0
    %735 = vmatprep.subr.mxu0 0.0
    %736 = vmatpush2.msra.mxu0 0.0
    %737 = vmatprep.subr.mxu0 0.0
    %738 = vmatpush2.msra.mxu0 0.0
    %739 = vmatprep.subr.mxu0 0.0
    %740 = vmatpush2.msra.mxu0 0.0
    %741 = vmatprep.subr.mxu0 0.0
    %742 = vmatpush2.msra.mxu0 0.0
    %743 = vmatprep.subr.mxu0 0.0
    %744 = vmatpush2.msra.mxu0 0.0
    %745 = vmatprep.subr.mxu0 0.0
    %746 = vmatpush2.msra.mxu0 0.0
    %747 = vmatprep.subr.mxu0 0.0
    %748 = vmatpush2.msra.mxu0 0.0
    %749 = vmatprep.subr.mxu0 0.0
    %750 = vmatpush2.msra.mxu0 0.0
    %751 = vmatprep.subr.mxu0 0.0
    %752 = vmatpush2.msra.mxu0 0.0
    %753 = vmatprep.subr.mxu0 0.0
    %754 = vmatpush2.msra.mxu0 0.0
    %755 = vmatprep.subr.mxu0 0.0
    %756 = vmatpush2.msra.mxu0 0.0
    %757 = vmatprep.subr.mxu0 0.0
    %758 = vmatpush2.msra.mxu0 0.0
    %759 = vmatprep.subr.mxu0 0.0
    %760 = vmatpush2.msra.mxu0 0.0
    %761 = vmatprep.mubr.f32.mxu0 0.0
    %762 = vmatmul.mubr.f32.gmra.mxu0 %v655
    %v763 = vpop.f32.mrf.mxu0
    %v764 = vadd.f32 %v660, %v763
    %v765 = vpop.f32.mrf.mxu0
    %v766 = vadd.f32 %v664, %v765
    %767 = vdwg.mxu0
    %768 = vmatprep.subr.mxu0 %v318
    %769 = vmatpush1.msra.mxu0 %v317
    %770 = vmatprep.subr.mxu0 %v310
    %771 = vmatpush1.msra.mxu0 %v309
    %772 = vmatprep.subr.mxu0 %v302
    %773 = vmatpush1.msra.mxu0 %v301
    %774 = vmatprep.subr.mxu0 %v294
    %775 = vmatpush1.msra.mxu0 %v293
    %776 = vmatprep.subr.mxu0 %v286
    %777 = vmatpush1.msra.mxu0 %v285
    %778 = vmatprep.subr.mxu0 %v278
    %779 = vmatpush1.msra.mxu0 %v277
    %780 = vmatprep.subr.mxu0 %v270
    %781 = vmatpush1.msra.mxu0 %v269
    %782 = vmatprep.subr.mxu0 %v262
    %783 = vmatpush1.msra.mxu0 %v261
    %784 = vmatprep.subr.mxu0 %v254
    %785 = vmatpush1.msra.mxu0 %v253
    %786 = vmatprep.subr.mxu0 %v246
    %787 = vmatpush1.msra.mxu0 %v245
    %788 = vmatprep.subr.mxu0 %v238
    %789 = vmatpush1.msra.mxu0 %v237
    %790 = vmatprep.subr.mxu0 %v230
    %791 = vmatpush1.msra.mxu0 %v229
    %792 = vmatprep.subr.mxu0 %v222
    %793 = vmatpush1.msra.mxu0 %v221
    %794 = vmatprep.subr.mxu0 %v214
    %795 = vmatpush1.msra.mxu0 %v213
    %796 = vmatprep.subr.mxu0 %v206
    %797 = vmatpush1.msra.mxu0 %v205
    %798 = vmatprep.subr.mxu0 %v198
    %799 = vmatpush1.msra.mxu0 %v197
    %800 = vmatprep.subr.mxu0 0.0
    %801 = vmatpush2.msra.mxu0 0.0
    %802 = vmatprep.subr.mxu0 0.0
    %803 = vmatpush2.msra.mxu0 0.0
    %804 = vmatprep.subr.mxu0 0.0
    %805 = vmatpush2.msra.mxu0 0.0
    %806 = vmatprep.subr.mxu0 0.0
    %807 = vmatpush2.msra.mxu0 0.0
    %808 = vmatprep.subr.mxu0 0.0
    %809 = vmatpush2.msra.mxu0 0.0
    %810 = vmatprep.subr.mxu0 0.0
    %811 = vmatpush2.msra.mxu0 0.0
    %812 = vmatprep.subr.mxu0 0.0
    %813 = vmatpush2.msra.mxu0 0.0
    %814 = vmatprep.subr.mxu0 0.0
    %815 = vmatpush2.msra.mxu0 0.0
    %816 = vmatprep.subr.mxu0 0.0
    %817 = vmatpush2.msra.mxu0 0.0
    %818 = vmatprep.subr.mxu0 0.0
    %819 = vmatpush2.msra.mxu0 0.0
    %820 = vmatprep.subr.mxu0 0.0
    %821 = vmatpush2.msra.mxu0 0.0
    %822 = vmatprep.subr.mxu0 0.0
    %823 = vmatpush2.msra.mxu0 0.0
    %824 = vmatprep.subr.mxu0 0.0
    %825 = vmatpush2.msra.mxu0 0.0
    %826 = vmatprep.subr.mxu0 0.0
    %827 = vmatpush2.msra.mxu0 0.0
    %828 = vmatprep.subr.mxu0 0.0
    %829 = vmatpush2.msra.mxu0 0.0
    %830 = vmatprep.subr.mxu0 0.0
    %831 = vmatpush2.msra.mxu0 0.0
    %832 = vmatprep.mubr.f32.mxu0 0.0
    %833 = vmatmul.mubr.f32.gmra.mxu0 %v655
    %v834 = vpop.f32.mrf.mxu0
    %v835 = vadd.f32 %v668, %v834
    %v836 = vpop.f32.mrf.mxu0
    %v837 = vadd.f32 %v672, %v836
    %838 = vdwg.mxu0
    %839 = vmatprep.subr.mxu0 %v320
    %840 = vmatpush1.msra.mxu0 %v319
    %841 = vmatprep.subr.mxu0 %v312
    %842 = vmatpush1.msra.mxu0 %v311
    %843 = vmatprep.subr.mxu0 %v304
    %844 = vmatpush1.msra.mxu0 %v303
    %845 = vmatprep.subr.mxu0 %v296
    %846 = vmatpush1.msra.mxu0 %v295
    %847 = vmatprep.subr.mxu0 %v288
    %848 = vmatpush1.msra.mxu0 %v287
    %849 = vmatprep.subr.mxu0 %v280
    %850 = vmatpush1.msra.mxu0 %v279
    %851 = vmatprep.subr.mxu0 %v272
    %852 = vmatpush1.msra.mxu0 %v271
    %853 = vmatprep.subr.mxu0 %v264
    %854 = vmatpush1.msra.mxu0 %v263
    %855 = vmatprep.subr.mxu0 %v256
    %856 = vmatpush1.msra.mxu0 %v255
    %857 = vmatprep.subr.mxu0 %v248
    %858 = vmatpush1.msra.mxu0 %v247
    %859 = vmatprep.subr.mxu0 %v240
    %860 = vmatpush1.msra.mxu0 %v239
    %861 = vmatprep.subr.mxu0 %v232
    %862 = vmatpush1.msra.mxu0 %v231
    %863 = vmatprep.subr.mxu0 %v224
    %864 = vmatpush1.msra.mxu0 %v223
    %865 = vmatprep.subr.mxu0 %v216
    %866 = vmatpush1.msra.mxu0 %v215
    %867 = vmatprep.subr.mxu0 %v208
    %868 = vmatpush1.msra.mxu0 %v207
    %869 = vmatprep.subr.mxu0 %v200
    %870 = vmatpush1.msra.mxu0 %v199
    %871 = vmatprep.subr.mxu0 0.0
    %872 = vmatpush2.msra.mxu0 0.0
    %873 = vmatprep.subr.mxu0 0.0
    %874 = vmatpush2.msra.mxu0 0.0
    %875 = vmatprep.subr.mxu0 0.0
    %876 = vmatpush2.msra.mxu0 0.0
    %877 = vmatprep.subr.mxu0 0.0
    %878 = vmatpush2.msra.mxu0 0.0
    %879 = vmatprep.subr.mxu0 0.0
    %880 = vmatpush2.msra.mxu0 0.0
    %881 = vmatprep.subr.mxu0 0.0
    %882 = vmatpush2.msra.mxu0 0.0
    %883 = vmatprep.subr.mxu0 0.0
    %884 = vmatpush2.msra.mxu0 0.0
    %885 = vmatprep.subr.mxu0 0.0
    %886 = vmatpush2.msra.mxu0 0.0
    %887 = vmatprep.subr.mxu0 0.0
    %888 = vmatpush2.msra.mxu0 0.0
    %889 = vmatprep.subr.mxu0 0.0
    %890 = vmatpush2.msra.mxu0 0.0
    %891 = vmatprep.subr.mxu0 0.0
    %892 = vmatpush2.msra.mxu0 0.0
    %893 = vmatprep.subr.mxu0 0.0
    %894 = vmatpush2.msra.mxu0 0.0
    %895 = vmatprep.subr.mxu0 0.0
    %896 = vmatpush2.msra.mxu0 0.0
    %897 = vmatprep.subr.mxu0 0.0
    %898 = vmatpush2.msra.mxu0 0.0
    %899 = vmatprep.subr.mxu0 0.0
    %900 = vmatpush2.msra.mxu0 0.0
    %901 = vmatprep.subr.mxu0 0.0
    %902 = vmatpush2.msra.mxu0 0.0
    %903 = vmatprep.mubr.f32.mxu0 0.0
    %904 = vmatmul.mubr.f32.gmra.mxu0 %v655
    %v905 = vpop.f32.mrf.mxu0
    %v906 = vadd.f32 %v676, %v905
    %v907 = vpop.f32.mrf.mxu0
    %v908 = vadd.f32 %v680, %v907
    %909 = vdwg.mxu0
    %910 = vmatprep.subr.mxu0 %v322
    %911 = vmatpush1.msra.mxu0 %v321
    %912 = vmatprep.subr.mxu0 %v314
    %913 = vmatpush1.msra.mxu0 %v313
    %914 = vmatprep.subr.mxu0 %v306
    %915 = vmatpush1.msra.mxu0 %v305
    %916 = vmatprep.subr.mxu0 %v298
    %917 = vmatpush1.msra.mxu0 %v297
    %918 = vmatprep.subr.mxu0 %v290
    %919 = vmatpush1.msra.mxu0 %v289
    %920 = vmatprep.subr.mxu0 %v282
    %921 = vmatpush1.msra.mxu0 %v281
    %922 = vmatprep.subr.mxu0 %v274
    %923 = vmatpush1.msra.mxu0 %v273
    %924 = vmatprep.subr.mxu0 %v266
    %925 = vmatpush1.msra.mxu0 %v265
    %926 = vmatprep.subr.mxu0 %v258
    %927 = vmatpush1.msra.mxu0 %v257
    %928 = vmatprep.subr.mxu0 %v250
    %929 = vmatpush1.msra.mxu0 %v249
    %930 = vmatprep.subr.mxu0 %v242
    %931 = vmatpush1.msra.mxu0 %v241
    %932 = vmatprep.subr.mxu0 %v234
    %933 = vmatpush1.msra.mxu0 %v233
    %934 = vmatprep.subr.mxu0 %v226
    %935 = vmatpush1.msra.mxu0 %v225
    %936 = vmatprep.subr.mxu0 %v218
    %937 = vmatpush1.msra.mxu0 %v217
    %938 = vmatprep.subr.mxu0 %v210
    %939 = vmatpush1.msra.mxu0 %v209
    %940 = vmatprep.subr.mxu0 %v202
    %941 = vmatpush1.msra.mxu0 %v201
    %942 = vmatprep.subr.mxu0 0.0
    %943 = vmatpush2.msra.mxu0 0.0
    %944 = vmatprep.subr.mxu0 0.0
    %945 = vmatpush2.msra.mxu0 0.0
    %946 = vmatprep.subr.mxu0 0.0
    %947 = vmatpush2.msra.mxu0 0.0
    %948 = vmatprep.subr.mxu0 0.0
    %949 = vmatpush2.msra.mxu0 0.0
    %950 = vmatprep.subr.mxu0 0.0
    %951 = vmatpush2.msra.mxu0 0.0
    %952 = vmatprep.subr.mxu0 0.0
    %953 = vmatpush2.msra.mxu0 0.0
    %954 = vmatprep.subr.mxu0 0.0
    %955 = vmatpush2.msra.mxu0 0.0
    %956 = vmatprep.subr.mxu0 0.0
    %957 = vmatpush2.msra.mxu0 0.0
    %958 = vmatprep.subr.mxu0 0.0
    %959 = vmatpush2.msra.mxu0 0.0
    %960 = vmatprep.subr.mxu0 0.0
    %961 = vmatpush2.msra.mxu0 0.0
    %962 = vmatprep.subr.mxu0 0.0
    %963 = vmatpush2.msra.mxu0 0.0
    %964 = vmatprep.subr.mxu0 0.0
    %965 = vmatpush2.msra.mxu0 0.0
    %966 = vmatprep.subr.mxu0 0.0
    %967 = vmatpush2.msra.mxu0 0.0
    %968 = vmatprep.subr.mxu0 0.0
    %969 = vmatpush2.msra.mxu0 0.0
    %970 = vmatprep.subr.mxu0 0.0
    %971 = vmatpush2.msra.mxu0 0.0
    %972 = vmatprep.subr.mxu0 0.0
    %973 = vmatpush2.msra.mxu0 0.0
    %974 = vmatprep.mubr.f32.mxu0 0.0
    %975 = vmatmul.mubr.f32.gmra.mxu0 %v655
    %v976 = vpop.f32.mrf.mxu0
    %v977 = vadd.f32 %v684, %v976
    %v978 = vpop.f32.mrf.mxu0
    %v979 = vadd.f32 %v688, %v978
    %980 = vdwg.mxu0
    %s981 = sld [smem:[#allocation2 + $0x380]]
    %s982 = sld [smem:[#allocation2 + $0x381]]
    %v983 = vstv %s982
    %v984 = vmul.f32 %v983, %v764
    %v985 = vmul.f32 %v983, %v766
    %v986 = vmul.f32 %v983, %v835
    %v987 = vmul.f32 %v983, %v837
    %v988 = vmul.f32 %v983, %v906
    %v989 = vmul.f32 %v983, %v908
    %v990 = vmul.f32 %v983, %v977
    %v991 = vmul.f32 %v983, %v979
    %v1000 = vcombine.low %v984, %v985
    %v1001 = vcombine.low %v986, %v987
    %v1003 = vunpack.c.l.s4 1983009808
    %v1004 = vunpack.c.0.s8 %v1003
    %v1005 = vlaneseq
    %v1006 = vshrl.u32 %v1005, 7
    %v1007 = vsub.s32 %v1004, %v1006
    %v1008 = vrot.slane %v1000, %v1007
    %v1010 = vunpack.c.l.s4 1983009808
    %v1011 = vunpack.c.0.s8 %v1010
    %v1012 = vlaneseq
    %v1013 = vshrl.u32 %v1012, 7
    %v1014 = vsub.s32 %v1011, %v1013
    %v1015 = vrot.slane %v1001, %v1014
    %v1016 = vcombine.low %v1008, %v1015
    %v1017 = vcombine.low %v988, %v989
    %v1018 = vcombine.low %v990, %v991
    %v1020 = vunpack.c.l.s4 1983009808
    %v1021 = vunpack.c.0.s8 %v1020
    %v1022 = vlaneseq
    %v1023 = vshrl.u32 %v1022, 7
    %v1024 = vsub.s32 %v1021, %v1023
    %v1025 = vrot.slane %v1017, %v1024
    %v1027 = vunpack.c.l.s4 1983009808
    %v1028 = vunpack.c.0.s8 %v1027
    %v1029 = vlaneseq
    %v1030 = vshrl.u32 %v1029, 7
    %v1031 = vsub.s32 %v1028, %v1030
    %v1032 = vrot.slane %v1018, %v1031
    %v1033 = vcombine.low %v1025, %v1032
    %v1036 = vsub.f32 %v324, %v1016
    %v1037 = vsub.f32 %v325, %v1033
    %v1038 = vstv %s981
    %v1039 = vmul.f32 %v1038, %v1036
    %v1040 = vmul.f32 %v1038, %v1037
    %s1041 = sld [smem:[#allocation2 + $0x382]]
    %s1042 = scalar_lea.vmem %s2, 112
    %v1043 = vld [vmem:[%s1042] sm:$0xff]
    %v1044 = vld [vmem:[%s1042 + $0x8] sm:$0xff]
    %v1045 = vstv %s1041
    %v1046 = vmul.f32 %v1045, %v1043
    %v1047 = vmul.f32 %v1045, %v1044
    %v1048 = vadd.f32 %v1039, %v1046
    %v1049 = vadd.f32 %v1040, %v1047
    %v1050 = vld [vmem:[%s3 + $0x6] sm:$0x1]
    %v1051 = vlaneseq
    %v1052 = vshrl.u32 %v1051, 7
    %v1053 = vsub.s32 0, %v1052
    %v1054 = vrot.slane %v1050, %v1053
    %v1057 = vcombine.high %v1048, %v1048
    %v1059 = vunpack.c.l.s4 1983009808
    %v1060 = vunpack.c.0.s8 %v1059
    %v1061 = vlaneseq
    %v1062 = vshrl.u32 %v1061, 7
    %v1063 = vsub.s32 %v1060, %v1062
    %v1064 = vrot.slane %v1048, %v1063
    %v1066 = vunpack.c.l.s4 1983009808
    %v1067 = vunpack.c.0.s8 %v1066
    %v1068 = vlaneseq
    %v1069 = vshrl.u32 %v1068, 7
    %v1070 = vsub.s32 %v1067, %v1069
    %v1071 = vrot.slane %v1057, %v1070
    %v1072 = vcombine.high %v1064, %v1064
    %v1073 = vcombine.high %v1071, %v1071
    %v1074 = vcombine.high %v1049, %v1049
    %v1076 = vunpack.c.l.s4 1983009808
    %v1077 = vunpack.c.0.s8 %v1076
    %v1078 = vlaneseq
    %v1079 = vshrl.u32 %v1078, 7
    %v1080 = vsub.s32 %v1077, %v1079
    %v1081 = vrot.slane %v1049, %v1080
    %v1083 = vunpack.c.l.s4 1983009808
    %v1084 = vunpack.c.0.s8 %v1083
    %v1085 = vlaneseq
    %v1086 = vshrl.u32 %v1085, 7
    %v1087 = vsub.s32 %v1084, %v1086
    %v1088 = vrot.slane %v1074, %v1087
    %v1089 = vcombine.high %v1081, %v1081
    %v1090 = vcombine.high %v1088, %v1088
    %1099 = vmatprep.subr.mxu0 0.0
    %1100 = vmatpush1.msra.mxu0 %v82
    %1101 = vmatprep.subr.mxu0 0.0
    %1102 = vmatpush1.msra.mxu0 %v81
    %1103 = vmatprep.subr.mxu0 0.0
    %1104 = vmatpush1.msra.mxu0 %v80
    %1105 = vmatprep.subr.mxu0 0.0
    %1106 = vmatpush1.msra.mxu0 %v79
    %1107 = vmatprep.subr.mxu0 0.0
    %1108 = vmatpush1.msra.mxu0 %v78
    %1109 = vmatprep.subr.mxu0 0.0
    %1110 = vmatpush1.msra.mxu0 %v77
    %1111 = vmatprep.subr.mxu0 0.0
    %1112 = vmatpush1.msra.mxu0 %v76
    %1113 = vmatprep.subr.mxu0 0.0
    %1114 = vmatpush1.msra.mxu0 %v75
    %1115 = vmatprep.subr.mxu0 0.0
    %1116 = vmatpush1.msra.mxu0 %v74
    %1117 = vmatprep.subr.mxu0 0.0
    %1118 = vmatpush1.msra.mxu0 %v73
    %1119 = vmatprep.subr.mxu0 0.0
    %1120 = vmatpush1.msra.mxu0 %v72
    %1121 = vmatprep.subr.mxu0 0.0
    %1122 = vmatpush1.msra.mxu0 %v71
    %1123 = vmatprep.subr.mxu0 0.0
    %1124 = vmatpush1.msra.mxu0 %v70
    %1125 = vmatprep.subr.mxu0 0.0
    %1126 = vmatpush1.msra.mxu0 %v69
    %1127 = vmatprep.subr.mxu0 0.0
    %1128 = vmatpush1.msra.mxu0 %v68
    %1129 = vmatprep.subr.mxu0 0.0
    %1130 = vmatpush1.msra.mxu0 %v67
    %1131 = vmatprep.subr.mxu0 0.0
    %1132 = vmatpush2.msra.mxu0 %v98
    %1133 = vmatprep.subr.mxu0 0.0
    %1134 = vmatpush2.msra.mxu0 %v97
    %1135 = vmatprep.subr.mxu0 0.0
    %1136 = vmatpush2.msra.mxu0 %v96
    %1137 = vmatprep.subr.mxu0 0.0
    %1138 = vmatpush2.msra.mxu0 %v95
    %1139 = vmatprep.subr.mxu0 0.0
    %1140 = vmatpush2.msra.mxu0 %v94
    %1141 = vmatprep.subr.mxu0 0.0
    %1142 = vmatpush2.msra.mxu0 %v93
    %1143 = vmatprep.subr.mxu0 0.0
    %1144 = vmatpush2.msra.mxu0 %v92
    %1145 = vmatprep.subr.mxu0 0.0
    %1146 = vmatpush2.msra.mxu0 %v91
    %1147 = vmatprep.subr.mxu0 0.0
    %1148 = vmatpush2.msra.mxu0 %v90
    %1149 = vmatprep.subr.mxu0 0.0
    %1150 = vmatpush2.msra.mxu0 %v89
    %1151 = vmatprep.subr.mxu0 0.0
    %1152 = vmatpush2.msra.mxu0 %v88
    %1153 = vmatprep.subr.mxu0 0.0
    %1154 = vmatpush2.msra.mxu0 %v87
    %1155 = vmatprep.subr.mxu0 0.0
    %1156 = vmatpush2.msra.mxu0 %v86
    %1157 = vmatprep.subr.mxu0 0.0
    %1158 = vmatpush2.msra.mxu0 %v85
    %1159 = vmatprep.subr.mxu0 0.0
    %1160 = vmatpush2.msra.mxu0 %v84
    %1161 = vmatprep.subr.mxu0 0.0
    %1162 = vmatpush2.msra.mxu0 %v83
    %1163 = vmatprep.mubr.f32.mxu0 %v1072
    %1164 = vmatmul.mubr.f32.gmra.mxu0 %v1064
    %v1165 = vpop.f32.mrf.mxu0
    %v1166 = vadd.f32 %v1054, %v1165
    %v1167 = vpop.f32.mrf.mxu0
    %1168 = vdwg.mxu0
    %1169 = vmatprep.subr.mxu0 0.0
    %1170 = vmatpush1.msra.mxu0 %v114
    %1171 = vmatprep.subr.mxu0 0.0
    %1172 = vmatpush1.msra.mxu0 %v113
    %1173 = vmatprep.subr.mxu0 0.0
    %1174 = vmatpush1.msra.mxu0 %v112
    %1175 = vmatprep.subr.mxu0 0.0
    %1176 = vmatpush1.msra.mxu0 %v111
    %1177 = vmatprep.subr.mxu0 0.0
    %1178 = vmatpush1.msra.mxu0 %v110
    %1179 = vmatprep.subr.mxu0 0.0
    %1180 = vmatpush1.msra.mxu0 %v109
    %1181 = vmatprep.subr.mxu0 0.0
    %1182 = vmatpush1.msra.mxu0 %v108
    %1183 = vmatprep.subr.mxu0 0.0
    %1184 = vmatpush1.msra.mxu0 %v107
    %1185 = vmatprep.subr.mxu0 0.0
    %1186 = vmatpush1.msra.mxu0 %v106
    %1187 = vmatprep.subr.mxu0 0.0
    %1188 = vmatpush1.msra.mxu0 %v105
    %1189 = vmatprep.subr.mxu0 0.0
    %1190 = vmatpush1.msra.mxu0 %v104
    %1191 = vmatprep.subr.mxu0 0.0
    %1192 = vmatpush1.msra.mxu0 %v103
    %1193 = vmatprep.subr.mxu0 0.0
    %1194 = vmatpush1.msra.mxu0 %v102
    %1195 = vmatprep.subr.mxu0 0.0
    %1196 = vmatpush1.msra.mxu0 %v101
    %1197 = vmatprep.subr.mxu0 0.0
    %1198 = vmatpush1.msra.mxu0 %v100
    %1199 = vmatprep.subr.mxu0 0.0
    %1200 = vmatpush1.msra.mxu0 %v99
    %1201 = vmatprep.subr.mxu0 0.0
    %1202 = vmatpush2.msra.mxu0 %v130
    %1203 = vmatprep.subr.mxu0 0.0
    %1204 = vmatpush2.msra.mxu0 %v129
    %1205 = vmatprep.subr.mxu0 0.0
    %1206 = vmatpush2.msra.mxu0 %v128
    %1207 = vmatprep.subr.mxu0 0.0
    %1208 = vmatpush2.msra.mxu0 %v127
    %1209 = vmatprep.subr.mxu0 0.0
    %1210 = vmatpush2.msra.mxu0 %v126
    %1211 = vmatprep.subr.mxu0 0.0
    %1212 = vmatpush2.msra.mxu0 %v125
    %1213 = vmatprep.subr.mxu0 0.0
    %1214 = vmatpush2.msra.mxu0 %v124
    %1215 = vmatprep.subr.mxu0 0.0
    %1216 = vmatpush2.msra.mxu0 %v123
    %1217 = vmatprep.subr.mxu0 0.0
    %1218 = vmatpush2.msra.mxu0 %v122
    %1219 = vmatprep.subr.mxu0 0.0
    %1220 = vmatpush2.msra.mxu0 %v121
    %1221 = vmatprep.subr.mxu0 0.0
    %1222 = vmatpush2.msra.mxu0 %v120
    %1223 = vmatprep.subr.mxu0 0.0
    %1224 = vmatpush2.msra.mxu0 %v119
    %1225 = vmatprep.subr.mxu0 0.0
    %1226 = vmatpush2.msra.mxu0 %v118
    %1227 = vmatprep.subr.mxu0 0.0
    %1228 = vmatpush2.msra.mxu0 %v117
    %1229 = vmatprep.subr.mxu0 0.0
    %1230 = vmatpush2.msra.mxu0 %v116
    %1231 = vmatprep.subr.mxu0 0.0
    %1232 = vmatpush2.msra.mxu0 %v115
    %1233 = vmatprep.mubr.f32.mxu0 %v1073
    %1234 = vmatmul.mubr.f32.gmra.mxu0 %v1071
    %v1235 = vpop.f32.mrf.mxu0
    %v1236 = vadd.f32 %v1166, %v1235
    %v1237 = vpop.f32.mrf.mxu0
    %1238 = vdwg.mxu0
    %1239 = vmatprep.subr.mxu0 0.0
    %1240 = vmatpush1.msra.mxu0 %v146
    %1241 = vmatprep.subr.mxu0 0.0
    %1242 = vmatpush1.msra.mxu0 %v145
    %1243 = vmatprep.subr.mxu0 0.0
    %1244 = vmatpush1.msra.mxu0 %v144
    %1245 = vmatprep.subr.mxu0 0.0
    %1246 = vmatpush1.msra.mxu0 %v143
    %1247 = vmatprep.subr.mxu0 0.0
    %1248 = vmatpush1.msra.mxu0 %v142
    %1249 = vmatprep.subr.mxu0 0.0
    %1250 = vmatpush1.msra.mxu0 %v141
    %1251 = vmatprep.subr.mxu0 0.0
    %1252 = vmatpush1.msra.mxu0 %v140
    %1253 = vmatprep.subr.mxu0 0.0
    %1254 = vmatpush1.msra.mxu0 %v139
    %1255 = vmatprep.subr.mxu0 0.0
    %1256 = vmatpush1.msra.mxu0 %v138
    %1257 = vmatprep.subr.mxu0 0.0
    %1258 = vmatpush1.msra.mxu0 %v137
    %1259 = vmatprep.subr.mxu0 0.0
    %1260 = vmatpush1.msra.mxu0 %v136
    %1261 = vmatprep.subr.mxu0 0.0
    %1262 = vmatpush1.msra.mxu0 %v135
    %1263 = vmatprep.subr.mxu0 0.0
    %1264 = vmatpush1.msra.mxu0 %v134
    %1265 = vmatprep.subr.mxu0 0.0
    %1266 = vmatpush1.msra.mxu0 %v133
    %1267 = vmatprep.subr.mxu0 0.0
    %1268 = vmatpush1.msra.mxu0 %v132
    %1269 = vmatprep.subr.mxu0 0.0
    %1270 = vmatpush1.msra.mxu0 %v131
    %1271 = vmatprep.subr.mxu0 0.0
    %1272 = vmatpush2.msra.mxu0 %v162
    %1273 = vmatprep.subr.mxu0 0.0
    %1274 = vmatpush2.msra.mxu0 %v161
    %1275 = vmatprep.subr.mxu0 0.0
    %1276 = vmatpush2.msra.mxu0 %v160
    %1277 = vmatprep.subr.mxu0 0.0
    %1278 = vmatpush2.msra.mxu0 %v159
    %1279 = vmatprep.subr.mxu0 0.0
    %1280 = vmatpush2.msra.mxu0 %v158
    %1281 = vmatprep.subr.mxu0 0.0
    %1282 = vmatpush2.msra.mxu0 %v157
    %1283 = vmatprep.subr.mxu0 0.0
    %1284 = vmatpush2.msra.mxu0 %v156
    %1285 = vmatprep.subr.mxu0 0.0
    %1286 = vmatpush2.msra.mxu0 %v155
    %1287 = vmatprep.subr.mxu0 0.0
    %1288 = vmatpush2.msra.mxu0 %v154
    %1289 = vmatprep.subr.mxu0 0.0
    %1290 = vmatpush2.msra.mxu0 %v153
    %1291 = vmatprep.subr.mxu0 0.0
    %1292 = vmatpush2.msra.mxu0 %v152
    %1293 = vmatprep.subr.mxu0 0.0
    %1294 = vmatpush2.msra.mxu0 %v151
    %1295 = vmatprep.subr.mxu0 0.0
    %1296 = vmatpush2.msra.mxu0 %v150
    %1297 = vmatprep.subr.mxu0 0.0
    %1298 = vmatpush2.msra.mxu0 %v149
    %1299 = vmatprep.subr.mxu0 0.0
    %1300 = vmatpush2.msra.mxu0 %v148
    %1301 = vmatprep.subr.mxu0 0.0
    %1302 = vmatpush2.msra.mxu0 %v147
    %1303 = vmatprep.mubr.f32.mxu0 %v1089
    %1304 = vmatmul.mubr.f32.gmra.mxu0 %v1081
    %v1305 = vpop.f32.mrf.mxu0
    %v1306 = vadd.f32 %v1236, %v1305
    %v1307 = vpop.f32.mrf.mxu0
    %1308 = vdwg.mxu0
    %1309 = vmatprep.subr.mxu0 0.0
    %1310 = vmatpush1.msra.mxu0 %v178
    %1311 = vmatprep.subr.mxu0 0.0
    %1312 = vmatpush1.msra.mxu0 %v177
    %1313 = vmatprep.subr.mxu0 0.0
    %1314 = vmatpush1.msra.mxu0 %v176
    %1315 = vmatprep.subr.mxu0 0.0
    %1316 = vmatpush1.msra.mxu0 %v175
    %1317 = vmatprep.subr.mxu0 0.0
    %1318 = vmatpush1.msra.mxu0 %v174
    %1319 = vmatprep.subr.mxu0 0.0
    %1320 = vmatpush1.msra.mxu0 %v173
    %1321 = vmatprep.subr.mxu0 0.0
    %1322 = vmatpush1.msra.mxu0 %v172
    %1323 = vmatprep.subr.mxu0 0.0
    %1324 = vmatpush1.msra.mxu0 %v171
    %1325 = vmatprep.subr.mxu0 0.0
    %1326 = vmatpush1.msra.mxu0 %v170
    %1327 = vmatprep.subr.mxu0 0.0
    %1328 = vmatpush1.msra.mxu0 %v169
    %1329 = vmatprep.subr.mxu0 0.0
    %1330 = vmatpush1.msra.mxu0 %v168
    %1331 = vmatprep.subr.mxu0 0.0
    %1332 = vmatpush1.msra.mxu0 %v167
    %1333 = vmatprep.subr.mxu0 0.0
    %1334 = vmatpush1.msra.mxu0 %v166
    %1335 = vmatprep.subr.mxu0 0.0
    %1336 = vmatpush1.msra.mxu0 %v165
    %1337 = vmatprep.subr.mxu0 0.0
    %1338 = vmatpush1.msra.mxu0 %v164
    %1339 = vmatprep.subr.mxu0 0.0
    %1340 = vmatpush1.msra.mxu0 %v163
    %1341 = vmatprep.subr.mxu0 0.0
    %1342 = vmatpush2.msra.mxu0 %v194
    %1343 = vmatprep.subr.mxu0 0.0
    %1344 = vmatpush2.msra.mxu0 %v193
    %1345 = vmatprep.subr.mxu0 0.0
    %1346 = vmatpush2.msra.mxu0 %v192
    %1347 = vmatprep.subr.mxu0 0.0
    %1348 = vmatpush2.msra.mxu0 %v191
    %1349 = vmatprep.subr.mxu0 0.0
    %1350 = vmatpush2.msra.mxu0 %v190
    %1351 = vmatprep.subr.mxu0 0.0
    %1352 = vmatpush2.msra.mxu0 %v189
    %1353 = vmatprep.subr.mxu0 0.0
    %1354 = vmatpush2.msra.mxu0 %v188
    %1355 = vmatprep.subr.mxu0 0.0
    %1356 = vmatpush2.msra.mxu0 %v187
    %1357 = vmatprep.subr.mxu0 0.0
    %1358 = vmatpush2.msra.mxu0 %v186
    %1359 = vmatprep.subr.mxu0 0.0
    %1360 = vmatpush2.msra.mxu0 %v185
    %1361 = vmatprep.subr.mxu0 0.0
    %1362 = vmatpush2.msra.mxu0 %v184
    %1363 = vmatprep.subr.mxu0 0.0
    %1364 = vmatpush2.msra.mxu0 %v183
    %1365 = vmatprep.subr.mxu0 0.0
    %1366 = vmatpush2.msra.mxu0 %v182
    %1367 = vmatprep.subr.mxu0 0.0
    %1368 = vmatpush2.msra.mxu0 %v181
    %1369 = vmatprep.subr.mxu0 0.0
    %1370 = vmatpush2.msra.mxu0 %v180
    %1371 = vmatprep.subr.mxu0 0.0
    %1372 = vmatpush2.msra.mxu0 %v179
    %1373 = vmatprep.mubr.f32.mxu0 %v1090
    %1374 = vmatmul.mubr.f32.gmra.mxu0 %v1088
    %v1375 = vpop.f32.mrf.mxu0
    %v1376 = vadd.f32 %v1306, %v1375
    %v1377 = vpop.f32.mrf.mxu0
    %1378 = vdwg.mxu0
    %v1379 = vmax.f32 %v1376, 0.0
    %1380 = vmatprep.subr.mxu0 %v316
    %1381 = vmatpush1.msra.mxu0 %v315
    %1382 = vmatprep.subr.mxu0 %v308
    %1383 = vmatpush1.msra.mxu0 %v307
    %1384 = vmatprep.subr.mxu0 %v300
    %1385 = vmatpush1.msra.mxu0 %v299
    %1386 = vmatprep.subr.mxu0 %v292
    %1387 = vmatpush1.msra.mxu0 %v291
    %1388 = vmatprep.subr.mxu0 %v284
    %1389 = vmatpush1.msra.mxu0 %v283
    %1390 = vmatprep.subr.mxu0 %v276
    %1391 = vmatpush1.msra.mxu0 %v275
    %1392 = vmatprep.subr.mxu0 %v268
    %1393 = vmatpush1.msra.mxu0 %v267
    %1394 = vmatprep.subr.mxu0 %v260
    %1395 = vmatpush1.msra.mxu0 %v259
    %1396 = vmatprep.subr.mxu0 %v252
    %1397 = vmatpush1.msra.mxu0 %v251
    %1398 = vmatprep.subr.mxu0 %v244
    %1399 = vmatpush1.msra.mxu0 %v243
    %1400 = vmatprep.subr.mxu0 %v236
    %1401 = vmatpush1.msra.mxu0 %v235
    %1402 = vmatprep.subr.mxu0 %v228
    %1403 = vmatpush1.msra.mxu0 %v227
    %1404 = vmatprep.subr.mxu0 %v220
    %1405 = vmatpush1.msra.mxu0 %v219
    %1406 = vmatprep.subr.mxu0 %v212
    %1407 = vmatpush1.msra.mxu0 %v211
    %1408 = vmatprep.subr.mxu0 %v204
    %1409 = vmatpush1.msra.mxu0 %v203
    %1410 = vmatprep.subr.mxu0 %v196
    %1411 = vmatpush1.msra.mxu0 %v195
    %1412 = vmatprep.subr.mxu0 0.0
    %1413 = vmatpush2.msra.mxu0 0.0
    %1414 = vmatprep.subr.mxu0 0.0
    %1415 = vmatpush2.msra.mxu0 0.0
    %1416 = vmatprep.subr.mxu0 0.0
    %1417 = vmatpush2.msra.mxu0 0.0
    %1418 = vmatprep.subr.mxu0 0.0
    %1419 = vmatpush2.msra.mxu0 0.0
    %1420 = vmatprep.subr.mxu0 0.0
    %1421 = vmatpush2.msra.mxu0 0.0
    %1422 = vmatprep.subr.mxu0 0.0
    %1423 = vmatpush2.msra.mxu0 0.0
    %1424 = vmatprep.subr.mxu0 0.0
    %1425 = vmatpush2.msra.mxu0 0.0
    %1426 = vmatprep.subr.mxu0 0.0
    %1427 = vmatpush2.msra.mxu0 0.0
    %1428 = vmatprep.subr.mxu0 0.0
    %1429 = vmatpush2.msra.mxu0 0.0
    %1430 = vmatprep.subr.mxu0 0.0
    %1431 = vmatpush2.msra.mxu0 0.0
    %1432 = vmatprep.subr.mxu0 0.0
    %1433 = vmatpush2.msra.mxu0 0.0
    %1434 = vmatprep.subr.mxu0 0.0
    %1435 = vmatpush2.msra.mxu0 0.0
    %1436 = vmatprep.subr.mxu0 0.0
    %1437 = vmatpush2.msra.mxu0 0.0
    %1438 = vmatprep.subr.mxu0 0.0
    %1439 = vmatpush2.msra.mxu0 0.0
    %1440 = vmatprep.subr.mxu0 0.0
    %1441 = vmatpush2.msra.mxu0 0.0
    %1442 = vmatprep.subr.mxu0 0.0
    %1443 = vmatpush2.msra.mxu0 0.0
    %1444 = vmatprep.mubr.f32.mxu0 0.0
    %1445 = vmatmul.mubr.f32.gmra.mxu0 %v1379
    %v1446 = vpop.f32.mrf.mxu0
    %v1447 = vadd.f32 %v660, %v1446
    %v1448 = vpop.f32.mrf.mxu0
    %v1449 = vadd.f32 %v664, %v1448
    %1450 = vdwg.mxu0
    %1451 = vmatprep.subr.mxu0 %v318
    %1452 = vmatpush1.msra.mxu0 %v317
    %1453 = vmatprep.subr.mxu0 %v310
    %1454 = vmatpush1.msra.mxu0 %v309
    %1455 = vmatprep.subr.mxu0 %v302
    %1456 = vmatpush1.msra.mxu0 %v301
    %1457 = vmatprep.subr.mxu0 %v294
    %1458 = vmatpush1.msra.mxu0 %v293
    %1459 = vmatprep.subr.mxu0 %v286
    %1460 = vmatpush1.msra.mxu0 %v285
    %1461 = vmatprep.subr.mxu0 %v278
    %1462 = vmatpush1.msra.mxu0 %v277
    %1463 = vmatprep.subr.mxu0 %v270
    %1464 = vmatpush1.msra.mxu0 %v269
    %1465 = vmatprep.subr.mxu0 %v262
    %1466 = vmatpush1.msra.mxu0 %v261
    %1467 = vmatprep.subr.mxu0 %v254
    %1468 = vmatpush1.msra.mxu0 %v253
    %1469 = vmatprep.subr.mxu0 %v246
    %1470 = vmatpush1.msra.mxu0 %v245
    %1471 = vmatprep.subr.mxu0 %v238
    %1472 = vmatpush1.msra.mxu0 %v237
    %1473 = vmatprep.subr.mxu0 %v230
    %1474 = vmatpush1.msra.mxu0 %v229
    %1475 = vmatprep.subr.mxu0 %v222
    %1476 = vmatpush1.msra.mxu0 %v221
    %1477 = vmatprep.subr.mxu0 %v214
    %1478 = vmatpush1.msra.mxu0 %v213
    %1479 = vmatprep.subr.mxu0 %v206
    %1480 = vmatpush1.msra.mxu0 %v205
    %1481 = vmatprep.subr.mxu0 %v198
    %1482 = vmatpush1.msra.mxu0 %v197
    %1483 = vmatprep.subr.mxu0 0.0
    %1484 = vmatpush2.msra.mxu0 0.0
    %1485 = vmatprep.subr.mxu0 0.0
    %1486 = vmatpush2.msra.mxu0 0.0
    %1487 = vmatprep.subr.mxu0 0.0
    %1488 = vmatpush2.msra.mxu0 0.0
    %1489 = vmatprep.subr.mxu0 0.0
    %1490 = vmatpush2.msra.mxu0 0.0
    %1491 = vmatprep.subr.mxu0 0.0
    %1492 = vmatpush2.msra.mxu0 0.0
    %1493 = vmatprep.subr.mxu0 0.0
    %1494 = vmatpush2.msra.mxu0 0.0
    %1495 = vmatprep.subr.mxu0 0.0
    %1496 = vmatpush2.msra.mxu0 0.0
    %1497 = vmatprep.subr.mxu0 0.0
    %1498 = vmatpush2.msra.mxu0 0.0
    %1499 = vmatprep.subr.mxu0 0.0
    %1500 = vmatpush2.msra.mxu0 0.0
    %1501 = vmatprep.subr.mxu0 0.0
    %1502 = vmatpush2.msra.mxu0 0.0
    %1503 = vmatprep.subr.mxu0 0.0
    %1504 = vmatpush2.msra.mxu0 0.0
    %1505 = vmatprep.subr.mxu0 0.0
    %1506 = vmatpush2.msra.mxu0 0.0
    %1507 = vmatprep.subr.mxu0 0.0
    %1508 = vmatpush2.msra.mxu0 0.0
    %1509 = vmatprep.subr.mxu0 0.0
    %1510 = vmatpush2.msra.mxu0 0.0
    %1511 = vmatprep.subr.mxu0 0.0
    %1512 = vmatpush2.msra.mxu0 0.0
    %1513 = vmatprep.subr.mxu0 0.0
    %1514 = vmatpush2.msra.mxu0 0.0
    %1515 = vmatprep.mubr.f32.mxu0 0.0
    %1516 = vmatmul.mubr.f32.gmra.mxu0 %v1379
    %v1517 = vpop.f32.mrf.mxu0
    %v1518 = vadd.f32 %v668, %v1517
    %v1519 = vpop.f32.mrf.mxu0
    %v1520 = vadd.f32 %v672, %v1519
    %1521 = vdwg.mxu0
    %1522 = vmatprep.subr.mxu0 %v320
    %1523 = vmatpush1.msra.mxu0 %v319
    %1524 = vmatprep.subr.mxu0 %v312
    %1525 = vmatpush1.msra.mxu0 %v311
    %1526 = vmatprep.subr.mxu0 %v304
    %1527 = vmatpush1.msra.mxu0 %v303
    %1528 = vmatprep.subr.mxu0 %v296
    %1529 = vmatpush1.msra.mxu0 %v295
    %1530 = vmatprep.subr.mxu0 %v288
    %1531 = vmatpush1.msra.mxu0 %v287
    %1532 = vmatprep.subr.mxu0 %v280
    %1533 = vmatpush1.msra.mxu0 %v279
    %1534 = vmatprep.subr.mxu0 %v272
    %1535 = vmatpush1.msra.mxu0 %v271
    %1536 = vmatprep.subr.mxu0 %v264
    %1537 = vmatpush1.msra.mxu0 %v263
    %1538 = vmatprep.subr.mxu0 %v256
    %1539 = vmatpush1.msra.mxu0 %v255
    %1540 = vmatprep.subr.mxu0 %v248
    %1541 = vmatpush1.msra.mxu0 %v247
    %1542 = vmatprep.subr.mxu0 %v240
    %1543 = vmatpush1.msra.mxu0 %v239
    %1544 = vmatprep.subr.mxu0 %v232
    %1545 = vmatpush1.msra.mxu0 %v231
    %1546 = vmatprep.subr.mxu0 %v224
    %1547 = vmatpush1.msra.mxu0 %v223
    %1548 = vmatprep.subr.mxu0 %v216
    %1549 = vmatpush1.msra.mxu0 %v215
    %1550 = vmatprep.subr.mxu0 %v208
    %1551 = vmatpush1.msra.mxu0 %v207
    %1552 = vmatprep.subr.mxu0 %v200
    %1553 = vmatpush1.msra.mxu0 %v199
    %1554 = vmatprep.subr.mxu0 0.0
    %1555 = vmatpush2.msra.mxu0 0.0
    %1556 = vmatprep.subr.mxu0 0.0
    %1557 = vmatpush2.msra.mxu0 0.0
    %1558 = vmatprep.subr.mxu0 0.0
    %1559 = vmatpush2.msra.mxu0 0.0
    %1560 = vmatprep.subr.mxu0 0.0
    %1561 = vmatpush2.msra.mxu0 0.0
    %1562 = vmatprep.subr.mxu0 0.0
    %1563 = vmatpush2.msra.mxu0 0.0
    %1564 = vmatprep.subr.mxu0 0.0
    %1565 = vmatpush2.msra.mxu0 0.0
    %1566 = vmatprep.subr.mxu0 0.0
    %1567 = vmatpush2.msra.mxu0 0.0
    %1568 = vmatprep.subr.mxu0 0.0
    %1569 = vmatpush2.msra.mxu0 0.0
    %1570 = vmatprep.subr.mxu0 0.0
    %1571 = vmatpush2.msra.mxu0 0.0
    %1572 = vmatprep.subr.mxu0 0.0
    %1573 = vmatpush2.msra.mxu0 0.0
    %1574 = vmatprep.subr.mxu0 0.0
    %1575 = vmatpush2.msra.mxu0 0.0
    %1576 = vmatprep.subr.mxu0 0.0
    %1577 = vmatpush2.msra.mxu0 0.0
    %1578 = vmatprep.subr.mxu0 0.0
    %1579 = vmatpush2.msra.mxu0 0.0
    %1580 = vmatprep.subr.mxu0 0.0
    %1581 = vmatpush2.msra.mxu0 0.0
    %1582 = vmatprep.subr.mxu0 0.0
    %1583 = vmatpush2.msra.mxu0 0.0
    %1584 = vmatprep.subr.mxu0 0.0
    %1585 = vmatpush2.msra.mxu0 0.0
    %1586 = vmatprep.mubr.f32.mxu0 0.0
    %1587 = vmatmul.mubr.f32.gmra.mxu0 %v1379
    %v1588 = vpop.f32.mrf.mxu0
    %v1589 = vadd.f32 %v676, %v1588
    %v1590 = vpop.f32.mrf.mxu0
    %v1591 = vadd.f32 %v680, %v1590
    %1592 = vdwg.mxu0
    %1593 = vmatprep.subr.mxu0 %v322
    %1594 = vmatpush1.msra.mxu0 %v321
    %1595 = vmatprep.subr.mxu0 %v314
    %1596 = vmatpush1.msra.mxu0 %v313
    %1597 = vmatprep.subr.mxu0 %v306
    %1598 = vmatpush1.msra.mxu0 %v305
    %1599 = vmatprep.subr.mxu0 %v298
    %1600 = vmatpush1.msra.mxu0 %v297
    %1601 = vmatprep.subr.mxu0 %v290
    %1602 = vmatpush1.msra.mxu0 %v289
    %1603 = vmatprep.subr.mxu0 %v282
    %1604 = vmatpush1.msra.mxu0 %v281
    %1605 = vmatprep.subr.mxu0 %v274
    %1606 = vmatpush1.msra.mxu0 %v273
    %1607 = vmatprep.subr.mxu0 %v266
    %1608 = vmatpush1.msra.mxu0 %v265
    %1609 = vmatprep.subr.mxu0 %v258
    %1610 = vmatpush1.msra.mxu0 %v257
    %1611 = vmatprep.subr.mxu0 %v250
    %1612 = vmatpush1.msra.mxu0 %v249
    %1613 = vmatprep.subr.mxu0 %v242
    %1614 = vmatpush1.msra.mxu0 %v241
    %1615 = vmatprep.subr.mxu0 %v234
    %1616 = vmatpush1.msra.mxu0 %v233
    %1617 = vmatprep.subr.mxu0 %v226
    %1618 = vmatpush1.msra.mxu0 %v225
    %1619 = vmatprep.subr.mxu0 %v218
    %1620 = vmatpush1.msra.mxu0 %v217
    %1621 = vmatprep.subr.mxu0 %v210
    %1622 = vmatpush1.msra.mxu0 %v209
    %1623 = vmatprep.subr.mxu0 %v202
    %1624 = vmatpush1.msra.mxu0 %v201
    %1625 = vmatprep.subr.mxu0 0.0
    %1626 = vmatpush2.msra.mxu0 0.0
    %1627 = vmatprep.subr.mxu0 0.0
    %1628 = vmatpush2.msra.mxu0 0.0
    %1629 = vmatprep.subr.mxu0 0.0
    %1630 = vmatpush2.msra.mxu0 0.0
    %1631 = vmatprep.subr.mxu0 0.0
    %1632 = vmatpush2.msra.mxu0 0.0
    %1633 = vmatprep.subr.mxu0 0.0
    %1634 = vmatpush2.msra.mxu0 0.0
    %1635 = vmatprep.subr.mxu0 0.0
    %1636 = vmatpush2.msra.mxu0 0.0
    %1637 = vmatprep.subr.mxu0 0.0
    %1638 = vmatpush2.msra.mxu0 0.0
    %1639 = vmatprep.subr.mxu0 0.0
    %1640 = vmatpush2.msra.mxu0 0.0
    %1641 = vmatprep.subr.mxu0 0.0
    %1642 = vmatpush2.msra.mxu0 0.0
    %1643 = vmatprep.subr.mxu0 0.0
    %1644 = vmatpush2.msra.mxu0 0.0
    %1645 = vmatprep.subr.mxu0 0.0
    %1646 = vmatpush2.msra.mxu0 0.0
    %1647 = vmatprep.subr.mxu0 0.0
    %1648 = vmatpush2.msra.mxu0 0.0
    %1649 = vmatprep.subr.mxu0 0.0
    %1650 = vmatpush2.msra.mxu0 0.0
    %1651 = vmatprep.subr.mxu0 0.0
    %1652 = vmatpush2.msra.mxu0 0.0
    %1653 = vmatprep.subr.mxu0 0.0
    %1654 = vmatpush2.msra.mxu0 0.0
    %1655 = vmatprep.subr.mxu0 0.0
    %1656 = vmatpush2.msra.mxu0 0.0
    %1657 = vmatprep.mubr.f32.mxu0 0.0
    %1658 = vmatmul.mubr.f32.gmra.mxu0 %v1379
    %v1659 = vpop.f32.mrf.mxu0
    %v1660 = vadd.f32 %v684, %v1659
    %v1661 = vpop.f32.mrf.mxu0
    %v1662 = vadd.f32 %v688, %v1661
    %1663 = vdwg.mxu0
    %s1664 = sld [smem:[#allocation2 + $0x300]]
    %s1665 = sld [smem:[#allocation2 + $0x301]]
    %v1666 = vstv %s1665
    %v1667 = vmul.f32 %v1666, %v1447
    %v1668 = vmul.f32 %v1666, %v1449
    %v1669 = vmul.f32 %v1666, %v1518
    %v1670 = vmul.f32 %v1666, %v1520
    %v1671 = vmul.f32 %v1666, %v1589
    %v1672 = vmul.f32 %v1666, %v1591
    %v1673 = vmul.f32 %v1666, %v1660
    %v1674 = vmul.f32 %v1666, %v1662
    %v1683 = vcombine.low %v1667, %v1668
    %v1684 = vcombine.low %v1669, %v1670
    %v1686 = vunpack.c.l.s4 1983009808
    %v1687 = vunpack.c.0.s8 %v1686
    %v1688 = vlaneseq
    %v1689 = vshrl.u32 %v1688, 7
    %v1690 = vsub.s32 %v1687, %v1689
    %v1691 = vrot.slane %v1683, %v1690
    %v1693 = vunpack.c.l.s4 1983009808
    %v1694 = vunpack.c.0.s8 %v1693
    %v1695 = vlaneseq
    %v1696 = vshrl.u32 %v1695, 7
    %v1697 = vsub.s32 %v1694, %v1696
    %v1698 = vrot.slane %v1684, %v1697
    %v1699 = vcombine.low %v1691, %v1698
    %v1700 = vcombine.low %v1671, %v1672
    %v1701 = vcombine.low %v1673, %v1674
    %v1703 = vunpack.c.l.s4 1983009808
    %v1704 = vunpack.c.0.s8 %v1703
    %v1705 = vlaneseq
    %v1706 = vshrl.u32 %v1705, 7
    %v1707 = vsub.s32 %v1704, %v1706
    %v1708 = vrot.slane %v1700, %v1707
    %v1710 = vunpack.c.l.s4 1983009808
    %v1711 = vunpack.c.0.s8 %v1710
    %v1712 = vlaneseq
    %v1713 = vshrl.u32 %v1712, 7
    %v1714 = vsub.s32 %v1711, %v1713
    %v1715 = vrot.slane %v1701, %v1714
    %v1716 = vcombine.low %v1708, %v1715
    %v1719 = vsub.f32 %v1048, %v1699
    %v1720 = vsub.f32 %v1049, %v1716
    %v1721 = vstv %s1664
    %v1722 = vmul.f32 %v1721, %v1719
    %v1723 = vmul.f32 %v1721, %v1720
    %s1724 = sld [smem:[#allocation2 + $0x302]]
    %s1725 = scalar_lea.vmem %s2, 96
    %v1726 = vld [vmem:[%s1725] sm:$0xff]
    %v1727 = vld [vmem:[%s1725 + $0x8] sm:$0xff]
    %v1728 = vstv %s1724
    %v1729 = vmul.f32 %v1728, %v1726
    %v1730 = vmul.f32 %v1728, %v1727
    %v1731 = vadd.f32 %v1722, %v1729
    %v1732 = vadd.f32 %v1723, %v1730
    %v1733 = vld [vmem:[%s3 + $0x5] sm:$0x1]
    %v1734 = vlaneseq
    %v1735 = vshrl.u32 %v1734, 7
    %v1736 = vsub.s32 0, %v1735
    %v1737 = vrot.slane %v1733, %v1736
    %v1740 = vcombine.high %v1731, %v1731
    %v1742 = vunpack.c.l.s4 1983009808
    %v1743 = vunpack.c.0.s8 %v1742
    %v1744 = vlaneseq
    %v1745 = vshrl.u32 %v1744, 7
    %v1746 = vsub.s32 %v1743, %v1745
    %v1747 = vrot.slane %v1731, %v1746
    %v1749 = vunpack.c.l.s4 1983009808
    %v1750 = vunpack.c.0.s8 %v1749
    %v1751 = vlaneseq
    %v1752 = vshrl.u32 %v1751, 7
    %v1753 = vsub.s32 %v1750, %v1752
    %v1754 = vrot.slane %v1740, %v1753
    %v1755 = vcombine.high %v1747, %v1747
    %v1756 = vcombine.high %v1754, %v1754
    %v1757 = vcombine.high %v1732, %v1732
    %v1759 = vunpack.c.l.s4 1983009808
    %v1760 = vunpack.c.0.s8 %v1759
    %v1761 = vlaneseq
    %v1762 = vshrl.u32 %v1761, 7
    %v1763 = vsub.s32 %v1760, %v1762
    %v1764 = vrot.slane %v1732, %v1763
    %v1766 = vunpack.c.l.s4 1983009808
    %v1767 = vunpack.c.0.s8 %v1766
    %v1768 = vlaneseq
    %v1769 = vshrl.u32 %v1768, 7
    %v1770 = vsub.s32 %v1767, %v1769
    %v1771 = vrot.slane %v1757, %v1770
    %v1772 = vcombine.high %v1764, %v1764
    %v1773 = vcombine.high %v1771, %v1771
    %1782 = vmatprep.subr.mxu0 0.0
    %1783 = vmatpush1.msra.mxu0 %v82
    %1784 = vmatprep.subr.mxu0 0.0
    %1785 = vmatpush1.msra.mxu0 %v81
    %1786 = vmatprep.subr.mxu0 0.0
    %1787 = vmatpush1.msra.mxu0 %v80
    %1788 = vmatprep.subr.mxu0 0.0
    %1789 = vmatpush1.msra.mxu0 %v79
    %1790 = vmatprep.subr.mxu0 0.0
    %1791 = vmatpush1.msra.mxu0 %v78
    %1792 = vmatprep.subr.mxu0 0.0
    %1793 = vmatpush1.msra.mxu0 %v77
    %1794 = vmatprep.subr.mxu0 0.0
    %1795 = vmatpush1.msra.mxu0 %v76
    %1796 = vmatprep.subr.mxu0 0.0
    %1797 = vmatpush1.msra.mxu0 %v75
    %1798 = vmatprep.subr.mxu0 0.0
    %1799 = vmatpush1.msra.mxu0 %v74
    %1800 = vmatprep.subr.mxu0 0.0
    %1801 = vmatpush1.msra.mxu0 %v73
    %1802 = vmatprep.subr.mxu0 0.0
    %1803 = vmatpush1.msra.mxu0 %v72
    %1804 = vmatprep.subr.mxu0 0.0
    %1805 = vmatpush1.msra.mxu0 %v71
    %1806 = vmatprep.subr.mxu0 0.0
    %1807 = vmatpush1.msra.mxu0 %v70
    %1808 = vmatprep.subr.mxu0 0.0
    %1809 = vmatpush1.msra.mxu0 %v69
    %1810 = vmatprep.subr.mxu0 0.0
    %1811 = vmatpush1.msra.mxu0 %v68
    %1812 = vmatprep.subr.mxu0 0.0
    %1813 = vmatpush1.msra.mxu0 %v67
    %1814 = vmatprep.subr.mxu0 0.0
    %1815 = vmatpush2.msra.mxu0 %v98
    %1816 = vmatprep.subr.mxu0 0.0
    %1817 = vmatpush2.msra.mxu0 %v97
    %1818 = vmatprep.subr.mxu0 0.0
    %1819 = vmatpush2.msra.mxu0 %v96
    %1820 = vmatprep.subr.mxu0 0.0
    %1821 = vmatpush2.msra.mxu0 %v95
    %1822 = vmatprep.subr.mxu0 0.0
    %1823 = vmatpush2.msra.mxu0 %v94
    %1824 = vmatprep.subr.mxu0 0.0
    %1825 = vmatpush2.msra.mxu0 %v93
    %1826 = vmatprep.subr.mxu0 0.0
    %1827 = vmatpush2.msra.mxu0 %v92
    %1828 = vmatprep.subr.mxu0 0.0
    %1829 = vmatpush2.msra.mxu0 %v91
    %1830 = vmatprep.subr.mxu0 0.0
    %1831 = vmatpush2.msra.mxu0 %v90
    %1832 = vmatprep.subr.mxu0 0.0
    %1833 = vmatpush2.msra.mxu0 %v89
    %1834 = vmatprep.subr.mxu0 0.0
    %1835 = vmatpush2.msra.mxu0 %v88
    %1836 = vmatprep.subr.mxu0 0.0
    %1837 = vmatpush2.msra.mxu0 %v87
    %1838 = vmatprep.subr.mxu0 0.0
    %1839 = vmatpush2.msra.mxu0 %v86
    %1840 = vmatprep.subr.mxu0 0.0
    %1841 = vmatpush2.msra.mxu0 %v85
    %1842 = vmatprep.subr.mxu0 0.0
    %1843 = vmatpush2.msra.mxu0 %v84
    %1844 = vmatprep.subr.mxu0 0.0
    %1845 = vmatpush2.msra.mxu0 %v83
    %1846 = vmatprep.mubr.f32.mxu0 %v1755
    %1847 = vmatmul.mubr.f32.gmra.mxu0 %v1747
    %v1848 = vpop.f32.mrf.mxu0
    %v1849 = vadd.f32 %v1737, %v1848
    %v1850 = vpop.f32.mrf.mxu0
    %1851 = vdwg.mxu0
    %1852 = vmatprep.subr.mxu0 0.0
    %1853 = vmatpush1.msra.mxu0 %v114
    %1854 = vmatprep.subr.mxu0 0.0
    %1855 = vmatpush1.msra.mxu0 %v113
    %1856 = vmatprep.subr.mxu0 0.0
    %1857 = vmatpush1.msra.mxu0 %v112
    %1858 = vmatprep.subr.mxu0 0.0
    %1859 = vmatpush1.msra.mxu0 %v111
    %1860 = vmatprep.subr.mxu0 0.0
    %1861 = vmatpush1.msra.mxu0 %v110
    %1862 = vmatprep.subr.mxu0 0.0
    %1863 = vmatpush1.msra.mxu0 %v109
    %1864 = vmatprep.subr.mxu0 0.0
    %1865 = vmatpush1.msra.mxu0 %v108
    %1866 = vmatprep.subr.mxu0 0.0
    %1867 = vmatpush1.msra.mxu0 %v107
    %1868 = vmatprep.subr.mxu0 0.0
    %1869 = vmatpush1.msra.mxu0 %v106
    %1870 = vmatprep.subr.mxu0 0.0
    %1871 = vmatpush1.msra.mxu0 %v105
    %1872 = vmatprep.subr.mxu0 0.0
    %1873 = vmatpush1.msra.mxu0 %v104
    %1874 = vmatprep.subr.mxu0 0.0
    %1875 = vmatpush1.msra.mxu0 %v103
    %1876 = vmatprep.subr.mxu0 0.0
    %1877 = vmatpush1.msra.mxu0 %v102
    %1878 = vmatprep.subr.mxu0 0.0
    %1879 = vmatpush1.msra.mxu0 %v101
    %1880 = vmatprep.subr.mxu0 0.0
    %1881 = vmatpush1.msra.mxu0 %v100
    %1882 = vmatprep.subr.mxu0 0.0
    %1883 = vmatpush1.msra.mxu0 %v99
    %1884 = vmatprep.subr.mxu0 0.0
    %1885 = vmatpush2.msra.mxu0 %v130
    %1886 = vmatprep.subr.mxu0 0.0
    %1887 = vmatpush2.msra.mxu0 %v129
    %1888 = vmatprep.subr.mxu0 0.0
    %1889 = vmatpush2.msra.mxu0 %v128
    %1890 = vmatprep.subr.mxu0 0.0
    %1891 = vmatpush2.msra.mxu0 %v127
    %1892 = vmatprep.subr.mxu0 0.0
    %1893 = vmatpush2.msra.mxu0 %v126
    %1894 = vmatprep.subr.mxu0 0.0
    %1895 = vmatpush2.msra.mxu0 %v125
    %1896 = vmatprep.subr.mxu0 0.0
    %1897 = vmatpush2.msra.mxu0 %v124
    %1898 = vmatprep.subr.mxu0 0.0
    %1899 = vmatpush2.msra.mxu0 %v123
    %1900 = vmatprep.subr.mxu0 0.0
    %1901 = vmatpush2.msra.mxu0 %v122
    %1902 = vmatprep.subr.mxu0 0.0
    %1903 = vmatpush2.msra.mxu0 %v121
    %1904 = vmatprep.subr.mxu0 0.0
    %1905 = vmatpush2.msra.mxu0 %v120
    %1906 = vmatprep.subr.mxu0 0.0
    %1907 = vmatpush2.msra.mxu0 %v119
    %1908 = vmatprep.subr.mxu0 0.0
    %1909 = vmatpush2.msra.mxu0 %v118
    %1910 = vmatprep.subr.mxu0 0.0
    %1911 = vmatpush2.msra.mxu0 %v117
    %1912 = vmatprep.subr.mxu0 0.0
    %1913 = vmatpush2.msra.mxu0 %v116
    %1914 = vmatprep.subr.mxu0 0.0
    %1915 = vmatpush2.msra.mxu0 %v115
    %1916 = vmatprep.mubr.f32.mxu0 %v1756
    %1917 = vmatmul.mubr.f32.gmra.mxu0 %v1754
    %v1918 = vpop.f32.mrf.mxu0
    %v1919 = vadd.f32 %v1849, %v1918
    %v1920 = vpop.f32.mrf.mxu0
    %1921 = vdwg.mxu0
    %1922 = vmatprep.subr.mxu0 0.0
    %1923 = vmatpush1.msra.mxu0 %v146
    %1924 = vmatprep.subr.mxu0 0.0
    %1925 = vmatpush1.msra.mxu0 %v145
    %1926 = vmatprep.subr.mxu0 0.0
    %1927 = vmatpush1.msra.mxu0 %v144
    %1928 = vmatprep.subr.mxu0 0.0
    %1929 = vmatpush1.msra.mxu0 %v143
    %1930 = vmatprep.subr.mxu0 0.0
    %1931 = vmatpush1.msra.mxu0 %v142
    %1932 = vmatprep.subr.mxu0 0.0
    %1933 = vmatpush1.msra.mxu0 %v141
    %1934 = vmatprep.subr.mxu0 0.0
    %1935 = vmatpush1.msra.mxu0 %v140
    %1936 = vmatprep.subr.mxu0 0.0
    %1937 = vmatpush1.msra.mxu0 %v139
    %1938 = vmatprep.subr.mxu0 0.0
    %1939 = vmatpush1.msra.mxu0 %v138
    %1940 = vmatprep.subr.mxu0 0.0
    %1941 = vmatpush1.msra.mxu0 %v137
    %1942 = vmatprep.subr.mxu0 0.0
    %1943 = vmatpush1.msra.mxu0 %v136
    %1944 = vmatprep.subr.mxu0 0.0
    %1945 = vmatpush1.msra.mxu0 %v135
    %1946 = vmatprep.subr.mxu0 0.0
    %1947 = vmatpush1.msra.mxu0 %v134
    %1948 = vmatprep.subr.mxu0 0.0
    %1949 = vmatpush1.msra.mxu0 %v133
    %1950 = vmatprep.subr.mxu0 0.0
    %1951 = vmatpush1.msra.mxu0 %v132
    %1952 = vmatprep.subr.mxu0 0.0
    %1953 = vmatpush1.msra.mxu0 %v131
    %1954 = vmatprep.subr.mxu0 0.0
    %1955 = vmatpush2.msra.mxu0 %v162
    %1956 = vmatprep.subr.mxu0 0.0
    %1957 = vmatpush2.msra.mxu0 %v161
    %1958 = vmatprep.subr.mxu0 0.0
    %1959 = vmatpush2.msra.mxu0 %v160
    %1960 = vmatprep.subr.mxu0 0.0
    %1961 = vmatpush2.msra.mxu0 %v159
    %1962 = vmatprep.subr.mxu0 0.0
    %1963 = vmatpush2.msra.mxu0 %v158
    %1964 = vmatprep.subr.mxu0 0.0
    %1965 = vmatpush2.msra.mxu0 %v157
    %1966 = vmatprep.subr.mxu0 0.0
    %1967 = vmatpush2.msra.mxu0 %v156
    %1968 = vmatprep.subr.mxu0 0.0
    %1969 = vmatpush2.msra.mxu0 %v155
    %1970 = vmatprep.subr.mxu0 0.0
    %1971 = vmatpush2.msra.mxu0 %v154
    %1972 = vmatprep.subr.mxu0 0.0
    %1973 = vmatpush2.msra.mxu0 %v153
    %1974 = vmatprep.subr.mxu0 0.0
    %1975 = vmatpush2.msra.mxu0 %v152
    %1976 = vmatprep.subr.mxu0 0.0
    %1977 = vmatpush2.msra.mxu0 %v151
    %1978 = vmatprep.subr.mxu0 0.0
    %1979 = vmatpush2.msra.mxu0 %v150
    %1980 = vmatprep.subr.mxu0 0.0
    %1981 = vmatpush2.msra.mxu0 %v149
    %1982 = vmatprep.subr.mxu0 0.0
    %1983 = vmatpush2.msra.mxu0 %v148
    %1984 = vmatprep.subr.mxu0 0.0
    %1985 = vmatpush2.msra.mxu0 %v147
    %1986 = vmatprep.mubr.f32.mxu0 %v1772
    %1987 = vmatmul.mubr.f32.gmra.mxu0 %v1764
    %v1988 = vpop.f32.mrf.mxu0
    %v1989 = vadd.f32 %v1919, %v1988
    %v1990 = vpop.f32.mrf.mxu0
    %1991 = vdwg.mxu0
    %1992 = vmatprep.subr.mxu0 0.0
    %1993 = vmatpush1.msra.mxu0 %v178
    %1994 = vmatprep.subr.mxu0 0.0
    %1995 = vmatpush1.msra.mxu0 %v177
    %1996 = vmatprep.subr.mxu0 0.0
    %1997 = vmatpush1.msra.mxu0 %v176
    %1998 = vmatprep.subr.mxu0 0.0
    %1999 = vmatpush1.msra.mxu0 %v175
    %2000 = vmatprep.subr.mxu0 0.0
    %2001 = vmatpush1.msra.mxu0 %v174
    %2002 = vmatprep.subr.mxu0 0.0
    %2003 = vmatpush1.msra.mxu0 %v173
    %2004 = vmatprep.subr.mxu0 0.0
    %2005 = vmatpush1.msra.mxu0 %v172
    %2006 = vmatprep.subr.mxu0 0.0
    %2007 = vmatpush1.msra.mxu0 %v171
    %2008 = vmatprep.subr.mxu0 0.0
    %2009 = vmatpush1.msra.mxu0 %v170
    %2010 = vmatprep.subr.mxu0 0.0
    %2011 = vmatpush1.msra.mxu0 %v169
    %2012 = vmatprep.subr.mxu0 0.0
    %2013 = vmatpush1.msra.mxu0 %v168
    %2014 = vmatprep.subr.mxu0 0.0
    %2015 = vmatpush1.msra.mxu0 %v167
    %2016 = vmatprep.subr.mxu0 0.0
    %2017 = vmatpush1.msra.mxu0 %v166
    %2018 = vmatprep.subr.mxu0 0.0
    %2019 = vmatpush1.msra.mxu0 %v165
    %2020 = vmatprep.subr.mxu0 0.0
    %2021 = vmatpush1.msra.mxu0 %v164
    %2022 = vmatprep.subr.mxu0 0.0
    %2023 = vmatpush1.msra.mxu0 %v163
    %2024 = vmatprep.subr.mxu0 0.0
    %2025 = vmatpush2.msra.mxu0 %v194
    %2026 = vmatprep.subr.mxu0 0.0
    %2027 = vmatpush2.msra.mxu0 %v193
    %2028 = vmatprep.subr.mxu0 0.0
    %2029 = vmatpush2.msra.mxu0 %v192
    %2030 = vmatprep.subr.mxu0 0.0
    %2031 = vmatpush2.msra.mxu0 %v191
    %2032 = vmatprep.subr.mxu0 0.0
    %2033 = vmatpush2.msra.mxu0 %v190
    %2034 = vmatprep.subr.mxu0 0.0
    %2035 = vmatpush2.msra.mxu0 %v189
    %2036 = vmatprep.subr.mxu0 0.0
    %2037 = vmatpush2.msra.mxu0 %v188
    %2038 = vmatprep.subr.mxu0 0.0
    %2039 = vmatpush2.msra.mxu0 %v187
    %2040 = vmatprep.subr.mxu0 0.0
    %2041 = vmatpush2.msra.mxu0 %v186
    %2042 = vmatprep.subr.mxu0 0.0
    %2043 = vmatpush2.msra.mxu0 %v185
    %2044 = vmatprep.subr.mxu0 0.0
    %2045 = vmatpush2.msra.mxu0 %v184
    %2046 = vmatprep.subr.mxu0 0.0
    %2047 = vmatpush2.msra.mxu0 %v183
    %2048 = vmatprep.subr.mxu0 0.0
    %2049 = vmatpush2.msra.mxu0 %v182
    %2050 = vmatprep.subr.mxu0 0.0
    %2051 = vmatpush2.msra.mxu0 %v181
    %2052 = vmatprep.subr.mxu0 0.0
    %2053 = vmatpush2.msra.mxu0 %v180
    %2054 = vmatprep.subr.mxu0 0.0
    %2055 = vmatpush2.msra.mxu0 %v179
    %2056 = vmatprep.mubr.f32.mxu0 %v1773
    %2057 = vmatmul.mubr.f32.gmra.mxu0 %v1771
    %v2058 = vpop.f32.mrf.mxu0
    %v2059 = vadd.f32 %v1989, %v2058
    %v2060 = vpop.f32.mrf.mxu0
    %2061 = vdwg.mxu0
    %v2062 = vmax.f32 %v2059, 0.0
    %2063 = vmatprep.subr.mxu0 %v316
    %2064 = vmatpush1.msra.mxu0 %v315
    %2065 = vmatprep.subr.mxu0 %v308
    %2066 = vmatpush1.msra.mxu0 %v307
    %2067 = vmatprep.subr.mxu0 %v300
    %2068 = vmatpush1.msra.mxu0 %v299
    %2069 = vmatprep.subr.mxu0 %v292
    %2070 = vmatpush1.msra.mxu0 %v291
    %2071 = vmatprep.subr.mxu0 %v284
    %2072 = vmatpush1.msra.mxu0 %v283
    %2073 = vmatprep.subr.mxu0 %v276
    %2074 = vmatpush1.msra.mxu0 %v275
    %2075 = vmatprep.subr.mxu0 %v268
    %2076 = vmatpush1.msra.mxu0 %v267
    %2077 = vmatprep.subr.mxu0 %v260
    %2078 = vmatpush1.msra.mxu0 %v259
    %2079 = vmatprep.subr.mxu0 %v252
    %2080 = vmatpush1.msra.mxu0 %v251
    %2081 = vmatprep.subr.mxu0 %v244
    %2082 = vmatpush1.msra.mxu0 %v243
    %2083 = vmatprep.subr.mxu0 %v236
    %2084 = vmatpush1.msra.mxu0 %v235
    %2085 = vmatprep.subr.mxu0 %v228
    %2086 = vmatpush1.msra.mxu0 %v227
    %2087 = vmatprep.subr.mxu0 %v220
    %2088 = vmatpush1.msra.mxu0 %v219
    %2089 = vmatprep.subr.mxu0 %v212
    %2090 = vmatpush1.msra.mxu0 %v211
    %2091 = vmatprep.subr.mxu0 %v204
    %2092 = vmatpush1.msra.mxu0 %v203
    %2093 = vmatprep.subr.mxu0 %v196
    %2094 = vmatpush1.msra.mxu0 %v195
    %2095 = vmatprep.subr.mxu0 0.0
    %2096 = vmatpush2.msra.mxu0 0.0
    %2097 = vmatprep.subr.mxu0 0.0
    %2098 = vmatpush2.msra.mxu0 0.0
    %2099 = vmatprep.subr.mxu0 0.0
    %2100 = vmatpush2.msra.mxu0 0.0
    %2101 = vmatprep.subr.mxu0 0.0
    %2102 = vmatpush2.msra.mxu0 0.0
    %2103 = vmatprep.subr.mxu0 0.0
    %2104 = vmatpush2.msra.mxu0 0.0
    %2105 = vmatprep.subr.mxu0 0.0
    %2106 = vmatpush2.msra.mxu0 0.0
    %2107 = vmatprep.subr.mxu0 0.0
    %2108 = vmatpush2.msra.mxu0 0.0
    %2109 = vmatprep.subr.mxu0 0.0
    %2110 = vmatpush2.msra.mxu0 0.0
    %2111 = vmatprep.subr.mxu0 0.0
    %2112 = vmatpush2.msra.mxu0 0.0
    %2113 = vmatprep.subr.mxu0 0.0
    %2114 = vmatpush2.msra.mxu0 0.0
    %2115 = vmatprep.subr.mxu0 0.0
    %2116 = vmatpush2.msra.mxu0 0.0
    %2117 = vmatprep.subr.mxu0 0.0
    %2118 = vmatpush2.msra.mxu0 0.0
    %2119 = vmatprep.subr.mxu0 0.0
    %2120 = vmatpush2.msra.mxu0 0.0
    %2121 = vmatprep.subr.mxu0 0.0
    %2122 = vmatpush2.msra.mxu0 0.0
    %2123 = vmatprep.subr.mxu0 0.0
    %2124 = vmatpush2.msra.mxu0 0.0
    %2125 = vmatprep.subr.mxu0 0.0
    %2126 = vmatpush2.msra.mxu0 0.0
    %2127 = vmatprep.mubr.f32.mxu0 0.0
    %2128 = vmatmul.mubr.f32.gmra.mxu0 %v2062
    %v2129 = vpop.f32.mrf.mxu0
    %v2130 = vadd.f32 %v660, %v2129
    %v2131 = vpop.f32.mrf.mxu0
    %v2132 = vadd.f32 %v664, %v2131
    %2133 = vdwg.mxu0
    %2134 = vmatprep.subr.mxu0 %v318
    %2135 = vmatpush1.msra.mxu0 %v317
    %2136 = vmatprep.subr.mxu0 %v310
    %2137 = vmatpush1.msra.mxu0 %v309
    %2138 = vmatprep.subr.mxu0 %v302
    %2139 = vmatpush1.msra.mxu0 %v301
    %2140 = vmatprep.subr.mxu0 %v294
    %2141 = vmatpush1.msra.mxu0 %v293
    %2142 = vmatprep.subr.mxu0 %v286
    %2143 = vmatpush1.msra.mxu0 %v285
    %2144 = vmatprep.subr.mxu0 %v278
    %2145 = vmatpush1.msra.mxu0 %v277
    %2146 = vmatprep.subr.mxu0 %v270
    %2147 = vmatpush1.msra.mxu0 %v269
    %2148 = vmatprep.subr.mxu0 %v262
    %2149 = vmatpush1.msra.mxu0 %v261
    %2150 = vmatprep.subr.mxu0 %v254
    %2151 = vmatpush1.msra.mxu0 %v253
    %2152 = vmatprep.subr.mxu0 %v246
    %2153 = vmatpush1.msra.mxu0 %v245
    %2154 = vmatprep.subr.mxu0 %v238
    %2155 = vmatpush1.msra.mxu0 %v237
    %2156 = vmatprep.subr.mxu0 %v230
    %2157 = vmatpush1.msra.mxu0 %v229
    %2158 = vmatprep.subr.mxu0 %v222
    %2159 = vmatpush1.msra.mxu0 %v221
    %2160 = vmatprep.subr.mxu0 %v214
    %2161 = vmatpush1.msra.mxu0 %v213
    %2162 = vmatprep.subr.mxu0 %v206
    %2163 = vmatpush1.msra.mxu0 %v205
    %2164 = vmatprep.subr.mxu0 %v198
    %2165 = vmatpush1.msra.mxu0 %v197
    %2166 = vmatprep.subr.mxu0 0.0
    %2167 = vmatpush2.msra.mxu0 0.0
    %2168 = vmatprep.subr.mxu0 0.0
    %2169 = vmatpush2.msra.mxu0 0.0
    %2170 = vmatprep.subr.mxu0 0.0
    %2171 = vmatpush2.msra.mxu0 0.0
    %2172 = vmatprep.subr.mxu0 0.0
    %2173 = vmatpush2.msra.mxu0 0.0
    %2174 = vmatprep.subr.mxu0 0.0
    %2175 = vmatpush2.msra.mxu0 0.0
    %2176 = vmatprep.subr.mxu0 0.0
    %2177 = vmatpush2.msra.mxu0 0.0
    %2178 = vmatprep.subr.mxu0 0.0
    %2179 = vmatpush2.msra.mxu0 0.0
    %2180 = vmatprep.subr.mxu0 0.0
    %2181 = vmatpush2.msra.mxu0 0.0
    %2182 = vmatprep.subr.mxu0 0.0
    %2183 = vmatpush2.msra.mxu0 0.0
    %2184 = vmatprep.subr.mxu0 0.0
    %2185 = vmatpush2.msra.mxu0 0.0
    %2186 = vmatprep.subr.mxu0 0.0
    %2187 = vmatpush2.msra.mxu0 0.0
    %2188 = vmatprep.subr.mxu0 0.0
    %2189 = vmatpush2.msra.mxu0 0.0
    %2190 = vmatprep.subr.mxu0 0.0
    %2191 = vmatpush2.msra.mxu0 0.0
    %2192 = vmatprep.subr.mxu0 0.0
    %2193 = vmatpush2.msra.mxu0 0.0
    %2194 = vmatprep.subr.mxu0 0.0
    %2195 = vmatpush2.msra.mxu0 0.0
    %2196 = vmatprep.subr.mxu0 0.0
    %2197 = vmatpush2.msra.mxu0 0.0
    %2198 = vmatprep.mubr.f32.mxu0 0.0
    %2199 = vmatmul.mubr.f32.gmra.mxu0 %v2062
    %v2200 = vpop.f32.mrf.mxu0
    %v2201 = vadd.f32 %v668, %v2200
    %v2202 = vpop.f32.mrf.mxu0
    %v2203 = vadd.f32 %v672, %v2202
    %2204 = vdwg.mxu0
    %2205 = vmatprep.subr.mxu0 %v320
    %2206 = vmatpush1.msra.mxu0 %v319
    %2207 = vmatprep.subr.mxu0 %v312
    %2208 = vmatpush1.msra.mxu0 %v311
    %2209 = vmatprep.subr.mxu0 %v304
    %2210 = vmatpush1.msra.mxu0 %v303
    %2211 = vmatprep.subr.mxu0 %v296
    %2212 = vmatpush1.msra.mxu0 %v295
    %2213 = vmatprep.subr.mxu0 %v288
    %2214 = vmatpush1.msra.mxu0 %v287
    %2215 = vmatprep.subr.mxu0 %v280
    %2216 = vmatpush1.msra.mxu0 %v279
    %2217 = vmatprep.subr.mxu0 %v272
    %2218 = vmatpush1.msra.mxu0 %v271
    %2219 = vmatprep.subr.mxu0 %v264
    %2220 = vmatpush1.msra.mxu0 %v263
    %2221 = vmatprep.subr.mxu0 %v256
    %2222 = vmatpush1.msra.mxu0 %v255
    %2223 = vmatprep.subr.mxu0 %v248
    %2224 = vmatpush1.msra.mxu0 %v247
    %2225 = vmatprep.subr.mxu0 %v240
    %2226 = vmatpush1.msra.mxu0 %v239
    %2227 = vmatprep.subr.mxu0 %v232
    %2228 = vmatpush1.msra.mxu0 %v231
    %2229 = vmatprep.subr.mxu0 %v224
    %2230 = vmatpush1.msra.mxu0 %v223
    %2231 = vmatprep.subr.mxu0 %v216
    %2232 = vmatpush1.msra.mxu0 %v215
    %2233 = vmatprep.subr.mxu0 %v208
    %2234 = vmatpush1.msra.mxu0 %v207
    %2235 = vmatprep.subr.mxu0 %v200
    %2236 = vmatpush1.msra.mxu0 %v199
    %2237 = vmatprep.subr.mxu0 0.0
    %2238 = vmatpush2.msra.mxu0 0.0
    %2239 = vmatprep.subr.mxu0 0.0
    %2240 = vmatpush2.msra.mxu0 0.0
    %2241 = vmatprep.subr.mxu0 0.0
    %2242 = vmatpush2.msra.mxu0 0.0
    %2243 = vmatprep.subr.mxu0 0.0
    %2244 = vmatpush2.msra.mxu0 0.0
    %2245 = vmatprep.subr.mxu0 0.0
    %2246 = vmatpush2.msra.mxu0 0.0
    %2247 = vmatprep.subr.mxu0 0.0
    %2248 = vmatpush2.msra.mxu0 0.0
    %2249 = vmatprep.subr.mxu0 0.0
    %2250 = vmatpush2.msra.mxu0 0.0
    %2251 = vmatprep.subr.mxu0 0.0
    %2252 = vmatpush2.msra.mxu0 0.0
    %2253 = vmatprep.subr.mxu0 0.0
    %2254 = vmatpush2.msra.mxu0 0.0
    %2255 = vmatprep.subr.mxu0 0.0
    %2256 = vmatpush2.msra.mxu0 0.0
    %2257 = vmatprep.subr.mxu0 0.0
    %2258 = vmatpush2.msra.mxu0 0.0
    %2259 = vmatprep.subr.mxu0 0.0
    %2260 = vmatpush2.msra.mxu0 0.0
    %2261 = vmatprep.subr.mxu0 0.0
    %2262 = vmatpush2.msra.mxu0 0.0
    %2263 = vmatprep.subr.mxu0 0.0
    %2264 = vmatpush2.msra.mxu0 0.0
    %2265 = vmatprep.subr.mxu0 0.0
    %2266 = vmatpush2.msra.mxu0 0.0
    %2267 = vmatprep.subr.mxu0 0.0
    %2268 = vmatpush2.msra.mxu0 0.0
    %2269 = vmatprep.mubr.f32.mxu0 0.0
    %2270 = vmatmul.mubr.f32.gmra.mxu0 %v2062
    %v2271 = vpop.f32.mrf.mxu0
    %v2272 = vadd.f32 %v676, %v2271
    %v2273 = vpop.f32.mrf.mxu0
    %v2274 = vadd.f32 %v680, %v2273
    %2275 = vdwg.mxu0
    %2276 = vmatprep.subr.mxu0 %v322
    %2277 = vmatpush1.msra.mxu0 %v321
    %2278 = vmatprep.subr.mxu0 %v314
    %2279 = vmatpush1.msra.mxu0 %v313
    %2280 = vmatprep.subr.mxu0 %v306
    %2281 = vmatpush1.msra.mxu0 %v305
    %2282 = vmatprep.subr.mxu0 %v298
    %2283 = vmatpush1.msra.mxu0 %v297
    %2284 = vmatprep.subr.mxu0 %v290
    %2285 = vmatpush1.msra.mxu0 %v289
    %2286 = vmatprep.subr.mxu0 %v282
    %2287 = vmatpush1.msra.mxu0 %v281
    %2288 = vmatprep.subr.mxu0 %v274
    %2289 = vmatpush1.msra.mxu0 %v273
    %2290 = vmatprep.subr.mxu0 %v266
    %2291 = vmatpush1.msra.mxu0 %v265
    %2292 = vmatprep.subr.mxu0 %v258
    %2293 = vmatpush1.msra.mxu0 %v257
    %2294 = vmatprep.subr.mxu0 %v250
    %2295 = vmatpush1.msra.mxu0 %v249
    %2296 = vmatprep.subr.mxu0 %v242
    %2297 = vmatpush1.msra.mxu0 %v241
    %2298 = vmatprep.subr.mxu0 %v234
    %2299 = vmatpush1.msra.mxu0 %v233
    %2300 = vmatprep.subr.mxu0 %v226
    %2301 = vmatpush1.msra.mxu0 %v225
    %2302 = vmatprep.subr.mxu0 %v218
    %2303 = vmatpush1.msra.mxu0 %v217
    %2304 = vmatprep.subr.mxu0 %v210
    %2305 = vmatpush1.msra.mxu0 %v209
    %2306 = vmatprep.subr.mxu0 %v202
    %2307 = vmatpush1.msra.mxu0 %v201
    %2308 = vmatprep.subr.mxu0 0.0
    %2309 = vmatpush2.msra.mxu0 0.0
    %2310 = vmatprep.subr.mxu0 0.0
    %2311 = vmatpush2.msra.mxu0 0.0
    %2312 = vmatprep.subr.mxu0 0.0
    %2313 = vmatpush2.msra.mxu0 0.0
    %2314 = vmatprep.subr.mxu0 0.0
    %2315 = vmatpush2.msra.mxu0 0.0
    %2316 = vmatprep.subr.mxu0 0.0
    %2317 = vmatpush2.msra.mxu0 0.0
    %2318 = vmatprep.subr.mxu0 0.0
    %2319 = vmatpush2.msra.mxu0 0.0
    %2320 = vmatprep.subr.mxu0 0.0
    %2321 = vmatpush2.msra.mxu0 0.0
    %2322 = vmatprep.subr.mxu0 0.0
    %2323 = vmatpush2.msra.mxu0 0.0
    %2324 = vmatprep.subr.mxu0 0.0
    %2325 = vmatpush2.msra.mxu0 0.0
    %2326 = vmatprep.subr.mxu0 0.0
    %2327 = vmatpush2.msra.mxu0 0.0
    %2328 = vmatprep.subr.mxu0 0.0
    %2329 = vmatpush2.msra.mxu0 0.0
    %2330 = vmatprep.subr.mxu0 0.0
    %2331 = vmatpush2.msra.mxu0 0.0
    %2332 = vmatprep.subr.mxu0 0.0
    %2333 = vmatpush2.msra.mxu0 0.0
    %2334 = vmatprep.subr.mxu0 0.0
    %2335 = vmatpush2.msra.mxu0 0.0
    %2336 = vmatprep.subr.mxu0 0.0
    %2337 = vmatpush2.msra.mxu0 0.0
    %2338 = vmatprep.subr.mxu0 0.0
    %2339 = vmatpush2.msra.mxu0 0.0
    %2340 = vmatprep.mubr.f32.mxu0 0.0
    %2341 = vmatmul.mubr.f32.gmra.mxu0 %v2062
    %v2342 = vpop.f32.mrf.mxu0
    %v2343 = vadd.f32 %v684, %v2342
    %v2344 = vpop.f32.mrf.mxu0
    %v2345 = vadd.f32 %v688, %v2344
    %2346 = vdwg.mxu0
    %s2347 = sld [smem:[#allocation2 + $0x280]]
    %s2348 = sld [smem:[#allocation2 + $0x281]]
    %v2349 = vstv %s2348
    %v2350 = vmul.f32 %v2349, %v2130
    %v2351 = vmul.f32 %v2349, %v2132
    %v2352 = vmul.f32 %v2349, %v2201
    %v2353 = vmul.f32 %v2349, %v2203
    %v2354 = vmul.f32 %v2349, %v2272
    %v2355 = vmul.f32 %v2349, %v2274
    %v2356 = vmul.f32 %v2349, %v2343
    %v2357 = vmul.f32 %v2349, %v2345
    %v2366 = vcombine.low %v2350, %v2351
    %v2367 = vcombine.low %v2352, %v2353
    %v2369 = vunpack.c.l.s4 1983009808
    %v2370 = vunpack.c.0.s8 %v2369
    %v2371 = vlaneseq
    %v2372 = vshrl.u32 %v2371, 7
    %v2373 = vsub.s32 %v2370, %v2372
    %v2374 = vrot.slane %v2366, %v2373
    %v2376 = vunpack.c.l.s4 1983009808
    %v2377 = vunpack.c.0.s8 %v2376
    %v2378 = vlaneseq
    %v2379 = vshrl.u32 %v2378, 7
    %v2380 = vsub.s32 %v2377, %v2379
    %v2381 = vrot.slane %v2367, %v2380
    %v2382 = vcombine.low %v2374, %v2381
    %v2383 = vcombine.low %v2354, %v2355
    %v2384 = vcombine.low %v2356, %v2357
    %v2386 = vunpack.c.l.s4 1983009808
    %v2387 = vunpack.c.0.s8 %v2386
    %v2388 = vlaneseq
    %v2389 = vshrl.u32 %v2388, 7
    %v2390 = vsub.s32 %v2387, %v2389
    %v2391 = vrot.slane %v2383, %v2390
    %v2393 = vunpack.c.l.s4 1983009808
    %v2394 = vunpack.c.0.s8 %v2393
    %v2395 = vlaneseq
    %v2396 = vshrl.u32 %v2395, 7
    %v2397 = vsub.s32 %v2394, %v2396
    %v2398 = vrot.slane %v2384, %v2397
    %v2399 = vcombine.low %v2391, %v2398
    %v2402 = vsub.f32 %v1731, %v2382
    %v2403 = vsub.f32 %v1732, %v2399
    %v2404 = vstv %s2347
    %v2405 = vmul.f32 %v2404, %v2402
    %v2406 = vmul.f32 %v2404, %v2403
    %s2407 = sld [smem:[#allocation2 + $0x282]]
    %s2408 = scalar_lea.vmem %s2, 80
    %v2409 = vld [vmem:[%s2408] sm:$0xff]
    %v2410 = vld [vmem:[%s2408 + $0x8] sm:$0xff]
    %v2411 = vstv %s2407
    %v2412 = vmul.f32 %v2411, %v2409
    %v2413 = vmul.f32 %v2411, %v2410
    %v2414 = vadd.f32 %v2405, %v2412
    %v2415 = vadd.f32 %v2406, %v2413
    %v2416 = vld [vmem:[%s3 + $0x4] sm:$0x1]
    %v2417 = vlaneseq
    %v2418 = vshrl.u32 %v2417, 7
    %v2419 = vsub.s32 0, %v2418
    %v2420 = vrot.slane %v2416, %v2419
    %v2423 = vcombine.high %v2414, %v2414
    %v2425 = vunpack.c.l.s4 1983009808
    %v2426 = vunpack.c.0.s8 %v2425
    %v2427 = vlaneseq
    %v2428 = vshrl.u32 %v2427, 7
    %v2429 = vsub.s32 %v2426, %v2428
    %v2430 = vrot.slane %v2414, %v2429
    %v2432 = vunpack.c.l.s4 1983009808
    %v2433 = vunpack.c.0.s8 %v2432
    %v2434 = vlaneseq
    %v2435 = vshrl.u32 %v2434, 7
    %v2436 = vsub.s32 %v2433, %v2435
    %v2437 = vrot.slane %v2423, %v2436
    %v2438 = vcombine.high %v2430, %v2430
    %v2439 = vcombine.high %v2437, %v2437
    %v2440 = vcombine.high %v2415, %v2415
    %v2442 = vunpack.c.l.s4 1983009808
    %v2443 = vunpack.c.0.s8 %v2442
    %v2444 = vlaneseq
    %v2445 = vshrl.u32 %v2444, 7
    %v2446 = vsub.s32 %v2443, %v2445
    %v2447 = vrot.slane %v2415, %v2446
    %v2449 = vunpack.c.l.s4 1983009808
    %v2450 = vunpack.c.0.s8 %v2449
    %v2451 = vlaneseq
    %v2452 = vshrl.u32 %v2451, 7
    %v2453 = vsub.s32 %v2450, %v2452
    %v2454 = vrot.slane %v2440, %v2453
    %v2455 = vcombine.high %v2447, %v2447
    %v2456 = vcombine.high %v2454, %v2454
    %2465 = vmatprep.subr.mxu0 0.0
    %2466 = vmatpush1.msra.mxu0 %v82
    %2467 = vmatprep.subr.mxu0 0.0
    %2468 = vmatpush1.msra.mxu0 %v81
    %2469 = vmatprep.subr.mxu0 0.0
    %2470 = vmatpush1.msra.mxu0 %v80
    %2471 = vmatprep.subr.mxu0 0.0
    %2472 = vmatpush1.msra.mxu0 %v79
    %2473 = vmatprep.subr.mxu0 0.0
    %2474 = vmatpush1.msra.mxu0 %v78
    %2475 = vmatprep.subr.mxu0 0.0
    %2476 = vmatpush1.msra.mxu0 %v77
    %2477 = vmatprep.subr.mxu0 0.0
    %2478 = vmatpush1.msra.mxu0 %v76
    %2479 = vmatprep.subr.mxu0 0.0
    %2480 = vmatpush1.msra.mxu0 %v75
    %2481 = vmatprep.subr.mxu0 0.0
    %2482 = vmatpush1.msra.mxu0 %v74
    %2483 = vmatprep.subr.mxu0 0.0
    %2484 = vmatpush1.msra.mxu0 %v73
    %2485 = vmatprep.subr.mxu0 0.0
    %2486 = vmatpush1.msra.mxu0 %v72
    %2487 = vmatprep.subr.mxu0 0.0
    %2488 = vmatpush1.msra.mxu0 %v71
    %2489 = vmatprep.subr.mxu0 0.0
    %2490 = vmatpush1.msra.mxu0 %v70
    %2491 = vmatprep.subr.mxu0 0.0
    %2492 = vmatpush1.msra.mxu0 %v69
    %2493 = vmatprep.subr.mxu0 0.0
    %2494 = vmatpush1.msra.mxu0 %v68
    %2495 = vmatprep.subr.mxu0 0.0
    %2496 = vmatpush1.msra.mxu0 %v67
    %2497 = vmatprep.subr.mxu0 0.0
    %2498 = vmatpush2.msra.mxu0 %v98
    %2499 = vmatprep.subr.mxu0 0.0
    %2500 = vmatpush2.msra.mxu0 %v97
    %2501 = vmatprep.subr.mxu0 0.0
    %2502 = vmatpush2.msra.mxu0 %v96
    %2503 = vmatprep.subr.mxu0 0.0
    %2504 = vmatpush2.msra.mxu0 %v95
    %2505 = vmatprep.subr.mxu0 0.0
    %2506 = vmatpush2.msra.mxu0 %v94
    %2507 = vmatprep.subr.mxu0 0.0
    %2508 = vmatpush2.msra.mxu0 %v93
    %2509 = vmatprep.subr.mxu0 0.0
    %2510 = vmatpush2.msra.mxu0 %v92
    %2511 = vmatprep.subr.mxu0 0.0
    %2512 = vmatpush2.msra.mxu0 %v91
    %2513 = vmatprep.subr.mxu0 0.0
    %2514 = vmatpush2.msra.mxu0 %v90
    %2515 = vmatprep.subr.mxu0 0.0
    %2516 = vmatpush2.msra.mxu0 %v89
    %2517 = vmatprep.subr.mxu0 0.0
    %2518 = vmatpush2.msra.mxu0 %v88
    %2519 = vmatprep.subr.mxu0 0.0
    %2520 = vmatpush2.msra.mxu0 %v87
    %2521 = vmatprep.subr.mxu0 0.0
    %2522 = vmatpush2.msra.mxu0 %v86
    %2523 = vmatprep.subr.mxu0 0.0
    %2524 = vmatpush2.msra.mxu0 %v85
    %2525 = vmatprep.subr.mxu0 0.0
    %2526 = vmatpush2.msra.mxu0 %v84
    %2527 = vmatprep.subr.mxu0 0.0
    %2528 = vmatpush2.msra.mxu0 %v83
    %2529 = vmatprep.mubr.f32.mxu0 %v2438
    %2530 = vmatmul.mubr.f32.gmra.mxu0 %v2430
    %v2531 = vpop.f32.mrf.mxu0
    %v2532 = vadd.f32 %v2420, %v2531
    %v2533 = vpop.f32.mrf.mxu0
    %2534 = vdwg.mxu0
    %2535 = vmatprep.subr.mxu0 0.0
    %2536 = vmatpush1.msra.mxu0 %v114
    %2537 = vmatprep.subr.mxu0 0.0
    %2538 = vmatpush1.msra.mxu0 %v113
    %2539 = vmatprep.subr.mxu0 0.0
    %2540 = vmatpush1.msra.mxu0 %v112
    %2541 = vmatprep.subr.mxu0 0.0
    %2542 = vmatpush1.msra.mxu0 %v111
    %2543 = vmatprep.subr.mxu0 0.0
    %2544 = vmatpush1.msra.mxu0 %v110
    %2545 = vmatprep.subr.mxu0 0.0
    %2546 = vmatpush1.msra.mxu0 %v109
    %2547 = vmatprep.subr.mxu0 0.0
    %2548 = vmatpush1.msra.mxu0 %v108
    %2549 = vmatprep.subr.mxu0 0.0
    %2550 = vmatpush1.msra.mxu0 %v107
    %2551 = vmatprep.subr.mxu0 0.0
    %2552 = vmatpush1.msra.mxu0 %v106
    %2553 = vmatprep.subr.mxu0 0.0
    %2554 = vmatpush1.msra.mxu0 %v105
    %2555 = vmatprep.subr.mxu0 0.0
    %2556 = vmatpush1.msra.mxu0 %v104
    %2557 = vmatprep.subr.mxu0 0.0
    %2558 = vmatpush1.msra.mxu0 %v103
    %2559 = vmatprep.subr.mxu0 0.0
    %2560 = vmatpush1.msra.mxu0 %v102
    %2561 = vmatprep.subr.mxu0 0.0
    %2562 = vmatpush1.msra.mxu0 %v101
    %2563 = vmatprep.subr.mxu0 0.0
    %2564 = vmatpush1.msra.mxu0 %v100
    %2565 = vmatprep.subr.mxu0 0.0
    %2566 = vmatpush1.msra.mxu0 %v99
    %2567 = vmatprep.subr.mxu0 0.0
    %2568 = vmatpush2.msra.mxu0 %v130
    %2569 = vmatprep.subr.mxu0 0.0
    %2570 = vmatpush2.msra.mxu0 %v129
    %2571 = vmatprep.subr.mxu0 0.0
    %2572 = vmatpush2.msra.mxu0 %v128
    %2573 = vmatprep.subr.mxu0 0.0
    %2574 = vmatpush2.msra.mxu0 %v127
    %2575 = vmatprep.subr.mxu0 0.0
    %2576 = vmatpush2.msra.mxu0 %v126
    %2577 = vmatprep.subr.mxu0 0.0
    %2578 = vmatpush2.msra.mxu0 %v125
    %2579 = vmatprep.subr.mxu0 0.0
    %2580 = vmatpush2.msra.mxu0 %v124
    %2581 = vmatprep.subr.mxu0 0.0
    %2582 = vmatpush2.msra.mxu0 %v123
    %2583 = vmatprep.subr.mxu0 0.0
    %2584 = vmatpush2.msra.mxu0 %v122
    %2585 = vmatprep.subr.mxu0 0.0
    %2586 = vmatpush2.msra.mxu0 %v121
    %2587 = vmatprep.subr.mxu0 0.0
    %2588 = vmatpush2.msra.mxu0 %v120
    %2589 = vmatprep.subr.mxu0 0.0
    %2590 = vmatpush2.msra.mxu0 %v119
    %2591 = vmatprep.subr.mxu0 0.0
    %2592 = vmatpush2.msra.mxu0 %v118
    %2593 = vmatprep.subr.mxu0 0.0
    %2594 = vmatpush2.msra.mxu0 %v117
    %2595 = vmatprep.subr.mxu0 0.0
    %2596 = vmatpush2.msra.mxu0 %v116
    %2597 = vmatprep.subr.mxu0 0.0
    %2598 = vmatpush2.msra.mxu0 %v115
    %2599 = vmatprep.mubr.f32.mxu0 %v2439
    %2600 = vmatmul.mubr.f32.gmra.mxu0 %v2437
    %v2601 = vpop.f32.mrf.mxu0
    %v2602 = vadd.f32 %v2532, %v2601
    %v2603 = vpop.f32.mrf.mxu0
    %2604 = vdwg.mxu0
    %2605 = vmatprep.subr.mxu0 0.0
    %2606 = vmatpush1.msra.mxu0 %v146
    %2607 = vmatprep.subr.mxu0 0.0
    %2608 = vmatpush1.msra.mxu0 %v145
    %2609 = vmatprep.subr.mxu0 0.0
    %2610 = vmatpush1.msra.mxu0 %v144
    %2611 = vmatprep.subr.mxu0 0.0
    %2612 = vmatpush1.msra.mxu0 %v143
    %2613 = vmatprep.subr.mxu0 0.0
    %2614 = vmatpush1.msra.mxu0 %v142
    %2615 = vmatprep.subr.mxu0 0.0
    %2616 = vmatpush1.msra.mxu0 %v141
    %2617 = vmatprep.subr.mxu0 0.0
    %2618 = vmatpush1.msra.mxu0 %v140
    %2619 = vmatprep.subr.mxu0 0.0
    %2620 = vmatpush1.msra.mxu0 %v139
    %2621 = vmatprep.subr.mxu0 0.0
    %2622 = vmatpush1.msra.mxu0 %v138
    %2623 = vmatprep.subr.mxu0 0.0
    %2624 = vmatpush1.msra.mxu0 %v137
    %2625 = vmatprep.subr.mxu0 0.0
    %2626 = vmatpush1.msra.mxu0 %v136
    %2627 = vmatprep.subr.mxu0 0.0
    %2628 = vmatpush1.msra.mxu0 %v135
    %2629 = vmatprep.subr.mxu0 0.0
    %2630 = vmatpush1.msra.mxu0 %v134
    %2631 = vmatprep.subr.mxu0 0.0
    %2632 = vmatpush1.msra.mxu0 %v133
    %2633 = vmatprep.subr.mxu0 0.0
    %2634 = vmatpush1.msra.mxu0 %v132
    %2635 = vmatprep.subr.mxu0 0.0
    %2636 = vmatpush1.msra.mxu0 %v131
    %2637 = vmatprep.subr.mxu0 0.0
    %2638 = vmatpush2.msra.mxu0 %v162
    %2639 = vmatprep.subr.mxu0 0.0
    %2640 = vmatpush2.msra.mxu0 %v161
    %2641 = vmatprep.subr.mxu0 0.0
    %2642 = vmatpush2.msra.mxu0 %v160
    %2643 = vmatprep.subr.mxu0 0.0
    %2644 = vmatpush2.msra.mxu0 %v159
    %2645 = vmatprep.subr.mxu0 0.0
    %2646 = vmatpush2.msra.mxu0 %v158
    %2647 = vmatprep.subr.mxu0 0.0
    %2648 = vmatpush2.msra.mxu0 %v157
    %2649 = vmatprep.subr.mxu0 0.0
    %2650 = vmatpush2.msra.mxu0 %v156
    %2651 = vmatprep.subr.mxu0 0.0
    %2652 = vmatpush2.msra.mxu0 %v155
    %2653 = vmatprep.subr.mxu0 0.0
    %2654 = vmatpush2.msra.mxu0 %v154
    %2655 = vmatprep.subr.mxu0 0.0
    %2656 = vmatpush2.msra.mxu0 %v153
    %2657 = vmatprep.subr.mxu0 0.0
    %2658 = vmatpush2.msra.mxu0 %v152
    %2659 = vmatprep.subr.mxu0 0.0
    %2660 = vmatpush2.msra.mxu0 %v151
    %2661 = vmatprep.subr.mxu0 0.0
    %2662 = vmatpush2.msra.mxu0 %v150
    %2663 = vmatprep.subr.mxu0 0.0
    %2664 = vmatpush2.msra.mxu0 %v149
    %2665 = vmatprep.subr.mxu0 0.0
    %2666 = vmatpush2.msra.mxu0 %v148
    %2667 = vmatprep.subr.mxu0 0.0
    %2668 = vmatpush2.msra.mxu0 %v147
    %2669 = vmatprep.mubr.f32.mxu0 %v2455
    %2670 = vmatmul.mubr.f32.gmra.mxu0 %v2447
    %v2671 = vpop.f32.mrf.mxu0
    %v2672 = vadd.f32 %v2602, %v2671
    %v2673 = vpop.f32.mrf.mxu0
    %2674 = vdwg.mxu0
    %2675 = vmatprep.subr.mxu0 0.0
    %2676 = vmatpush1.msra.mxu0 %v178
    %2677 = vmatprep.subr.mxu0 0.0
    %2678 = vmatpush1.msra.mxu0 %v177
    %2679 = vmatprep.subr.mxu0 0.0
    %2680 = vmatpush1.msra.mxu0 %v176
    %2681 = vmatprep.subr.mxu0 0.0
    %2682 = vmatpush1.msra.mxu0 %v175
    %2683 = vmatprep.subr.mxu0 0.0
    %2684 = vmatpush1.msra.mxu0 %v174
    %2685 = vmatprep.subr.mxu0 0.0
    %2686 = vmatpush1.msra.mxu0 %v173
    %2687 = vmatprep.subr.mxu0 0.0
    %2688 = vmatpush1.msra.mxu0 %v172
    %2689 = vmatprep.subr.mxu0 0.0
    %2690 = vmatpush1.msra.mxu0 %v171
    %2691 = vmatprep.subr.mxu0 0.0
    %2692 = vmatpush1.msra.mxu0 %v170
    %2693 = vmatprep.subr.mxu0 0.0
    %2694 = vmatpush1.msra.mxu0 %v169
    %2695 = vmatprep.subr.mxu0 0.0
    %2696 = vmatpush1.msra.mxu0 %v168
    %2697 = vmatprep.subr.mxu0 0.0
    %2698 = vmatpush1.msra.mxu0 %v167
    %2699 = vmatprep.subr.mxu0 0.0
    %2700 = vmatpush1.msra.mxu0 %v166
    %2701 = vmatprep.subr.mxu0 0.0
    %2702 = vmatpush1.msra.mxu0 %v165
    %2703 = vmatprep.subr.mxu0 0.0
    %2704 = vmatpush1.msra.mxu0 %v164
    %2705 = vmatprep.subr.mxu0 0.0
    %2706 = vmatpush1.msra.mxu0 %v163
    %2707 = vmatprep.subr.mxu0 0.0
    %2708 = vmatpush2.msra.mxu0 %v194
    %2709 = vmatprep.subr.mxu0 0.0
    %2710 = vmatpush2.msra.mxu0 %v193
    %2711 = vmatprep.subr.mxu0 0.0
    %2712 = vmatpush2.msra.mxu0 %v192
    %2713 = vmatprep.subr.mxu0 0.0
    %2714 = vmatpush2.msra.mxu0 %v191
    %2715 = vmatprep.subr.mxu0 0.0
    %2716 = vmatpush2.msra.mxu0 %v190
    %2717 = vmatprep.subr.mxu0 0.0
    %2718 = vmatpush2.msra.mxu0 %v189
    %2719 = vmatprep.subr.mxu0 0.0
    %2720 = vmatpush2.msra.mxu0 %v188
    %2721 = vmatprep.subr.mxu0 0.0
    %2722 = vmatpush2.msra.mxu0 %v187
    %2723 = vmatprep.subr.mxu0 0.0
    %2724 = vmatpush2.msra.mxu0 %v186
    %2725 = vmatprep.subr.mxu0 0.0
    %2726 = vmatpush2.msra.mxu0 %v185
    %2727 = vmatprep.subr.mxu0 0.0
    %2728 = vmatpush2.msra.mxu0 %v184
    %2729 = vmatprep.subr.mxu0 0.0
    %2730 = vmatpush2.msra.mxu0 %v183
    %2731 = vmatprep.subr.mxu0 0.0
    %2732 = vmatpush2.msra.mxu0 %v182
    %2733 = vmatprep.subr.mxu0 0.0
    %2734 = vmatpush2.msra.mxu0 %v181
    %2735 = vmatprep.subr.mxu0 0.0
    %2736 = vmatpush2.msra.mxu0 %v180
    %2737 = vmatprep.subr.mxu0 0.0
    %2738 = vmatpush2.msra.mxu0 %v179
    %2739 = vmatprep.mubr.f32.mxu0 %v2456
    %2740 = vmatmul.mubr.f32.gmra.mxu0 %v2454
    %v2741 = vpop.f32.mrf.mxu0
    %v2742 = vadd.f32 %v2672, %v2741
    %v2743 = vpop.f32.mrf.mxu0
    %2744 = vdwg.mxu0
    %v2745 = vmax.f32 %v2742, 0.0
    %2746 = vmatprep.subr.mxu0 %v316
    %2747 = vmatpush1.msra.mxu0 %v315
    %2748 = vmatprep.subr.mxu0 %v308
    %2749 = vmatpush1.msra.mxu0 %v307
    %2750 = vmatprep.subr.mxu0 %v300
    %2751 = vmatpush1.msra.mxu0 %v299
    %2752 = vmatprep.subr.mxu0 %v292
    %2753 = vmatpush1.msra.mxu0 %v291
    %2754 = vmatprep.subr.mxu0 %v284
    %2755 = vmatpush1.msra.mxu0 %v283
    %2756 = vmatprep.subr.mxu0 %v276
    %2757 = vmatpush1.msra.mxu0 %v275
    %2758 = vmatprep.subr.mxu0 %v268
    %2759 = vmatpush1.msra.mxu0 %v267
    %2760 = vmatprep.subr.mxu0 %v260
    %2761 = vmatpush1.msra.mxu0 %v259
    %2762 = vmatprep.subr.mxu0 %v252
    %2763 = vmatpush1.msra.mxu0 %v251
    %2764 = vmatprep.subr.mxu0 %v244
    %2765 = vmatpush1.msra.mxu0 %v243
    %2766 = vmatprep.subr.mxu0 %v236
    %2767 = vmatpush1.msra.mxu0 %v235
    %2768 = vmatprep.subr.mxu0 %v228
    %2769 = vmatpush1.msra.mxu0 %v227
    %2770 = vmatprep.subr.mxu0 %v220
    %2771 = vmatpush1.msra.mxu0 %v219
    %2772 = vmatprep.subr.mxu0 %v212
    %2773 = vmatpush1.msra.mxu0 %v211
    %2774 = vmatprep.subr.mxu0 %v204
    %2775 = vmatpush1.msra.mxu0 %v203
    %2776 = vmatprep.subr.mxu0 %v196
    %2777 = vmatpush1.msra.mxu0 %v195
    %2778 = vmatprep.subr.mxu0 0.0
    %2779 = vmatpush2.msra.mxu0 0.0
    %2780 = vmatprep.subr.mxu0 0.0
    %2781 = vmatpush2.msra.mxu0 0.0
    %2782 = vmatprep.subr.mxu0 0.0
    %2783 = vmatpush2.msra.mxu0 0.0
    %2784 = vmatprep.subr.mxu0 0.0
    %2785 = vmatpush2.msra.mxu0 0.0
    %2786 = vmatprep.subr.mxu0 0.0
    %2787 = vmatpush2.msra.mxu0 0.0
    %2788 = vmatprep.subr.mxu0 0.0
    %2789 = vmatpush2.msra.mxu0 0.0
    %2790 = vmatprep.subr.mxu0 0.0
    %2791 = vmatpush2.msra.mxu0 0.0
    %2792 = vmatprep.subr.mxu0 0.0
    %2793 = vmatpush2.msra.mxu0 0.0
    %2794 = vmatprep.subr.mxu0 0.0
    %2795 = vmatpush2.msra.mxu0 0.0
    %2796 = vmatprep.subr.mxu0 0.0
    %2797 = vmatpush2.msra.mxu0 0.0
    %2798 = vmatprep.subr.mxu0 0.0
    %2799 = vmatpush2.msra.mxu0 0.0
    %2800 = vmatprep.subr.mxu0 0.0
    %2801 = vmatpush2.msra.mxu0 0.0
    %2802 = vmatprep.subr.mxu0 0.0
    %2803 = vmatpush2.msra.mxu0 0.0
    %2804 = vmatprep.subr.mxu0 0.0
    %2805 = vmatpush2.msra.mxu0 0.0
    %2806 = vmatprep.subr.mxu0 0.0
    %2807 = vmatpush2.msra.mxu0 0.0
    %2808 = vmatprep.subr.mxu0 0.0
    %2809 = vmatpush2.msra.mxu0 0.0
    %2810 = vmatprep.mubr.f32.mxu0 0.0
    %2811 = vmatmul.mubr.f32.gmra.mxu0 %v2745
    %v2812 = vpop.f32.mrf.mxu0
    %v2813 = vadd.f32 %v660, %v2812
    %v2814 = vpop.f32.mrf.mxu0
    %v2815 = vadd.f32 %v664, %v2814
    %2816 = vdwg.mxu0
    %2817 = vmatprep.subr.mxu0 %v318
    %2818 = vmatpush1.msra.mxu0 %v317
    %2819 = vmatprep.subr.mxu0 %v310
    %2820 = vmatpush1.msra.mxu0 %v309
    %2821 = vmatprep.subr.mxu0 %v302
    %2822 = vmatpush1.msra.mxu0 %v301
    %2823 = vmatprep.subr.mxu0 %v294
    %2824 = vmatpush1.msra.mxu0 %v293
    %2825 = vmatprep.subr.mxu0 %v286
    %2826 = vmatpush1.msra.mxu0 %v285
    %2827 = vmatprep.subr.mxu0 %v278
    %2828 = vmatpush1.msra.mxu0 %v277
    %2829 = vmatprep.subr.mxu0 %v270
    %2830 = vmatpush1.msra.mxu0 %v269
    %2831 = vmatprep.subr.mxu0 %v262
    %2832 = vmatpush1.msra.mxu0 %v261
    %2833 = vmatprep.subr.mxu0 %v254
    %2834 = vmatpush1.msra.mxu0 %v253
    %2835 = vmatprep.subr.mxu0 %v246
    %2836 = vmatpush1.msra.mxu0 %v245
    %2837 = vmatprep.subr.mxu0 %v238
    %2838 = vmatpush1.msra.mxu0 %v237
    %2839 = vmatprep.subr.mxu0 %v230
    %2840 = vmatpush1.msra.mxu0 %v229
    %2841 = vmatprep.subr.mxu0 %v222
    %2842 = vmatpush1.msra.mxu0 %v221
    %2843 = vmatprep.subr.mxu0 %v214
    %2844 = vmatpush1.msra.mxu0 %v213
    %2845 = vmatprep.subr.mxu0 %v206
    %2846 = vmatpush1.msra.mxu0 %v205
    %2847 = vmatprep.subr.mxu0 %v198
    %2848 = vmatpush1.msra.mxu0 %v197
    %2849 = vmatprep.subr.mxu0 0.0
    %2850 = vmatpush2.msra.mxu0 0.0
    %2851 = vmatprep.subr.mxu0 0.0
    %2852 = vmatpush2.msra.mxu0 0.0
    %2853 = vmatprep.subr.mxu0 0.0
    %2854 = vmatpush2.msra.mxu0 0.0
    %2855 = vmatprep.subr.mxu0 0.0
    %2856 = vmatpush2.msra.mxu0 0.0
    %2857 = vmatprep.subr.mxu0 0.0
    %2858 = vmatpush2.msra.mxu0 0.0
    %2859 = vmatprep.subr.mxu0 0.0
    %2860 = vmatpush2.msra.mxu0 0.0
    %2861 = vmatprep.subr.mxu0 0.0
    %2862 = vmatpush2.msra.mxu0 0.0
    %2863 = vmatprep.subr.mxu0 0.0
    %2864 = vmatpush2.msra.mxu0 0.0
    %2865 = vmatprep.subr.mxu0 0.0
    %2866 = vmatpush2.msra.mxu0 0.0
    %2867 = vmatprep.subr.mxu0 0.0
    %2868 = vmatpush2.msra.mxu0 0.0
    %2869 = vmatprep.subr.mxu0 0.0
    %2870 = vmatpush2.msra.mxu0 0.0
    %2871 = vmatprep.subr.mxu0 0.0
    %2872 = vmatpush2.msra.mxu0 0.0
    %2873 = vmatprep.subr.mxu0 0.0
    %2874 = vmatpush2.msra.mxu0 0.0
    %2875 = vmatprep.subr.mxu0 0.0
    %2876 = vmatpush2.msra.mxu0 0.0
    %2877 = vmatprep.subr.mxu0 0.0
    %2878 = vmatpush2.msra.mxu0 0.0
    %2879 = vmatprep.subr.mxu0 0.0
    %2880 = vmatpush2.msra.mxu0 0.0
    %2881 = vmatprep.mubr.f32.mxu0 0.0
    %2882 = vmatmul.mubr.f32.gmra.mxu0 %v2745
    %v2883 = vpop.f32.mrf.mxu0
    %v2884 = vadd.f32 %v668, %v2883
    %v2885 = vpop.f32.mrf.mxu0
    %v2886 = vadd.f32 %v672, %v2885
    %2887 = vdwg.mxu0
    %2888 = vmatprep.subr.mxu0 %v320
    %2889 = vmatpush1.msra.mxu0 %v319
    %2890 = vmatprep.subr.mxu0 %v312
    %2891 = vmatpush1.msra.mxu0 %v311
    %2892 = vmatprep.subr.mxu0 %v304
    %2893 = vmatpush1.msra.mxu0 %v303
    %2894 = vmatprep.subr.mxu0 %v296
    %2895 = vmatpush1.msra.mxu0 %v295
    %2896 = vmatprep.subr.mxu0 %v288
    %2897 = vmatpush1.msra.mxu0 %v287
    %2898 = vmatprep.subr.mxu0 %v280
    %2899 = vmatpush1.msra.mxu0 %v279
    %2900 = vmatprep.subr.mxu0 %v272
    %2901 = vmatpush1.msra.mxu0 %v271
    %2902 = vmatprep.subr.mxu0 %v264
    %2903 = vmatpush1.msra.mxu0 %v263
    %2904 = vmatprep.subr.mxu0 %v256
    %2905 = vmatpush1.msra.mxu0 %v255
    %2906 = vmatprep.subr.mxu0 %v248
    %2907 = vmatpush1.msra.mxu0 %v247
    %2908 = vmatprep.subr.mxu0 %v240
    %2909 = vmatpush1.msra.mxu0 %v239
    %2910 = vmatprep.subr.mxu0 %v232
    %2911 = vmatpush1.msra.mxu0 %v231
    %2912 = vmatprep.subr.mxu0 %v224
    %2913 = vmatpush1.msra.mxu0 %v223
    %2914 = vmatprep.subr.mxu0 %v216
    %2915 = vmatpush1.msra.mxu0 %v215
    %2916 = vmatprep.subr.mxu0 %v208
    %2917 = vmatpush1.msra.mxu0 %v207
    %2918 = vmatprep.subr.mxu0 %v200
    %2919 = vmatpush1.msra.mxu0 %v199
    %2920 = vmatprep.subr.mxu0 0.0
    %2921 = vmatpush2.msra.mxu0 0.0
    %2922 = vmatprep.subr.mxu0 0.0
    %2923 = vmatpush2.msra.mxu0 0.0
    %2924 = vmatprep.subr.mxu0 0.0
    %2925 = vmatpush2.msra.mxu0 0.0
    %2926 = vmatprep.subr.mxu0 0.0
    %2927 = vmatpush2.msra.mxu0 0.0
    %2928 = vmatprep.subr.mxu0 0.0
    %2929 = vmatpush2.msra.mxu0 0.0
    %2930 = vmatprep.subr.mxu0 0.0
    %2931 = vmatpush2.msra.mxu0 0.0
    %2932 = vmatprep.subr.mxu0 0.0
    %2933 = vmatpush2.msra.mxu0 0.0
    %2934 = vmatprep.subr.mxu0 0.0
    %2935 = vmatpush2.msra.mxu0 0.0
    %2936 = vmatprep.subr.mxu0 0.0
    %2937 = vmatpush2.msra.mxu0 0.0
    %2938 = vmatprep.subr.mxu0 0.0
    %2939 = vmatpush2.msra.mxu0 0.0
    %2940 = vmatprep.subr.mxu0 0.0
    %2941 = vmatpush2.msra.mxu0 0.0
    %2942 = vmatprep.subr.mxu0 0.0
    %2943 = vmatpush2.msra.mxu0 0.0
    %2944 = vmatprep.subr.mxu0 0.0
    %2945 = vmatpush2.msra.mxu0 0.0
    %2946 = vmatprep.subr.mxu0 0.0
    %2947 = vmatpush2.msra.mxu0 0.0
    %2948 = vmatprep.subr.mxu0 0.0
    %2949 = vmatpush2.msra.mxu0 0.0
    %2950 = vmatprep.subr.mxu0 0.0
    %2951 = vmatpush2.msra.mxu0 0.0
    %2952 = vmatprep.mubr.f32.mxu0 0.0
    %2953 = vmatmul.mubr.f32.gmra.mxu0 %v2745
    %v2954 = vpop.f32.mrf.mxu0
    %v2955 = vadd.f32 %v676, %v2954
    %v2956 = vpop.f32.mrf.mxu0
    %v2957 = vadd.f32 %v680, %v2956
    %2958 = vdwg.mxu0
    %2959 = vmatprep.subr.mxu0 %v322
    %2960 = vmatpush1.msra.mxu0 %v321
    %2961 = vmatprep.subr.mxu0 %v314
    %2962 = vmatpush1.msra.mxu0 %v313
    %2963 = vmatprep.subr.mxu0 %v306
    %2964 = vmatpush1.msra.mxu0 %v305
    %2965 = vmatprep.subr.mxu0 %v298
    %2966 = vmatpush1.msra.mxu0 %v297
    %2967 = vmatprep.subr.mxu0 %v290
    %2968 = vmatpush1.msra.mxu0 %v289
    %2969 = vmatprep.subr.mxu0 %v282
    %2970 = vmatpush1.msra.mxu0 %v281
    %2971 = vmatprep.subr.mxu0 %v274
    %2972 = vmatpush1.msra.mxu0 %v273
    %2973 = vmatprep.subr.mxu0 %v266
    %2974 = vmatpush1.msra.mxu0 %v265
    %2975 = vmatprep.subr.mxu0 %v258
    %2976 = vmatpush1.msra.mxu0 %v257
    %2977 = vmatprep.subr.mxu0 %v250
    %2978 = vmatpush1.msra.mxu0 %v249
    %2979 = vmatprep.subr.mxu0 %v242
    %2980 = vmatpush1.msra.mxu0 %v241
    %2981 = vmatprep.subr.mxu0 %v234
    %2982 = vmatpush1.msra.mxu0 %v233
    %2983 = vmatprep.subr.mxu0 %v226
    %2984 = vmatpush1.msra.mxu0 %v225
    %2985 = vmatprep.subr.mxu0 %v218
    %2986 = vmatpush1.msra.mxu0 %v217
    %2987 = vmatprep.subr.mxu0 %v210
    %2988 = vmatpush1.msra.mxu0 %v209
    %2989 = vmatprep.subr.mxu0 %v202
    %2990 = vmatpush1.msra.mxu0 %v201
    %2991 = vmatprep.subr.mxu0 0.0
    %2992 = vmatpush2.msra.mxu0 0.0
    %2993 = vmatprep.subr.mxu0 0.0
    %2994 = vmatpush2.msra.mxu0 0.0
    %2995 = vmatprep.subr.mxu0 0.0
    %2996 = vmatpush2.msra.mxu0 0.0
    %2997 = vmatprep.subr.mxu0 0.0
    %2998 = vmatpush2.msra.mxu0 0.0
    %2999 = vmatprep.subr.mxu0 0.0
    %3000 = vmatpush2.msra.mxu0 0.0
    %3001 = vmatprep.subr.mxu0 0.0
    %3002 = vmatpush2.msra.mxu0 0.0
    %3003 = vmatprep.subr.mxu0 0.0
    %3004 = vmatpush2.msra.mxu0 0.0
    %3005 = vmatprep.subr.mxu0 0.0
    %3006 = vmatpush2.msra.mxu0 0.0
    %3007 = vmatprep.subr.mxu0 0.0
    %3008 = vmatpush2.msra.mxu0 0.0
    %3009 = vmatprep.subr.mxu0 0.0
    %3010 = vmatpush2.msra.mxu0 0.0
    %3011 = vmatprep.subr.mxu0 0.0
    %3012 = vmatpush2.msra.mxu0 0.0
    %3013 = vmatprep.subr.mxu0 0.0
    %3014 = vmatpush2.msra.mxu0 0.0
    %3015 = vmatprep.subr.mxu0 0.0
    %3016 = vmatpush2.msra.mxu0 0.0
    %3017 = vmatprep.subr.mxu0 0.0
    %3018 = vmatpush2.msra.mxu0 0.0
    %3019 = vmatprep.subr.mxu0 0.0
    %3020 = vmatpush2.msra.mxu0 0.0
    %3021 = vmatprep.subr.mxu0 0.0
    %3022 = vmatpush2.msra.mxu0 0.0
    %3023 = vmatprep.mubr.f32.mxu0 0.0
    %3024 = vmatmul.mubr.f32.gmra.mxu0 %v2745
    %v3025 = vpop.f32.mrf.mxu0
    %v3026 = vadd.f32 %v684, %v3025
    %v3027 = vpop.f32.mrf.mxu0
    %v3028 = vadd.f32 %v688, %v3027
    %3029 = vdwg.mxu0
    %s3030 = sld [smem:[#allocation2 + $0x200]]
    %s3031 = sld [smem:[#allocation2 + $0x201]]
    %v3032 = vstv %s3031
    %v3033 = vmul.f32 %v3032, %v2813
    %v3034 = vmul.f32 %v3032, %v2815
    %v3035 = vmul.f32 %v3032, %v2884
    %v3036 = vmul.f32 %v3032, %v2886
    %v3037 = vmul.f32 %v3032, %v2955
    %v3038 = vmul.f32 %v3032, %v2957
    %v3039 = vmul.f32 %v3032, %v3026
    %v3040 = vmul.f32 %v3032, %v3028
    %v3049 = vcombine.low %v3033, %v3034
    %v3050 = vcombine.low %v3035, %v3036
    %v3052 = vunpack.c.l.s4 1983009808
    %v3053 = vunpack.c.0.s8 %v3052
    %v3054 = vlaneseq
    %v3055 = vshrl.u32 %v3054, 7
    %v3056 = vsub.s32 %v3053, %v3055
    %v3057 = vrot.slane %v3049, %v3056
    %v3059 = vunpack.c.l.s4 1983009808
    %v3060 = vunpack.c.0.s8 %v3059
    %v3061 = vlaneseq
    %v3062 = vshrl.u32 %v3061, 7
    %v3063 = vsub.s32 %v3060, %v3062
    %v3064 = vrot.slane %v3050, %v3063
    %v3065 = vcombine.low %v3057, %v3064
    %v3066 = vcombine.low %v3037, %v3038
    %v3067 = vcombine.low %v3039, %v3040
    %v3069 = vunpack.c.l.s4 1983009808
    %v3070 = vunpack.c.0.s8 %v3069
    %v3071 = vlaneseq
    %v3072 = vshrl.u32 %v3071, 7
    %v3073 = vsub.s32 %v3070, %v3072
    %v3074 = vrot.slane %v3066, %v3073
    %v3076 = vunpack.c.l.s4 1983009808
    %v3077 = vunpack.c.0.s8 %v3076
    %v3078 = vlaneseq
    %v3079 = vshrl.u32 %v3078, 7
    %v3080 = vsub.s32 %v3077, %v3079
    %v3081 = vrot.slane %v3067, %v3080
    %v3082 = vcombine.low %v3074, %v3081
    %v3085 = vsub.f32 %v2414, %v3065
    %v3086 = vsub.f32 %v2415, %v3082
    %v3087 = vstv %s3030
    %v3088 = vmul.f32 %v3087, %v3085
    %v3089 = vmul.f32 %v3087, %v3086
    %s3090 = sld [smem:[#allocation2 + $0x202]]
    %s3091 = scalar_lea.vmem %s2, 64
    %v3092 = vld [vmem:[%s3091] sm:$0xff]
    %v3093 = vld [vmem:[%s3091 + $0x8] sm:$0xff]
    %v3094 = vstv %s3090
    %v3095 = vmul.f32 %v3094, %v3092
    %v3096 = vmul.f32 %v3094, %v3093
    %v3097 = vadd.f32 %v3088, %v3095
    %v3098 = vadd.f32 %v3089, %v3096
    %v3099 = vld [vmem:[%s3 + $0x3] sm:$0x1]
    %v3100 = vlaneseq
    %v3101 = vshrl.u32 %v3100, 7
    %v3102 = vsub.s32 0, %v3101
    %v3103 = vrot.slane %v3099, %v3102
    %v3106 = vcombine.high %v3097, %v3097
    %v3108 = vunpack.c.l.s4 1983009808
    %v3109 = vunpack.c.0.s8 %v3108
    %v3110 = vlaneseq
    %v3111 = vshrl.u32 %v3110, 7
    %v3112 = vsub.s32 %v3109, %v3111
    %v3113 = vrot.slane %v3097, %v3112
    %v3115 = vunpack.c.l.s4 1983009808
    %v3116 = vunpack.c.0.s8 %v3115
    %v3117 = vlaneseq
    %v3118 = vshrl.u32 %v3117, 7
    %v3119 = vsub.s32 %v3116, %v3118
    %v3120 = vrot.slane %v3106, %v3119
    %v3121 = vcombine.high %v3113, %v3113
    %v3122 = vcombine.high %v3120, %v3120
    %v3123 = vcombine.high %v3098, %v3098
    %v3125 = vunpack.c.l.s4 1983009808
    %v3126 = vunpack.c.0.s8 %v3125
    %v3127 = vlaneseq
    %v3128 = vshrl.u32 %v3127, 7
    %v3129 = vsub.s32 %v3126, %v3128
    %v3130 = vrot.slane %v3098, %v3129
    %v3132 = vunpack.c.l.s4 1983009808
    %v3133 = vunpack.c.0.s8 %v3132
    %v3134 = vlaneseq
    %v3135 = vshrl.u32 %v3134, 7
    %v3136 = vsub.s32 %v3133, %v3135
    %v3137 = vrot.slane %v3123, %v3136
    %v3138 = vcombine.high %v3130, %v3130
    %v3139 = vcombine.high %v3137, %v3137
    %3148 = vmatprep.subr.mxu0 0.0
    %3149 = vmatpush1.msra.mxu0 %v82
    %3150 = vmatprep.subr.mxu0 0.0
    %3151 = vmatpush1.msra.mxu0 %v81
    %3152 = vmatprep.subr.mxu0 0.0
    %3153 = vmatpush1.msra.mxu0 %v80
    %3154 = vmatprep.subr.mxu0 0.0
    %3155 = vmatpush1.msra.mxu0 %v79
    %3156 = vmatprep.subr.mxu0 0.0
    %3157 = vmatpush1.msra.mxu0 %v78
    %3158 = vmatprep.subr.mxu0 0.0
    %3159 = vmatpush1.msra.mxu0 %v77
    %3160 = vmatprep.subr.mxu0 0.0
    %3161 = vmatpush1.msra.mxu0 %v76
    %3162 = vmatprep.subr.mxu0 0.0
    %3163 = vmatpush1.msra.mxu0 %v75
    %3164 = vmatprep.subr.mxu0 0.0
    %3165 = vmatpush1.msra.mxu0 %v74
    %3166 = vmatprep.subr.mxu0 0.0
    %3167 = vmatpush1.msra.mxu0 %v73
    %3168 = vmatprep.subr.mxu0 0.0
    %3169 = vmatpush1.msra.mxu0 %v72
    %3170 = vmatprep.subr.mxu0 0.0
    %3171 = vmatpush1.msra.mxu0 %v71
    %3172 = vmatprep.subr.mxu0 0.0
    %3173 = vmatpush1.msra.mxu0 %v70
    %3174 = vmatprep.subr.mxu0 0.0
    %3175 = vmatpush1.msra.mxu0 %v69
    %3176 = vmatprep.subr.mxu0 0.0
    %3177 = vmatpush1.msra.mxu0 %v68
    %3178 = vmatprep.subr.mxu0 0.0
    %3179 = vmatpush1.msra.mxu0 %v67
    %3180 = vmatprep.subr.mxu0 0.0
    %3181 = vmatpush2.msra.mxu0 %v98
    %3182 = vmatprep.subr.mxu0 0.0
    %3183 = vmatpush2.msra.mxu0 %v97
    %3184 = vmatprep.subr.mxu0 0.0
    %3185 = vmatpush2.msra.mxu0 %v96
    %3186 = vmatprep.subr.mxu0 0.0
    %3187 = vmatpush2.msra.mxu0 %v95
    %3188 = vmatprep.subr.mxu0 0.0
    %3189 = vmatpush2.msra.mxu0 %v94
    %3190 = vmatprep.subr.mxu0 0.0
    %3191 = vmatpush2.msra.mxu0 %v93
    %3192 = vmatprep.subr.mxu0 0.0
    %3193 = vmatpush2.msra.mxu0 %v92
    %3194 = vmatprep.subr.mxu0 0.0
    %3195 = vmatpush2.msra.mxu0 %v91
    %3196 = vmatprep.subr.mxu0 0.0
    %3197 = vmatpush2.msra.mxu0 %v90
    %3198 = vmatprep.subr.mxu0 0.0
    %3199 = vmatpush2.msra.mxu0 %v89
    %3200 = vmatprep.subr.mxu0 0.0
    %3201 = vmatpush2.msra.mxu0 %v88
    %3202 = vmatprep.subr.mxu0 0.0
    %3203 = vmatpush2.msra.mxu0 %v87
    %3204 = vmatprep.subr.mxu0 0.0
    %3205 = vmatpush2.msra.mxu0 %v86
    %3206 = vmatprep.subr.mxu0 0.0
    %3207 = vmatpush2.msra.mxu0 %v85
    %3208 = vmatprep.subr.mxu0 0.0
    %3209 = vmatpush2.msra.mxu0 %v84
    %3210 = vmatprep.subr.mxu0 0.0
    %3211 = vmatpush2.msra.mxu0 %v83
    %3212 = vmatprep.mubr.f32.mxu0 %v3121
    %3213 = vmatmul.mubr.f32.gmra.mxu0 %v3113
    %v3214 = vpop.f32.mrf.mxu0
    %v3215 = vadd.f32 %v3103, %v3214
    %v3216 = vpop.f32.mrf.mxu0
    %3217 = vdwg.mxu0
    %3218 = vmatprep.subr.mxu0 0.0
    %3219 = vmatpush1.msra.mxu0 %v114
    %3220 = vmatprep.subr.mxu0 0.0
    %3221 = vmatpush1.msra.mxu0 %v113
    %3222 = vmatprep.subr.mxu0 0.0
    %3223 = vmatpush1.msra.mxu0 %v112
    %3224 = vmatprep.subr.mxu0 0.0
    %3225 = vmatpush1.msra.mxu0 %v111
    %3226 = vmatprep.subr.mxu0 0.0
    %3227 = vmatpush1.msra.mxu0 %v110
    %3228 = vmatprep.subr.mxu0 0.0
    %3229 = vmatpush1.msra.mxu0 %v109
    %3230 = vmatprep.subr.mxu0 0.0
    %3231 = vmatpush1.msra.mxu0 %v108
    %3232 = vmatprep.subr.mxu0 0.0
    %3233 = vmatpush1.msra.mxu0 %v107
    %3234 = vmatprep.subr.mxu0 0.0
    %3235 = vmatpush1.msra.mxu0 %v106
    %3236 = vmatprep.subr.mxu0 0.0
    %3237 = vmatpush1.msra.mxu0 %v105
    %3238 = vmatprep.subr.mxu0 0.0
    %3239 = vmatpush1.msra.mxu0 %v104
    %3240 = vmatprep.subr.mxu0 0.0
    %3241 = vmatpush1.msra.mxu0 %v103
    %3242 = vmatprep.subr.mxu0 0.0
    %3243 = vmatpush1.msra.mxu0 %v102
    %3244 = vmatprep.subr.mxu0 0.0
    %3245 = vmatpush1.msra.mxu0 %v101
    %3246 = vmatprep.subr.mxu0 0.0
    %3247 = vmatpush1.msra.mxu0 %v100
    %3248 = vmatprep.subr.mxu0 0.0
    %3249 = vmatpush1.msra.mxu0 %v99
    %3250 = vmatprep.subr.mxu0 0.0
    %3251 = vmatpush2.msra.mxu0 %v130
    %3252 = vmatprep.subr.mxu0 0.0
    %3253 = vmatpush2.msra.mxu0 %v129
    %3254 = vmatprep.subr.mxu0 0.0
    %3255 = vmatpush2.msra.mxu0 %v128
    %3256 = vmatprep.subr.mxu0 0.0
    %3257 = vmatpush2.msra.mxu0 %v127
    %3258 = vmatprep.subr.mxu0 0.0
    %3259 = vmatpush2.msra.mxu0 %v126
    %3260 = vmatprep.subr.mxu0 0.0
    %3261 = vmatpush2.msra.mxu0 %v125
    %3262 = vmatprep.subr.mxu0 0.0
    %3263 = vmatpush2.msra.mxu0 %v124
    %3264 = vmatprep.subr.mxu0 0.0
    %3265 = vmatpush2.msra.mxu0 %v123
    %3266 = vmatprep.subr.mxu0 0.0
    %3267 = vmatpush2.msra.mxu0 %v122
    %3268 = vmatprep.subr.mxu0 0.0
    %3269 = vmatpush2.msra.mxu0 %v121
    %3270 = vmatprep.subr.mxu0 0.0
    %3271 = vmatpush2.msra.mxu0 %v120
    %3272 = vmatprep.subr.mxu0 0.0
    %3273 = vmatpush2.msra.mxu0 %v119
    %3274 = vmatprep.subr.mxu0 0.0
    %3275 = vmatpush2.msra.mxu0 %v118
    %3276 = vmatprep.subr.mxu0 0.0
    %3277 = vmatpush2.msra.mxu0 %v117
    %3278 = vmatprep.subr.mxu0 0.0
    %3279 = vmatpush2.msra.mxu0 %v116
    %3280 = vmatprep.subr.mxu0 0.0
    %3281 = vmatpush2.msra.mxu0 %v115
    %3282 = vmatprep.mubr.f32.mxu0 %v3122
    %3283 = vmatmul.mubr.f32.gmra.mxu0 %v3120
    %v3284 = vpop.f32.mrf.mxu0
    %v3285 = vadd.f32 %v3215, %v3284
    %v3286 = vpop.f32.mrf.mxu0
    %3287 = vdwg.mxu0
    %3288 = vmatprep.subr.mxu0 0.0
    %3289 = vmatpush1.msra.mxu0 %v146
    %3290 = vmatprep.subr.mxu0 0.0
    %3291 = vmatpush1.msra.mxu0 %v145
    %3292 = vmatprep.subr.mxu0 0.0
    %3293 = vmatpush1.msra.mxu0 %v144
    %3294 = vmatprep.subr.mxu0 0.0
    %3295 = vmatpush1.msra.mxu0 %v143
    %3296 = vmatprep.subr.mxu0 0.0
    %3297 = vmatpush1.msra.mxu0 %v142
    %3298 = vmatprep.subr.mxu0 0.0
    %3299 = vmatpush1.msra.mxu0 %v141
    %3300 = vmatprep.subr.mxu0 0.0
    %3301 = vmatpush1.msra.mxu0 %v140
    %3302 = vmatprep.subr.mxu0 0.0
    %3303 = vmatpush1.msra.mxu0 %v139
    %3304 = vmatprep.subr.mxu0 0.0
    %3305 = vmatpush1.msra.mxu0 %v138
    %3306 = vmatprep.subr.mxu0 0.0
    %3307 = vmatpush1.msra.mxu0 %v137
    %3308 = vmatprep.subr.mxu0 0.0
    %3309 = vmatpush1.msra.mxu0 %v136
    %3310 = vmatprep.subr.mxu0 0.0
    %3311 = vmatpush1.msra.mxu0 %v135
    %3312 = vmatprep.subr.mxu0 0.0
    %3313 = vmatpush1.msra.mxu0 %v134
    %3314 = vmatprep.subr.mxu0 0.0
    %3315 = vmatpush1.msra.mxu0 %v133
    %3316 = vmatprep.subr.mxu0 0.0
    %3317 = vmatpush1.msra.mxu0 %v132
    %3318 = vmatprep.subr.mxu0 0.0
    %3319 = vmatpush1.msra.mxu0 %v131
    %3320 = vmatprep.subr.mxu0 0.0
    %3321 = vmatpush2.msra.mxu0 %v162
    %3322 = vmatprep.subr.mxu0 0.0
    %3323 = vmatpush2.msra.mxu0 %v161
    %3324 = vmatprep.subr.mxu0 0.0
    %3325 = vmatpush2.msra.mxu0 %v160
    %3326 = vmatprep.subr.mxu0 0.0
    %3327 = vmatpush2.msra.mxu0 %v159
    %3328 = vmatprep.subr.mxu0 0.0
    %3329 = vmatpush2.msra.mxu0 %v158
    %3330 = vmatprep.subr.mxu0 0.0
    %3331 = vmatpush2.msra.mxu0 %v157
    %3332 = vmatprep.subr.mxu0 0.0
    %3333 = vmatpush2.msra.mxu0 %v156
    %3334 = vmatprep.subr.mxu0 0.0
    %3335 = vmatpush2.msra.mxu0 %v155
    %3336 = vmatprep.subr.mxu0 0.0
    %3337 = vmatpush2.msra.mxu0 %v154
    %3338 = vmatprep.subr.mxu0 0.0
    %3339 = vmatpush2.msra.mxu0 %v153
    %3340 = vmatprep.subr.mxu0 0.0
    %3341 = vmatpush2.msra.mxu0 %v152
    %3342 = vmatprep.subr.mxu0 0.0
    %3343 = vmatpush2.msra.mxu0 %v151
    %3344 = vmatprep.subr.mxu0 0.0
    %3345 = vmatpush2.msra.mxu0 %v150
    %3346 = vmatprep.subr.mxu0 0.0
    %3347 = vmatpush2.msra.mxu0 %v149
    %3348 = vmatprep.subr.mxu0 0.0
    %3349 = vmatpush2.msra.mxu0 %v148
    %3350 = vmatprep.subr.mxu0 0.0
    %3351 = vmatpush2.msra.mxu0 %v147
    %3352 = vmatprep.mubr.f32.mxu0 %v3138
    %3353 = vmatmul.mubr.f32.gmra.mxu0 %v3130
    %v3354 = vpop.f32.mrf.mxu0
    %v3355 = vadd.f32 %v3285, %v3354
    %v3356 = vpop.f32.mrf.mxu0
    %3357 = vdwg.mxu0
    %3358 = vmatprep.subr.mxu0 0.0
    %3359 = vmatpush1.msra.mxu0 %v178
    %3360 = vmatprep.subr.mxu0 0.0
    %3361 = vmatpush1.msra.mxu0 %v177
    %3362 = vmatprep.subr.mxu0 0.0
    %3363 = vmatpush1.msra.mxu0 %v176
    %3364 = vmatprep.subr.mxu0 0.0
    %3365 = vmatpush1.msra.mxu0 %v175
    %3366 = vmatprep.subr.mxu0 0.0
    %3367 = vmatpush1.msra.mxu0 %v174
    %3368 = vmatprep.subr.mxu0 0.0
    %3369 = vmatpush1.msra.mxu0 %v173
    %3370 = vmatprep.subr.mxu0 0.0
    %3371 = vmatpush1.msra.mxu0 %v172
    %3372 = vmatprep.subr.mxu0 0.0
    %3373 = vmatpush1.msra.mxu0 %v171
    %3374 = vmatprep.subr.mxu0 0.0
    %3375 = vmatpush1.msra.mxu0 %v170
    %3376 = vmatprep.subr.mxu0 0.0
    %3377 = vmatpush1.msra.mxu0 %v169
    %3378 = vmatprep.subr.mxu0 0.0
    %3379 = vmatpush1.msra.mxu0 %v168
    %3380 = vmatprep.subr.mxu0 0.0
    %3381 = vmatpush1.msra.mxu0 %v167
    %3382 = vmatprep.subr.mxu0 0.0
    %3383 = vmatpush1.msra.mxu0 %v166
    %3384 = vmatprep.subr.mxu0 0.0
    %3385 = vmatpush1.msra.mxu0 %v165
    %3386 = vmatprep.subr.mxu0 0.0
    %3387 = vmatpush1.msra.mxu0 %v164
    %3388 = vmatprep.subr.mxu0 0.0
    %3389 = vmatpush1.msra.mxu0 %v163
    %3390 = vmatprep.subr.mxu0 0.0
    %3391 = vmatpush2.msra.mxu0 %v194
    %3392 = vmatprep.subr.mxu0 0.0
    %3393 = vmatpush2.msra.mxu0 %v193
    %3394 = vmatprep.subr.mxu0 0.0
    %3395 = vmatpush2.msra.mxu0 %v192
    %3396 = vmatprep.subr.mxu0 0.0
    %3397 = vmatpush2.msra.mxu0 %v191
    %3398 = vmatprep.subr.mxu0 0.0
    %3399 = vmatpush2.msra.mxu0 %v190
    %3400 = vmatprep.subr.mxu0 0.0
    %3401 = vmatpush2.msra.mxu0 %v189
    %3402 = vmatprep.subr.mxu0 0.0
    %3403 = vmatpush2.msra.mxu0 %v188
    %3404 = vmatprep.subr.mxu0 0.0
    %3405 = vmatpush2.msra.mxu0 %v187
    %3406 = vmatprep.subr.mxu0 0.0
    %3407 = vmatpush2.msra.mxu0 %v186
    %3408 = vmatprep.subr.mxu0 0.0
    %3409 = vmatpush2.msra.mxu0 %v185
    %3410 = vmatprep.subr.mxu0 0.0
    %3411 = vmatpush2.msra.mxu0 %v184
    %3412 = vmatprep.subr.mxu0 0.0
    %3413 = vmatpush2.msra.mxu0 %v183
    %3414 = vmatprep.subr.mxu0 0.0
    %3415 = vmatpush2.msra.mxu0 %v182
    %3416 = vmatprep.subr.mxu0 0.0
    %3417 = vmatpush2.msra.mxu0 %v181
    %3418 = vmatprep.subr.mxu0 0.0
    %3419 = vmatpush2.msra.mxu0 %v180
    %3420 = vmatprep.subr.mxu0 0.0
    %3421 = vmatpush2.msra.mxu0 %v179
    %3422 = vmatprep.mubr.f32.mxu0 %v3139
    %3423 = vmatmul.mubr.f32.gmra.mxu0 %v3137
    %v3424 = vpop.f32.mrf.mxu0
    %v3425 = vadd.f32 %v3355, %v3424
    %v3426 = vpop.f32.mrf.mxu0
    %3427 = vdwg.mxu0
    %v3428 = vmax.f32 %v3425, 0.0
    %3429 = vmatprep.subr.mxu0 %v316
    %3430 = vmatpush1.msra.mxu0 %v315
    %3431 = vmatprep.subr.mxu0 %v308
    %3432 = vmatpush1.msra.mxu0 %v307
    %3433 = vmatprep.subr.mxu0 %v300
    %3434 = vmatpush1.msra.mxu0 %v299
    %3435 = vmatprep.subr.mxu0 %v292
    %3436 = vmatpush1.msra.mxu0 %v291
    %3437 = vmatprep.subr.mxu0 %v284
    %3438 = vmatpush1.msra.mxu0 %v283
    %3439 = vmatprep.subr.mxu0 %v276
    %3440 = vmatpush1.msra.mxu0 %v275
    %3441 = vmatprep.subr.mxu0 %v268
    %3442 = vmatpush1.msra.mxu0 %v267
    %3443 = vmatprep.subr.mxu0 %v260
    %3444 = vmatpush1.msra.mxu0 %v259
    %3445 = vmatprep.subr.mxu0 %v252
    %3446 = vmatpush1.msra.mxu0 %v251
    %3447 = vmatprep.subr.mxu0 %v244
    %3448 = vmatpush1.msra.mxu0 %v243
    %3449 = vmatprep.subr.mxu0 %v236
    %3450 = vmatpush1.msra.mxu0 %v235
    %3451 = vmatprep.subr.mxu0 %v228
    %3452 = vmatpush1.msra.mxu0 %v227
    %3453 = vmatprep.subr.mxu0 %v220
    %3454 = vmatpush1.msra.mxu0 %v219
    %3455 = vmatprep.subr.mxu0 %v212
    %3456 = vmatpush1.msra.mxu0 %v211
    %3457 = vmatprep.subr.mxu0 %v204
    %3458 = vmatpush1.msra.mxu0 %v203
    %3459 = vmatprep.subr.mxu0 %v196
    %3460 = vmatpush1.msra.mxu0 %v195
    %3461 = vmatprep.subr.mxu0 0.0
    %3462 = vmatpush2.msra.mxu0 0.0
    %3463 = vmatprep.subr.mxu0 0.0
    %3464 = vmatpush2.msra.mxu0 0.0
    %3465 = vmatprep.subr.mxu0 0.0
    %3466 = vmatpush2.msra.mxu0 0.0
    %3467 = vmatprep.subr.mxu0 0.0
    %3468 = vmatpush2.msra.mxu0 0.0
    %3469 = vmatprep.subr.mxu0 0.0
    %3470 = vmatpush2.msra.mxu0 0.0
    %3471 = vmatprep.subr.mxu0 0.0
    %3472 = vmatpush2.msra.mxu0 0.0
    %3473 = vmatprep.subr.mxu0 0.0
    %3474 = vmatpush2.msra.mxu0 0.0
    %3475 = vmatprep.subr.mxu0 0.0
    %3476 = vmatpush2.msra.mxu0 0.0
    %3477 = vmatprep.subr.mxu0 0.0
    %3478 = vmatpush2.msra.mxu0 0.0
    %3479 = vmatprep.subr.mxu0 0.0
    %3480 = vmatpush2.msra.mxu0 0.0
    %3481 = vmatprep.subr.mxu0 0.0
    %3482 = vmatpush2.msra.mxu0 0.0
    %3483 = vmatprep.subr.mxu0 0.0
    %3484 = vmatpush2.msra.mxu0 0.0
    %3485 = vmatprep.subr.mxu0 0.0
    %3486 = vmatpush2.msra.mxu0 0.0
    %3487 = vmatprep.subr.mxu0 0.0
    %3488 = vmatpush2.msra.mxu0 0.0
    %3489 = vmatprep.subr.mxu0 0.0
    %3490 = vmatpush2.msra.mxu0 0.0
    %3491 = vmatprep.subr.mxu0 0.0
    %3492 = vmatpush2.msra.mxu0 0.0
    %3493 = vmatprep.mubr.f32.mxu0 0.0
    %3494 = vmatmul.mubr.f32.gmra.mxu0 %v3428
    %v3495 = vpop.f32.mrf.mxu0
    %v3496 = vadd.f32 %v660, %v3495
    %v3497 = vpop.f32.mrf.mxu0
    %v3498 = vadd.f32 %v664, %v3497
    %3499 = vdwg.mxu0
    %3500 = vmatprep.subr.mxu0 %v318
    %3501 = vmatpush1.msra.mxu0 %v317
    %3502 = vmatprep.subr.mxu0 %v310
    %3503 = vmatpush1.msra.mxu0 %v309
    %3504 = vmatprep.subr.mxu0 %v302
    %3505 = vmatpush1.msra.mxu0 %v301
    %3506 = vmatprep.subr.mxu0 %v294
    %3507 = vmatpush1.msra.mxu0 %v293
    %3508 = vmatprep.subr.mxu0 %v286
    %3509 = vmatpush1.msra.mxu0 %v285
    %3510 = vmatprep.subr.mxu0 %v278
    %3511 = vmatpush1.msra.mxu0 %v277
    %3512 = vmatprep.subr.mxu0 %v270
    %3513 = vmatpush1.msra.mxu0 %v269
    %3514 = vmatprep.subr.mxu0 %v262
    %3515 = vmatpush1.msra.mxu0 %v261
    %3516 = vmatprep.subr.mxu0 %v254
    %3517 = vmatpush1.msra.mxu0 %v253
    %3518 = vmatprep.subr.mxu0 %v246
    %3519 = vmatpush1.msra.mxu0 %v245
    %3520 = vmatprep.subr.mxu0 %v238
    %3521 = vmatpush1.msra.mxu0 %v237
    %3522 = vmatprep.subr.mxu0 %v230
    %3523 = vmatpush1.msra.mxu0 %v229
    %3524 = vmatprep.subr.mxu0 %v222
    %3525 = vmatpush1.msra.mxu0 %v221
    %3526 = vmatprep.subr.mxu0 %v214
    %3527 = vmatpush1.msra.mxu0 %v213
    %3528 = vmatprep.subr.mxu0 %v206
    %3529 = vmatpush1.msra.mxu0 %v205
    %3530 = vmatprep.subr.mxu0 %v198
    %3531 = vmatpush1.msra.mxu0 %v197
    %3532 = vmatprep.subr.mxu0 0.0
    %3533 = vmatpush2.msra.mxu0 0.0
    %3534 = vmatprep.subr.mxu0 0.0
    %3535 = vmatpush2.msra.mxu0 0.0
    %3536 = vmatprep.subr.mxu0 0.0
    %3537 = vmatpush2.msra.mxu0 0.0
    %3538 = vmatprep.subr.mxu0 0.0
    %3539 = vmatpush2.msra.mxu0 0.0
    %3540 = vmatprep.subr.mxu0 0.0
    %3541 = vmatpush2.msra.mxu0 0.0
    %3542 = vmatprep.subr.mxu0 0.0
    %3543 = vmatpush2.msra.mxu0 0.0
    %3544 = vmatprep.subr.mxu0 0.0
    %3545 = vmatpush2.msra.mxu0 0.0
    %3546 = vmatprep.subr.mxu0 0.0
    %3547 = vmatpush2.msra.mxu0 0.0
    %3548 = vmatprep.subr.mxu0 0.0
    %3549 = vmatpush2.msra.mxu0 0.0
    %3550 = vmatprep.subr.mxu0 0.0
    %3551 = vmatpush2.msra.mxu0 0.0
    %3552 = vmatprep.subr.mxu0 0.0
    %3553 = vmatpush2.msra.mxu0 0.0
    %3554 = vmatprep.subr.mxu0 0.0
    %3555 = vmatpush2.msra.mxu0 0.0
    %3556 = vmatprep.subr.mxu0 0.0
    %3557 = vmatpush2.msra.mxu0 0.0
    %3558 = vmatprep.subr.mxu0 0.0
    %3559 = vmatpush2.msra.mxu0 0.0
    %3560 = vmatprep.subr.mxu0 0.0
    %3561 = vmatpush2.msra.mxu0 0.0
    %3562 = vmatprep.subr.mxu0 0.0
    %3563 = vmatpush2.msra.mxu0 0.0
    %3564 = vmatprep.mubr.f32.mxu0 0.0
    %3565 = vmatmul.mubr.f32.gmra.mxu0 %v3428
    %v3566 = vpop.f32.mrf.mxu0
    %v3567 = vadd.f32 %v668, %v3566
    %v3568 = vpop.f32.mrf.mxu0
    %v3569 = vadd.f32 %v672, %v3568
    %3570 = vdwg.mxu0
    %3571 = vmatprep.subr.mxu0 %v320
    %3572 = vmatpush1.msra.mxu0 %v319
    %3573 = vmatprep.subr.mxu0 %v312
    %3574 = vmatpush1.msra.mxu0 %v311
    %3575 = vmatprep.subr.mxu0 %v304
    %3576 = vmatpush1.msra.mxu0 %v303
    %3577 = vmatprep.subr.mxu0 %v296
    %3578 = vmatpush1.msra.mxu0 %v295
    %3579 = vmatprep.subr.mxu0 %v288
    %3580 = vmatpush1.msra.mxu0 %v287
    %3581 = vmatprep.subr.mxu0 %v280
    %3582 = vmatpush1.msra.mxu0 %v279
    %3583 = vmatprep.subr.mxu0 %v272
    %3584 = vmatpush1.msra.mxu0 %v271
    %3585 = vmatprep.subr.mxu0 %v264
    %3586 = vmatpush1.msra.mxu0 %v263
    %3587 = vmatprep.subr.mxu0 %v256
    %3588 = vmatpush1.msra.mxu0 %v255
    %3589 = vmatprep.subr.mxu0 %v248
    %3590 = vmatpush1.msra.mxu0 %v247
    %3591 = vmatprep.subr.mxu0 %v240
    %3592 = vmatpush1.msra.mxu0 %v239
    %3593 = vmatprep.subr.mxu0 %v232
    %3594 = vmatpush1.msra.mxu0 %v231
    %3595 = vmatprep.subr.mxu0 %v224
    %3596 = vmatpush1.msra.mxu0 %v223
    %3597 = vmatprep.subr.mxu0 %v216
    %3598 = vmatpush1.msra.mxu0 %v215
    %3599 = vmatprep.subr.mxu0 %v208
    %3600 = vmatpush1.msra.mxu0 %v207
    %3601 = vmatprep.subr.mxu0 %v200
    %3602 = vmatpush1.msra.mxu0 %v199
    %3603 = vmatprep.subr.mxu0 0.0
    %3604 = vmatpush2.msra.mxu0 0.0
    %3605 = vmatprep.subr.mxu0 0.0
    %3606 = vmatpush2.msra.mxu0 0.0
    %3607 = vmatprep.subr.mxu0 0.0
    %3608 = vmatpush2.msra.mxu0 0.0
    %3609 = vmatprep.subr.mxu0 0.0
    %3610 = vmatpush2.msra.mxu0 0.0
    %3611 = vmatprep.subr.mxu0 0.0
    %3612 = vmatpush2.msra.mxu0 0.0
    %3613 = vmatprep.subr.mxu0 0.0
    %3614 = vmatpush2.msra.mxu0 0.0
    %3615 = vmatprep.subr.mxu0 0.0
    %3616 = vmatpush2.msra.mxu0 0.0
    %3617 = vmatprep.subr.mxu0 0.0
    %3618 = vmatpush2.msra.mxu0 0.0
    %3619 = vmatprep.subr.mxu0 0.0
    %3620 = vmatpush2.msra.mxu0 0.0
    %3621 = vmatprep.subr.mxu0 0.0
    %3622 = vmatpush2.msra.mxu0 0.0
    %3623 = vmatprep.subr.mxu0 0.0
    %3624 = vmatpush2.msra.mxu0 0.0
    %3625 = vmatprep.subr.mxu0 0.0
    %3626 = vmatpush2.msra.mxu0 0.0
    %3627 = vmatprep.subr.mxu0 0.0
    %3628 = vmatpush2.msra.mxu0 0.0
    %3629 = vmatprep.subr.mxu0 0.0
    %3630 = vmatpush2.msra.mxu0 0.0
    %3631 = vmatprep.subr.mxu0 0.0
    %3632 = vmatpush2.msra.mxu0 0.0
    %3633 = vmatprep.subr.mxu0 0.0
    %3634 = vmatpush2.msra.mxu0 0.0
    %3635 = vmatprep.mubr.f32.mxu0 0.0
    %3636 = vmatmul.mubr.f32.gmra.mxu0 %v3428
    %v3637 = vpop.f32.mrf.mxu0
    %v3638 = vadd.f32 %v676, %v3637
    %v3639 = vpop.f32.mrf.mxu0
    %v3640 = vadd.f32 %v680, %v3639
    %3641 = vdwg.mxu0
    %3642 = vmatprep.subr.mxu0 %v322
    %3643 = vmatpush1.msra.mxu0 %v321
    %3644 = vmatprep.subr.mxu0 %v314
    %3645 = vmatpush1.msra.mxu0 %v313
    %3646 = vmatprep.subr.mxu0 %v306
    %3647 = vmatpush1.msra.mxu0 %v305
    %3648 = vmatprep.subr.mxu0 %v298
    %3649 = vmatpush1.msra.mxu0 %v297
    %3650 = vmatprep.subr.mxu0 %v290
    %3651 = vmatpush1.msra.mxu0 %v289
    %3652 = vmatprep.subr.mxu0 %v282
    %3653 = vmatpush1.msra.mxu0 %v281
    %3654 = vmatprep.subr.mxu0 %v274
    %3655 = vmatpush1.msra.mxu0 %v273
    %3656 = vmatprep.subr.mxu0 %v266
    %3657 = vmatpush1.msra.mxu0 %v265
    %3658 = vmatprep.subr.mxu0 %v258
    %3659 = vmatpush1.msra.mxu0 %v257
    %3660 = vmatprep.subr.mxu0 %v250
    %3661 = vmatpush1.msra.mxu0 %v249
    %3662 = vmatprep.subr.mxu0 %v242
    %3663 = vmatpush1.msra.mxu0 %v241
    %3664 = vmatprep.subr.mxu0 %v234
    %3665 = vmatpush1.msra.mxu0 %v233
    %3666 = vmatprep.subr.mxu0 %v226
    %3667 = vmatpush1.msra.mxu0 %v225
    %3668 = vmatprep.subr.mxu0 %v218
    %3669 = vmatpush1.msra.mxu0 %v217
    %3670 = vmatprep.subr.mxu0 %v210
    %3671 = vmatpush1.msra.mxu0 %v209
    %3672 = vmatprep.subr.mxu0 %v202
    %3673 = vmatpush1.msra.mxu0 %v201
    %3674 = vmatprep.subr.mxu0 0.0
    %3675 = vmatpush2.msra.mxu0 0.0
    %3676 = vmatprep.subr.mxu0 0.0
    %3677 = vmatpush2.msra.mxu0 0.0
    %3678 = vmatprep.subr.mxu0 0.0
    %3679 = vmatpush2.msra.mxu0 0.0
    %3680 = vmatprep.subr.mxu0 0.0
    %3681 = vmatpush2.msra.mxu0 0.0
    %3682 = vmatprep.subr.mxu0 0.0
    %3683 = vmatpush2.msra.mxu0 0.0
    %3684 = vmatprep.subr.mxu0 0.0
    %3685 = vmatpush2.msra.mxu0 0.0
    %3686 = vmatprep.subr.mxu0 0.0
    %3687 = vmatpush2.msra.mxu0 0.0
    %3688 = vmatprep.subr.mxu0 0.0
    %3689 = vmatpush2.msra.mxu0 0.0
    %3690 = vmatprep.subr.mxu0 0.0
    %3691 = vmatpush2.msra.mxu0 0.0
    %3692 = vmatprep.subr.mxu0 0.0
    %3693 = vmatpush2.msra.mxu0 0.0
    %3694 = vmatprep.subr.mxu0 0.0
    %3695 = vmatpush2.msra.mxu0 0.0
    %3696 = vmatprep.subr.mxu0 0.0
    %3697 = vmatpush2.msra.mxu0 0.0
    %3698 = vmatprep.subr.mxu0 0.0
    %3699 = vmatpush2.msra.mxu0 0.0
    %3700 = vmatprep.subr.mxu0 0.0
    %3701 = vmatpush2.msra.mxu0 0.0
    %3702 = vmatprep.subr.mxu0 0.0
    %3703 = vmatpush2.msra.mxu0 0.0
    %3704 = vmatprep.subr.mxu0 0.0
    %3705 = vmatpush2.msra.mxu0 0.0
    %3706 = vmatprep.mubr.f32.mxu0 0.0
    %3707 = vmatmul.mubr.f32.gmra.mxu0 %v3428
    %v3708 = vpop.f32.mrf.mxu0
    %v3709 = vadd.f32 %v684, %v3708
    %v3710 = vpop.f32.mrf.mxu0
    %v3711 = vadd.f32 %v688, %v3710
    %3712 = vdwg.mxu0
    %s3713 = sld [smem:[#allocation2 + $0x180]]
    %s3714 = sld [smem:[#allocation2 + $0x181]]
    %v3715 = vstv %s3714
    %v3716 = vmul.f32 %v3715, %v3496
    %v3717 = vmul.f32 %v3715, %v3498
    %v3718 = vmul.f32 %v3715, %v3567
    %v3719 = vmul.f32 %v3715, %v3569
    %v3720 = vmul.f32 %v3715, %v3638
    %v3721 = vmul.f32 %v3715, %v3640
    %v3722 = vmul.f32 %v3715, %v3709
    %v3723 = vmul.f32 %v3715, %v3711
    %v3732 = vcombine.low %v3716, %v3717
    %v3733 = vcombine.low %v3718, %v3719
    %v3735 = vunpack.c.l.s4 1983009808
    %v3736 = vunpack.c.0.s8 %v3735
    %v3737 = vlaneseq
    %v3738 = vshrl.u32 %v3737, 7
    %v3739 = vsub.s32 %v3736, %v3738
    %v3740 = vrot.slane %v3732, %v3739
    %v3742 = vunpack.c.l.s4 1983009808
    %v3743 = vunpack.c.0.s8 %v3742
    %v3744 = vlaneseq
    %v3745 = vshrl.u32 %v3744, 7
    %v3746 = vsub.s32 %v3743, %v3745
    %v3747 = vrot.slane %v3733, %v3746
    %v3748 = vcombine.low %v3740, %v3747
    %v3749 = vcombine.low %v3720, %v3721
    %v3750 = vcombine.low %v3722, %v3723
    %v3752 = vunpack.c.l.s4 1983009808
    %v3753 = vunpack.c.0.s8 %v3752
    %v3754 = vlaneseq
    %v3755 = vshrl.u32 %v3754, 7
    %v3756 = vsub.s32 %v3753, %v3755
    %v3757 = vrot.slane %v3749, %v3756
    %v3759 = vunpack.c.l.s4 1983009808
    %v3760 = vunpack.c.0.s8 %v3759
    %v3761 = vlaneseq
    %v3762 = vshrl.u32 %v3761, 7
    %v3763 = vsub.s32 %v3760, %v3762
    %v3764 = vrot.slane %v3750, %v3763
    %v3765 = vcombine.low %v3757, %v3764
    %v3768 = vsub.f32 %v3097, %v3748
    %v3769 = vsub.f32 %v3098, %v3765
    %v3770 = vstv %s3713
    %v3771 = vmul.f32 %v3770, %v3768
    %v3772 = vmul.f32 %v3770, %v3769
    %s3773 = sld [smem:[#allocation2 + $0x182]]
    %s3774 = scalar_lea.vmem %s2, 48
    %v3775 = vld [vmem:[%s3774] sm:$0xff]
    %v3776 = vld [vmem:[%s3774 + $0x8] sm:$0xff]
    %v3777 = vstv %s3773
    %v3778 = vmul.f32 %v3777, %v3775
    %v3779 = vmul.f32 %v3777, %v3776
    %v3780 = vadd.f32 %v3771, %v3778
    %v3781 = vadd.f32 %v3772, %v3779
    %v3782 = vld [vmem:[%s3 + $0x2] sm:$0x1]
    %v3783 = vlaneseq
    %v3784 = vshrl.u32 %v3783, 7
    %v3785 = vsub.s32 0, %v3784
    %v3786 = vrot.slane %v3782, %v3785
    %v3789 = vcombine.high %v3780, %v3780
    %v3791 = vunpack.c.l.s4 1983009808
    %v3792 = vunpack.c.0.s8 %v3791
    %v3793 = vlaneseq
    %v3794 = vshrl.u32 %v3793, 7
    %v3795 = vsub.s32 %v3792, %v3794
    %v3796 = vrot.slane %v3780, %v3795
    %v3798 = vunpack.c.l.s4 1983009808
    %v3799 = vunpack.c.0.s8 %v3798
    %v3800 = vlaneseq
    %v3801 = vshrl.u32 %v3800, 7
    %v3802 = vsub.s32 %v3799, %v3801
    %v3803 = vrot.slane %v3789, %v3802
    %v3804 = vcombine.high %v3796, %v3796
    %v3805 = vcombine.high %v3803, %v3803
    %v3806 = vcombine.high %v3781, %v3781
    %v3808 = vunpack.c.l.s4 1983009808
    %v3809 = vunpack.c.0.s8 %v3808
    %v3810 = vlaneseq
    %v3811 = vshrl.u32 %v3810, 7
    %v3812 = vsub.s32 %v3809, %v3811
    %v3813 = vrot.slane %v3781, %v3812
    %v3815 = vunpack.c.l.s4 1983009808
    %v3816 = vunpack.c.0.s8 %v3815
    %v3817 = vlaneseq
    %v3818 = vshrl.u32 %v3817, 7
    %v3819 = vsub.s32 %v3816, %v3818
    %v3820 = vrot.slane %v3806, %v3819
    %v3821 = vcombine.high %v3813, %v3813
    %v3822 = vcombine.high %v3820, %v3820
    %3831 = vmatprep.subr.mxu0 0.0
    %3832 = vmatpush1.msra.mxu0 %v82
    %3833 = vmatprep.subr.mxu0 0.0
    %3834 = vmatpush1.msra.mxu0 %v81
    %3835 = vmatprep.subr.mxu0 0.0
    %3836 = vmatpush1.msra.mxu0 %v80
    %3837 = vmatprep.subr.mxu0 0.0
    %3838 = vmatpush1.msra.mxu0 %v79
    %3839 = vmatprep.subr.mxu0 0.0
    %3840 = vmatpush1.msra.mxu0 %v78
    %3841 = vmatprep.subr.mxu0 0.0
    %3842 = vmatpush1.msra.mxu0 %v77
    %3843 = vmatprep.subr.mxu0 0.0
    %3844 = vmatpush1.msra.mxu0 %v76
    %3845 = vmatprep.subr.mxu0 0.0
    %3846 = vmatpush1.msra.mxu0 %v75
    %3847 = vmatprep.subr.mxu0 0.0
    %3848 = vmatpush1.msra.mxu0 %v74
    %3849 = vmatprep.subr.mxu0 0.0
    %3850 = vmatpush1.msra.mxu0 %v73
    %3851 = vmatprep.subr.mxu0 0.0
    %3852 = vmatpush1.msra.mxu0 %v72
    %3853 = vmatprep.subr.mxu0 0.0
    %3854 = vmatpush1.msra.mxu0 %v71
    %3855 = vmatprep.subr.mxu0 0.0
    %3856 = vmatpush1.msra.mxu0 %v70
    %3857 = vmatprep.subr.mxu0 0.0
    %3858 = vmatpush1.msra.mxu0 %v69
    %3859 = vmatprep.subr.mxu0 0.0
    %3860 = vmatpush1.msra.mxu0 %v68
    %3861 = vmatprep.subr.mxu0 0.0
    %3862 = vmatpush1.msra.mxu0 %v67
    %3863 = vmatprep.subr.mxu0 0.0
    %3864 = vmatpush2.msra.mxu0 %v98
    %3865 = vmatprep.subr.mxu0 0.0
    %3866 = vmatpush2.msra.mxu0 %v97
    %3867 = vmatprep.subr.mxu0 0.0
    %3868 = vmatpush2.msra.mxu0 %v96
    %3869 = vmatprep.subr.mxu0 0.0
    %3870 = vmatpush2.msra.mxu0 %v95
    %3871 = vmatprep.subr.mxu0 0.0
    %3872 = vmatpush2.msra.mxu0 %v94
    %3873 = vmatprep.subr.mxu0 0.0
    %3874 = vmatpush2.msra.mxu0 %v93
    %3875 = vmatprep.subr.mxu0 0.0
    %3876 = vmatpush2.msra.mxu0 %v92
    %3877 = vmatprep.subr.mxu0 0.0
    %3878 = vmatpush2.msra.mxu0 %v91
    %3879 = vmatprep.subr.mxu0 0.0
    %3880 = vmatpush2.msra.mxu0 %v90
    %3881 = vmatprep.subr.mxu0 0.0
    %3882 = vmatpush2.msra.mxu0 %v89
    %3883 = vmatprep.subr.mxu0 0.0
    %3884 = vmatpush2.msra.mxu0 %v88
    %3885 = vmatprep.subr.mxu0 0.0
    %3886 = vmatpush2.msra.mxu0 %v87
    %3887 = vmatprep.subr.mxu0 0.0
    %3888 = vmatpush2.msra.mxu0 %v86
    %3889 = vmatprep.subr.mxu0 0.0
    %3890 = vmatpush2.msra.mxu0 %v85
    %3891 = vmatprep.subr.mxu0 0.0
    %3892 = vmatpush2.msra.mxu0 %v84
    %3893 = vmatprep.subr.mxu0 0.0
    %3894 = vmatpush2.msra.mxu0 %v83
    %3895 = vmatprep.mubr.f32.mxu0 %v3804
    %3896 = vmatmul.mubr.f32.gmra.mxu0 %v3796
    %v3897 = vpop.f32.mrf.mxu0
    %v3898 = vadd.f32 %v3786, %v3897
    %v3899 = vpop.f32.mrf.mxu0
    %3900 = vdwg.mxu0
    %3901 = vmatprep.subr.mxu0 0.0
    %3902 = vmatpush1.msra.mxu0 %v114
    %3903 = vmatprep.subr.mxu0 0.0
    %3904 = vmatpush1.msra.mxu0 %v113
    %3905 = vmatprep.subr.mxu0 0.0
    %3906 = vmatpush1.msra.mxu0 %v112
    %3907 = vmatprep.subr.mxu0 0.0
    %3908 = vmatpush1.msra.mxu0 %v111
    %3909 = vmatprep.subr.mxu0 0.0
    %3910 = vmatpush1.msra.mxu0 %v110
    %3911 = vmatprep.subr.mxu0 0.0
    %3912 = vmatpush1.msra.mxu0 %v109
    %3913 = vmatprep.subr.mxu0 0.0
    %3914 = vmatpush1.msra.mxu0 %v108
    %3915 = vmatprep.subr.mxu0 0.0
    %3916 = vmatpush1.msra.mxu0 %v107
    %3917 = vmatprep.subr.mxu0 0.0
    %3918 = vmatpush1.msra.mxu0 %v106
    %3919 = vmatprep.subr.mxu0 0.0
    %3920 = vmatpush1.msra.mxu0 %v105
    %3921 = vmatprep.subr.mxu0 0.0
    %3922 = vmatpush1.msra.mxu0 %v104
    %3923 = vmatprep.subr.mxu0 0.0
    %3924 = vmatpush1.msra.mxu0 %v103
    %3925 = vmatprep.subr.mxu0 0.0
    %3926 = vmatpush1.msra.mxu0 %v102
    %3927 = vmatprep.subr.mxu0 0.0
    %3928 = vmatpush1.msra.mxu0 %v101
    %3929 = vmatprep.subr.mxu0 0.0
    %3930 = vmatpush1.msra.mxu0 %v100
    %3931 = vmatprep.subr.mxu0 0.0
    %3932 = vmatpush1.msra.mxu0 %v99
    %3933 = vmatprep.subr.mxu0 0.0
    %3934 = vmatpush2.msra.mxu0 %v130
    %3935 = vmatprep.subr.mxu0 0.0
    %3936 = vmatpush2.msra.mxu0 %v129
    %3937 = vmatprep.subr.mxu0 0.0
    %3938 = vmatpush2.msra.mxu0 %v128
    %3939 = vmatprep.subr.mxu0 0.0
    %3940 = vmatpush2.msra.mxu0 %v127
    %3941 = vmatprep.subr.mxu0 0.0
    %3942 = vmatpush2.msra.mxu0 %v126
    %3943 = vmatprep.subr.mxu0 0.0
    %3944 = vmatpush2.msra.mxu0 %v125
    %3945 = vmatprep.subr.mxu0 0.0
    %3946 = vmatpush2.msra.mxu0 %v124
    %3947 = vmatprep.subr.mxu0 0.0
    %3948 = vmatpush2.msra.mxu0 %v123
    %3949 = vmatprep.subr.mxu0 0.0
    %3950 = vmatpush2.msra.mxu0 %v122
    %3951 = vmatprep.subr.mxu0 0.0
    %3952 = vmatpush2.msra.mxu0 %v121
    %3953 = vmatprep.subr.mxu0 0.0
    %3954 = vmatpush2.msra.mxu0 %v120
    %3955 = vmatprep.subr.mxu0 0.0
    %3956 = vmatpush2.msra.mxu0 %v119
    %3957 = vmatprep.subr.mxu0 0.0
    %3958 = vmatpush2.msra.mxu0 %v118
    %3959 = vmatprep.subr.mxu0 0.0
    %3960 = vmatpush2.msra.mxu0 %v117
    %3961 = vmatprep.subr.mxu0 0.0
    %3962 = vmatpush2.msra.mxu0 %v116
    %3963 = vmatprep.subr.mxu0 0.0
    %3964 = vmatpush2.msra.mxu0 %v115
    %3965 = vmatprep.mubr.f32.mxu0 %v3805
    %3966 = vmatmul.mubr.f32.gmra.mxu0 %v3803
    %v3967 = vpop.f32.mrf.mxu0
    %v3968 = vadd.f32 %v3898, %v3967
    %v3969 = vpop.f32.mrf.mxu0
    %3970 = vdwg.mxu0
    %3971 = vmatprep.subr.mxu0 0.0
    %3972 = vmatpush1.msra.mxu0 %v146
    %3973 = vmatprep.subr.mxu0 0.0
    %3974 = vmatpush1.msra.mxu0 %v145
    %3975 = vmatprep.subr.mxu0 0.0
    %3976 = vmatpush1.msra.mxu0 %v144
    %3977 = vmatprep.subr.mxu0 0.0
    %3978 = vmatpush1.msra.mxu0 %v143
    %3979 = vmatprep.subr.mxu0 0.0
    %3980 = vmatpush1.msra.mxu0 %v142
    %3981 = vmatprep.subr.mxu0 0.0
    %3982 = vmatpush1.msra.mxu0 %v141
    %3983 = vmatprep.subr.mxu0 0.0
    %3984 = vmatpush1.msra.mxu0 %v140
    %3985 = vmatprep.subr.mxu0 0.0
    %3986 = vmatpush1.msra.mxu0 %v139
    %3987 = vmatprep.subr.mxu0 0.0
    %3988 = vmatpush1.msra.mxu0 %v138
    %3989 = vmatprep.subr.mxu0 0.0
    %3990 = vmatpush1.msra.mxu0 %v137
    %3991 = vmatprep.subr.mxu0 0.0
    %3992 = vmatpush1.msra.mxu0 %v136
    %3993 = vmatprep.subr.mxu0 0.0
    %3994 = vmatpush1.msra.mxu0 %v135
    %3995 = vmatprep.subr.mxu0 0.0
    %3996 = vmatpush1.msra.mxu0 %v134
    %3997 = vmatprep.subr.mxu0 0.0
    %3998 = vmatpush1.msra.mxu0 %v133
    %3999 = vmatprep.subr.mxu0 0.0
    %4000 = vmatpush1.msra.mxu0 %v132
    %4001 = vmatprep.subr.mxu0 0.0
    %4002 = vmatpush1.msra.mxu0 %v131
    %4003 = vmatprep.subr.mxu0 0.0
    %4004 = vmatpush2.msra.mxu0 %v162
    %4005 = vmatprep.subr.mxu0 0.0
    %4006 = vmatpush2.msra.mxu0 %v161
    %4007 = vmatprep.subr.mxu0 0.0
    %4008 = vmatpush2.msra.mxu0 %v160
    %4009 = vmatprep.subr.mxu0 0.0
    %4010 = vmatpush2.msra.mxu0 %v159
    %4011 = vmatprep.subr.mxu0 0.0
    %4012 = vmatpush2.msra.mxu0 %v158
    %4013 = vmatprep.subr.mxu0 0.0
    %4014 = vmatpush2.msra.mxu0 %v157
    %4015 = vmatprep.subr.mxu0 0.0
    %4016 = vmatpush2.msra.mxu0 %v156
    %4017 = vmatprep.subr.mxu0 0.0
    %4018 = vmatpush2.msra.mxu0 %v155
    %4019 = vmatprep.subr.mxu0 0.0
    %4020 = vmatpush2.msra.mxu0 %v154
    %4021 = vmatprep.subr.mxu0 0.0
    %4022 = vmatpush2.msra.mxu0 %v153
    %4023 = vmatprep.subr.mxu0 0.0
    %4024 = vmatpush2.msra.mxu0 %v152
    %4025 = vmatprep.subr.mxu0 0.0
    %4026 = vmatpush2.msra.mxu0 %v151
    %4027 = vmatprep.subr.mxu0 0.0
    %4028 = vmatpush2.msra.mxu0 %v150
    %4029 = vmatprep.subr.mxu0 0.0
    %4030 = vmatpush2.msra.mxu0 %v149
    %4031 = vmatprep.subr.mxu0 0.0
    %4032 = vmatpush2.msra.mxu0 %v148
    %4033 = vmatprep.subr.mxu0 0.0
    %4034 = vmatpush2.msra.mxu0 %v147
    %4035 = vmatprep.mubr.f32.mxu0 %v3821
    %4036 = vmatmul.mubr.f32.gmra.mxu0 %v3813
    %v4037 = vpop.f32.mrf.mxu0
    %v4038 = vadd.f32 %v3968, %v4037
    %v4039 = vpop.f32.mrf.mxu0
    %4040 = vdwg.mxu0
    %4041 = vmatprep.subr.mxu0 0.0
    %4042 = vmatpush1.msra.mxu0 %v178
    %4043 = vmatprep.subr.mxu0 0.0
    %4044 = vmatpush1.msra.mxu0 %v177
    %4045 = vmatprep.subr.mxu0 0.0
    %4046 = vmatpush1.msra.mxu0 %v176
    %4047 = vmatprep.subr.mxu0 0.0
    %4048 = vmatpush1.msra.mxu0 %v175
    %4049 = vmatprep.subr.mxu0 0.0
    %4050 = vmatpush1.msra.mxu0 %v174
    %4051 = vmatprep.subr.mxu0 0.0
    %4052 = vmatpush1.msra.mxu0 %v173
    %4053 = vmatprep.subr.mxu0 0.0
    %4054 = vmatpush1.msra.mxu0 %v172
    %4055 = vmatprep.subr.mxu0 0.0
    %4056 = vmatpush1.msra.mxu0 %v171
    %4057 = vmatprep.subr.mxu0 0.0
    %4058 = vmatpush1.msra.mxu0 %v170
    %4059 = vmatprep.subr.mxu0 0.0
    %4060 = vmatpush1.msra.mxu0 %v169
    %4061 = vmatprep.subr.mxu0 0.0
    %4062 = vmatpush1.msra.mxu0 %v168
    %4063 = vmatprep.subr.mxu0 0.0
    %4064 = vmatpush1.msra.mxu0 %v167
    %4065 = vmatprep.subr.mxu0 0.0
    %4066 = vmatpush1.msra.mxu0 %v166
    %4067 = vmatprep.subr.mxu0 0.0
    %4068 = vmatpush1.msra.mxu0 %v165
    %4069 = vmatprep.subr.mxu0 0.0
    %4070 = vmatpush1.msra.mxu0 %v164
    %4071 = vmatprep.subr.mxu0 0.0
    %4072 = vmatpush1.msra.mxu0 %v163
    %4073 = vmatprep.subr.mxu0 0.0
    %4074 = vmatpush2.msra.mxu0 %v194
    %4075 = vmatprep.subr.mxu0 0.0
    %4076 = vmatpush2.msra.mxu0 %v193
    %4077 = vmatprep.subr.mxu0 0.0
    %4078 = vmatpush2.msra.mxu0 %v192
    %4079 = vmatprep.subr.mxu0 0.0
    %4080 = vmatpush2.msra.mxu0 %v191
    %4081 = vmatprep.subr.mxu0 0.0
    %4082 = vmatpush2.msra.mxu0 %v190
    %4083 = vmatprep.subr.mxu0 0.0
    %4084 = vmatpush2.msra.mxu0 %v189
    %4085 = vmatprep.subr.mxu0 0.0
    %4086 = vmatpush2.msra.mxu0 %v188
    %4087 = vmatprep.subr.mxu0 0.0
    %4088 = vmatpush2.msra.mxu0 %v187
    %4089 = vmatprep.subr.mxu0 0.0
    %4090 = vmatpush2.msra.mxu0 %v186
    %4091 = vmatprep.subr.mxu0 0.0
    %4092 = vmatpush2.msra.mxu0 %v185
    %4093 = vmatprep.subr.mxu0 0.0
    %4094 = vmatpush2.msra.mxu0 %v184
    %4095 = vmatprep.subr.mxu0 0.0
    %4096 = vmatpush2.msra.mxu0 %v183
    %4097 = vmatprep.subr.mxu0 0.0
    %4098 = vmatpush2.msra.mxu0 %v182
    %4099 = vmatprep.subr.mxu0 0.0
    %4100 = vmatpush2.msra.mxu0 %v181
    %4101 = vmatprep.subr.mxu0 0.0
    %4102 = vmatpush2.msra.mxu0 %v180
    %4103 = vmatprep.subr.mxu0 0.0
    %4104 = vmatpush2.msra.mxu0 %v179
    %4105 = vmatprep.mubr.f32.mxu0 %v3822
    %4106 = vmatmul.mubr.f32.gmra.mxu0 %v3820
    %v4107 = vpop.f32.mrf.mxu0
    %v4108 = vadd.f32 %v4038, %v4107
    %v4109 = vpop.f32.mrf.mxu0
    %4110 = vdwg.mxu0
    %v4111 = vmax.f32 %v4108, 0.0
    %4112 = vmatprep.subr.mxu0 %v316
    %4113 = vmatpush1.msra.mxu0 %v315
    %4114 = vmatprep.subr.mxu0 %v308
    %4115 = vmatpush1.msra.mxu0 %v307
    %4116 = vmatprep.subr.mxu0 %v300
    %4117 = vmatpush1.msra.mxu0 %v299
    %4118 = vmatprep.subr.mxu0 %v292
    %4119 = vmatpush1.msra.mxu0 %v291
    %4120 = vmatprep.subr.mxu0 %v284
    %4121 = vmatpush1.msra.mxu0 %v283
    %4122 = vmatprep.subr.mxu0 %v276
    %4123 = vmatpush1.msra.mxu0 %v275
    %4124 = vmatprep.subr.mxu0 %v268
    %4125 = vmatpush1.msra.mxu0 %v267
    %4126 = vmatprep.subr.mxu0 %v260
    %4127 = vmatpush1.msra.mxu0 %v259
    %4128 = vmatprep.subr.mxu0 %v252
    %4129 = vmatpush1.msra.mxu0 %v251
    %4130 = vmatprep.subr.mxu0 %v244
    %4131 = vmatpush1.msra.mxu0 %v243
    %4132 = vmatprep.subr.mxu0 %v236
    %4133 = vmatpush1.msra.mxu0 %v235
    %4134 = vmatprep.subr.mxu0 %v228
    %4135 = vmatpush1.msra.mxu0 %v227
    %4136 = vmatprep.subr.mxu0 %v220
    %4137 = vmatpush1.msra.mxu0 %v219
    %4138 = vmatprep.subr.mxu0 %v212
    %4139 = vmatpush1.msra.mxu0 %v211
    %4140 = vmatprep.subr.mxu0 %v204
    %4141 = vmatpush1.msra.mxu0 %v203
    %4142 = vmatprep.subr.mxu0 %v196
    %4143 = vmatpush1.msra.mxu0 %v195
    %4144 = vmatprep.subr.mxu0 0.0
    %4145 = vmatpush2.msra.mxu0 0.0
    %4146 = vmatprep.subr.mxu0 0.0
    %4147 = vmatpush2.msra.mxu0 0.0
    %4148 = vmatprep.subr.mxu0 0.0
    %4149 = vmatpush2.msra.mxu0 0.0
    %4150 = vmatprep.subr.mxu0 0.0
    %4151 = vmatpush2.msra.mxu0 0.0
    %4152 = vmatprep.subr.mxu0 0.0
    %4153 = vmatpush2.msra.mxu0 0.0
    %4154 = vmatprep.subr.mxu0 0.0
    %4155 = vmatpush2.msra.mxu0 0.0
    %4156 = vmatprep.subr.mxu0 0.0
    %4157 = vmatpush2.msra.mxu0 0.0
    %4158 = vmatprep.subr.mxu0 0.0
    %4159 = vmatpush2.msra.mxu0 0.0
    %4160 = vmatprep.subr.mxu0 0.0
    %4161 = vmatpush2.msra.mxu0 0.0
    %4162 = vmatprep.subr.mxu0 0.0
    %4163 = vmatpush2.msra.mxu0 0.0
    %4164 = vmatprep.subr.mxu0 0.0
    %4165 = vmatpush2.msra.mxu0 0.0
    %4166 = vmatprep.subr.mxu0 0.0
    %4167 = vmatpush2.msra.mxu0 0.0
    %4168 = vmatprep.subr.mxu0 0.0
    %4169 = vmatpush2.msra.mxu0 0.0
    %4170 = vmatprep.subr.mxu0 0.0
    %4171 = vmatpush2.msra.mxu0 0.0
    %4172 = vmatprep.subr.mxu0 0.0
    %4173 = vmatpush2.msra.mxu0 0.0
    %4174 = vmatprep.subr.mxu0 0.0
    %4175 = vmatpush2.msra.mxu0 0.0
    %4176 = vmatprep.mubr.f32.mxu0 0.0
    %4177 = vmatmul.mubr.f32.gmra.mxu0 %v4111
    %v4178 = vpop.f32.mrf.mxu0
    %v4179 = vadd.f32 %v660, %v4178
    %v4180 = vpop.f32.mrf.mxu0
    %v4181 = vadd.f32 %v664, %v4180
    %4182 = vdwg.mxu0
    %4183 = vmatprep.subr.mxu0 %v318
    %4184 = vmatpush1.msra.mxu0 %v317
    %4185 = vmatprep.subr.mxu0 %v310
    %4186 = vmatpush1.msra.mxu0 %v309
    %4187 = vmatprep.subr.mxu0 %v302
    %4188 = vmatpush1.msra.mxu0 %v301
    %4189 = vmatprep.subr.mxu0 %v294
    %4190 = vmatpush1.msra.mxu0 %v293
    %4191 = vmatprep.subr.mxu0 %v286
    %4192 = vmatpush1.msra.mxu0 %v285
    %4193 = vmatprep.subr.mxu0 %v278
    %4194 = vmatpush1.msra.mxu0 %v277
    %4195 = vmatprep.subr.mxu0 %v270
    %4196 = vmatpush1.msra.mxu0 %v269
    %4197 = vmatprep.subr.mxu0 %v262
    %4198 = vmatpush1.msra.mxu0 %v261
    %4199 = vmatprep.subr.mxu0 %v254
    %4200 = vmatpush1.msra.mxu0 %v253
    %4201 = vmatprep.subr.mxu0 %v246
    %4202 = vmatpush1.msra.mxu0 %v245
    %4203 = vmatprep.subr.mxu0 %v238
    %4204 = vmatpush1.msra.mxu0 %v237
    %4205 = vmatprep.subr.mxu0 %v230
    %4206 = vmatpush1.msra.mxu0 %v229
    %4207 = vmatprep.subr.mxu0 %v222
    %4208 = vmatpush1.msra.mxu0 %v221
    %4209 = vmatprep.subr.mxu0 %v214
    %4210 = vmatpush1.msra.mxu0 %v213
    %4211 = vmatprep.subr.mxu0 %v206
    %4212 = vmatpush1.msra.mxu0 %v205
    %4213 = vmatprep.subr.mxu0 %v198
    %4214 = vmatpush1.msra.mxu0 %v197
    %4215 = vmatprep.subr.mxu0 0.0
    %4216 = vmatpush2.msra.mxu0 0.0
    %4217 = vmatprep.subr.mxu0 0.0
    %4218 = vmatpush2.msra.mxu0 0.0
    %4219 = vmatprep.subr.mxu0 0.0
    %4220 = vmatpush2.msra.mxu0 0.0
    %4221 = vmatprep.subr.mxu0 0.0
    %4222 = vmatpush2.msra.mxu0 0.0
    %4223 = vmatprep.subr.mxu0 0.0
    %4224 = vmatpush2.msra.mxu0 0.0
    %4225 = vmatprep.subr.mxu0 0.0
    %4226 = vmatpush2.msra.mxu0 0.0
    %4227 = vmatprep.subr.mxu0 0.0
    %4228 = vmatpush2.msra.mxu0 0.0
    %4229 = vmatprep.subr.mxu0 0.0
    %4230 = vmatpush2.msra.mxu0 0.0
    %4231 = vmatprep.subr.mxu0 0.0
    %4232 = vmatpush2.msra.mxu0 0.0
    %4233 = vmatprep.subr.mxu0 0.0
    %4234 = vmatpush2.msra.mxu0 0.0
    %4235 = vmatprep.subr.mxu0 0.0
    %4236 = vmatpush2.msra.mxu0 0.0
    %4237 = vmatprep.subr.mxu0 0.0
    %4238 = vmatpush2.msra.mxu0 0.0
    %4239 = vmatprep.subr.mxu0 0.0
    %4240 = vmatpush2.msra.mxu0 0.0
    %4241 = vmatprep.subr.mxu0 0.0
    %4242 = vmatpush2.msra.mxu0 0.0
    %4243 = vmatprep.subr.mxu0 0.0
    %4244 = vmatpush2.msra.mxu0 0.0
    %4245 = vmatprep.subr.mxu0 0.0
    %4246 = vmatpush2.msra.mxu0 0.0
    %4247 = vmatprep.mubr.f32.mxu0 0.0
    %4248 = vmatmul.mubr.f32.gmra.mxu0 %v4111
    %v4249 = vpop.f32.mrf.mxu0
    %v4250 = vadd.f32 %v668, %v4249
    %v4251 = vpop.f32.mrf.mxu0
    %v4252 = vadd.f32 %v672, %v4251
    %4253 = vdwg.mxu0
    %4254 = vmatprep.subr.mxu0 %v320
    %4255 = vmatpush1.msra.mxu0 %v319
    %4256 = vmatprep.subr.mxu0 %v312
    %4257 = vmatpush1.msra.mxu0 %v311
    %4258 = vmatprep.subr.mxu0 %v304
    %4259 = vmatpush1.msra.mxu0 %v303
    %4260 = vmatprep.subr.mxu0 %v296
    %4261 = vmatpush1.msra.mxu0 %v295
    %4262 = vmatprep.subr.mxu0 %v288
    %4263 = vmatpush1.msra.mxu0 %v287
    %4264 = vmatprep.subr.mxu0 %v280
    %4265 = vmatpush1.msra.mxu0 %v279
    %4266 = vmatprep.subr.mxu0 %v272
    %4267 = vmatpush1.msra.mxu0 %v271
    %4268 = vmatprep.subr.mxu0 %v264
    %4269 = vmatpush1.msra.mxu0 %v263
    %4270 = vmatprep.subr.mxu0 %v256
    %4271 = vmatpush1.msra.mxu0 %v255
    %4272 = vmatprep.subr.mxu0 %v248
    %4273 = vmatpush1.msra.mxu0 %v247
    %4274 = vmatprep.subr.mxu0 %v240
    %4275 = vmatpush1.msra.mxu0 %v239
    %4276 = vmatprep.subr.mxu0 %v232
    %4277 = vmatpush1.msra.mxu0 %v231
    %4278 = vmatprep.subr.mxu0 %v224
    %4279 = vmatpush1.msra.mxu0 %v223
    %4280 = vmatprep.subr.mxu0 %v216
    %4281 = vmatpush1.msra.mxu0 %v215
    %4282 = vmatprep.subr.mxu0 %v208
    %4283 = vmatpush1.msra.mxu0 %v207
    %4284 = vmatprep.subr.mxu0 %v200
    %4285 = vmatpush1.msra.mxu0 %v199
    %4286 = vmatprep.subr.mxu0 0.0
    %4287 = vmatpush2.msra.mxu0 0.0
    %4288 = vmatprep.subr.mxu0 0.0
    %4289 = vmatpush2.msra.mxu0 0.0
    %4290 = vmatprep.subr.mxu0 0.0
    %4291 = vmatpush2.msra.mxu0 0.0
    %4292 = vmatprep.subr.mxu0 0.0
    %4293 = vmatpush2.msra.mxu0 0.0
    %4294 = vmatprep.subr.mxu0 0.0
    %4295 = vmatpush2.msra.mxu0 0.0
    %4296 = vmatprep.subr.mxu0 0.0
    %4297 = vmatpush2.msra.mxu0 0.0
    %4298 = vmatprep.subr.mxu0 0.0
    %4299 = vmatpush2.msra.mxu0 0.0
    %4300 = vmatprep.subr.mxu0 0.0
    %4301 = vmatpush2.msra.mxu0 0.0
    %4302 = vmatprep.subr.mxu0 0.0
    %4303 = vmatpush2.msra.mxu0 0.0
    %4304 = vmatprep.subr.mxu0 0.0
    %4305 = vmatpush2.msra.mxu0 0.0
    %4306 = vmatprep.subr.mxu0 0.0
    %4307 = vmatpush2.msra.mxu0 0.0
    %4308 = vmatprep.subr.mxu0 0.0
    %4309 = vmatpush2.msra.mxu0 0.0
    %4310 = vmatprep.subr.mxu0 0.0
    %4311 = vmatpush2.msra.mxu0 0.0
    %4312 = vmatprep.subr.mxu0 0.0
    %4313 = vmatpush2.msra.mxu0 0.0
    %4314 = vmatprep.subr.mxu0 0.0
    %4315 = vmatpush2.msra.mxu0 0.0
    %4316 = vmatprep.subr.mxu0 0.0
    %4317 = vmatpush2.msra.mxu0 0.0
    %4318 = vmatprep.mubr.f32.mxu0 0.0
    %4319 = vmatmul.mubr.f32.gmra.mxu0 %v4111
    %v4320 = vpop.f32.mrf.mxu0
    %v4321 = vadd.f32 %v676, %v4320
    %v4322 = vpop.f32.mrf.mxu0
    %v4323 = vadd.f32 %v680, %v4322
    %4324 = vdwg.mxu0
    %4325 = vmatprep.subr.mxu0 %v322
    %4326 = vmatpush1.msra.mxu0 %v321
    %4327 = vmatprep.subr.mxu0 %v314
    %4328 = vmatpush1.msra.mxu0 %v313
    %4329 = vmatprep.subr.mxu0 %v306
    %4330 = vmatpush1.msra.mxu0 %v305
    %4331 = vmatprep.subr.mxu0 %v298
    %4332 = vmatpush1.msra.mxu0 %v297
    %4333 = vmatprep.subr.mxu0 %v290
    %4334 = vmatpush1.msra.mxu0 %v289
    %4335 = vmatprep.subr.mxu0 %v282
    %4336 = vmatpush1.msra.mxu0 %v281
    %4337 = vmatprep.subr.mxu0 %v274
    %4338 = vmatpush1.msra.mxu0 %v273
    %4339 = vmatprep.subr.mxu0 %v266
    %4340 = vmatpush1.msra.mxu0 %v265
    %4341 = vmatprep.subr.mxu0 %v258
    %4342 = vmatpush1.msra.mxu0 %v257
    %4343 = vmatprep.subr.mxu0 %v250
    %4344 = vmatpush1.msra.mxu0 %v249
    %4345 = vmatprep.subr.mxu0 %v242
    %4346 = vmatpush1.msra.mxu0 %v241
    %4347 = vmatprep.subr.mxu0 %v234
    %4348 = vmatpush1.msra.mxu0 %v233
    %4349 = vmatprep.subr.mxu0 %v226
    %4350 = vmatpush1.msra.mxu0 %v225
    %4351 = vmatprep.subr.mxu0 %v218
    %4352 = vmatpush1.msra.mxu0 %v217
    %4353 = vmatprep.subr.mxu0 %v210
    %4354 = vmatpush1.msra.mxu0 %v209
    %4355 = vmatprep.subr.mxu0 %v202
    %4356 = vmatpush1.msra.mxu0 %v201
    %4357 = vmatprep.subr.mxu0 0.0
    %4358 = vmatpush2.msra.mxu0 0.0
    %4359 = vmatprep.subr.mxu0 0.0
    %4360 = vmatpush2.msra.mxu0 0.0
    %4361 = vmatprep.subr.mxu0 0.0
    %4362 = vmatpush2.msra.mxu0 0.0
    %4363 = vmatprep.subr.mxu0 0.0
    %4364 = vmatpush2.msra.mxu0 0.0
    %4365 = vmatprep.subr.mxu0 0.0
    %4366 = vmatpush2.msra.mxu0 0.0
    %4367 = vmatprep.subr.mxu0 0.0
    %4368 = vmatpush2.msra.mxu0 0.0
    %4369 = vmatprep.subr.mxu0 0.0
    %4370 = vmatpush2.msra.mxu0 0.0
    %4371 = vmatprep.subr.mxu0 0.0
    %4372 = vmatpush2.msra.mxu0 0.0
    %4373 = vmatprep.subr.mxu0 0.0
    %4374 = vmatpush2.msra.mxu0 0.0
    %4375 = vmatprep.subr.mxu0 0.0
    %4376 = vmatpush2.msra.mxu0 0.0
    %4377 = vmatprep.subr.mxu0 0.0
    %4378 = vmatpush2.msra.mxu0 0.0
    %4379 = vmatprep.subr.mxu0 0.0
    %4380 = vmatpush2.msra.mxu0 0.0
    %4381 = vmatprep.subr.mxu0 0.0
    %4382 = vmatpush2.msra.mxu0 0.0
    %4383 = vmatprep.subr.mxu0 0.0
    %4384 = vmatpush2.msra.mxu0 0.0
    %4385 = vmatprep.subr.mxu0 0.0
    %4386 = vmatpush2.msra.mxu0 0.0
    %4387 = vmatprep.subr.mxu0 0.0
    %4388 = vmatpush2.msra.mxu0 0.0
    %4389 = vmatprep.mubr.f32.mxu0 0.0
    %4390 = vmatmul.mubr.f32.gmra.mxu0 %v4111
    %v4391 = vpop.f32.mrf.mxu0
    %v4392 = vadd.f32 %v684, %v4391
    %v4393 = vpop.f32.mrf.mxu0
    %v4394 = vadd.f32 %v688, %v4393
    %4395 = vdwg.mxu0
    %s4396 = sld [smem:[#allocation2 + $0x100]]
    %s4397 = sld [smem:[#allocation2 + $0x101]]
    %v4398 = vstv %s4397
    %v4399 = vmul.f32 %v4398, %v4179
    %v4400 = vmul.f32 %v4398, %v4181
    %v4401 = vmul.f32 %v4398, %v4250
    %v4402 = vmul.f32 %v4398, %v4252
    %v4403 = vmul.f32 %v4398, %v4321
    %v4404 = vmul.f32 %v4398, %v4323
    %v4405 = vmul.f32 %v4398, %v4392
    %v4406 = vmul.f32 %v4398, %v4394
    %v4415 = vcombine.low %v4399, %v4400
    %v4416 = vcombine.low %v4401, %v4402
    %v4418 = vunpack.c.l.s4 1983009808
    %v4419 = vunpack.c.0.s8 %v4418
    %v4420 = vlaneseq
    %v4421 = vshrl.u32 %v4420, 7
    %v4422 = vsub.s32 %v4419, %v4421
    %v4423 = vrot.slane %v4415, %v4422
    %v4425 = vunpack.c.l.s4 1983009808
    %v4426 = vunpack.c.0.s8 %v4425
    %v4427 = vlaneseq
    %v4428 = vshrl.u32 %v4427, 7
    %v4429 = vsub.s32 %v4426, %v4428
    %v4430 = vrot.slane %v4416, %v4429
    %v4431 = vcombine.low %v4423, %v4430
    %v4432 = vcombine.low %v4403, %v4404
    %v4433 = vcombine.low %v4405, %v4406
    %v4435 = vunpack.c.l.s4 1983009808
    %v4436 = vunpack.c.0.s8 %v4435
    %v4437 = vlaneseq
    %v4438 = vshrl.u32 %v4437, 7
    %v4439 = vsub.s32 %v4436, %v4438
    %v4440 = vrot.slane %v4432, %v4439
    %v4442 = vunpack.c.l.s4 1983009808
    %v4443 = vunpack.c.0.s8 %v4442
    %v4444 = vlaneseq
    %v4445 = vshrl.u32 %v4444, 7
    %v4446 = vsub.s32 %v4443, %v4445
    %v4447 = vrot.slane %v4433, %v4446
    %v4448 = vcombine.low %v4440, %v4447
    %v4451 = vsub.f32 %v3780, %v4431
    %v4452 = vsub.f32 %v3781, %v4448
    %v4453 = vstv %s4396
    %v4454 = vmul.f32 %v4453, %v4451
    %v4455 = vmul.f32 %v4453, %v4452
    %s4456 = sld [smem:[#allocation2 + $0x102]]
    %s4457 = scalar_lea.vmem %s2, 32
    %v4458 = vld [vmem:[%s4457] sm:$0xff]
    %v4459 = vld [vmem:[%s4457 + $0x8] sm:$0xff]
    %v4460 = vstv %s4456
    %v4461 = vmul.f32 %v4460, %v4458
    %v4462 = vmul.f32 %v4460, %v4459
    %v4463 = vadd.f32 %v4454, %v4461
    %v4464 = vadd.f32 %v4455, %v4462
    %v4465 = vld [vmem:[%s3 + $0x1] sm:$0x1]
    %v4466 = vlaneseq
    %v4467 = vshrl.u32 %v4466, 7
    %v4468 = vsub.s32 0, %v4467
    %v4469 = vrot.slane %v4465, %v4468
    %v4472 = vcombine.high %v4463, %v4463
    %v4474 = vunpack.c.l.s4 1983009808
    %v4475 = vunpack.c.0.s8 %v4474
    %v4476 = vlaneseq
    %v4477 = vshrl.u32 %v4476, 7
    %v4478 = vsub.s32 %v4475, %v4477
    %v4479 = vrot.slane %v4463, %v4478
    %v4481 = vunpack.c.l.s4 1983009808
    %v4482 = vunpack.c.0.s8 %v4481
    %v4483 = vlaneseq
    %v4484 = vshrl.u32 %v4483, 7
    %v4485 = vsub.s32 %v4482, %v4484
    %v4486 = vrot.slane %v4472, %v4485
    %v4487 = vcombine.high %v4479, %v4479
    %v4488 = vcombine.high %v4486, %v4486
    %v4489 = vcombine.high %v4464, %v4464
    %v4491 = vunpack.c.l.s4 1983009808
    %v4492 = vunpack.c.0.s8 %v4491
    %v4493 = vlaneseq
    %v4494 = vshrl.u32 %v4493, 7
    %v4495 = vsub.s32 %v4492, %v4494
    %v4496 = vrot.slane %v4464, %v4495
    %v4498 = vunpack.c.l.s4 1983009808
    %v4499 = vunpack.c.0.s8 %v4498
    %v4500 = vlaneseq
    %v4501 = vshrl.u32 %v4500, 7
    %v4502 = vsub.s32 %v4499, %v4501
    %v4503 = vrot.slane %v4489, %v4502
    %v4504 = vcombine.high %v4496, %v4496
    %v4505 = vcombine.high %v4503, %v4503
    %4514 = vmatprep.subr.mxu0 0.0
    %4515 = vmatpush1.msra.mxu0 %v82
    %4516 = vmatprep.subr.mxu0 0.0
    %4517 = vmatpush1.msra.mxu0 %v81
    %4518 = vmatprep.subr.mxu0 0.0
    %4519 = vmatpush1.msra.mxu0 %v80
    %4520 = vmatprep.subr.mxu0 0.0
    %4521 = vmatpush1.msra.mxu0 %v79
    %4522 = vmatprep.subr.mxu0 0.0
    %4523 = vmatpush1.msra.mxu0 %v78
    %4524 = vmatprep.subr.mxu0 0.0
    %4525 = vmatpush1.msra.mxu0 %v77
    %4526 = vmatprep.subr.mxu0 0.0
    %4527 = vmatpush1.msra.mxu0 %v76
    %4528 = vmatprep.subr.mxu0 0.0
    %4529 = vmatpush1.msra.mxu0 %v75
    %4530 = vmatprep.subr.mxu0 0.0
    %4531 = vmatpush1.msra.mxu0 %v74
    %4532 = vmatprep.subr.mxu0 0.0
    %4533 = vmatpush1.msra.mxu0 %v73
    %4534 = vmatprep.subr.mxu0 0.0
    %4535 = vmatpush1.msra.mxu0 %v72
    %4536 = vmatprep.subr.mxu0 0.0
    %4537 = vmatpush1.msra.mxu0 %v71
    %4538 = vmatprep.subr.mxu0 0.0
    %4539 = vmatpush1.msra.mxu0 %v70
    %4540 = vmatprep.subr.mxu0 0.0
    %4541 = vmatpush1.msra.mxu0 %v69
    %4542 = vmatprep.subr.mxu0 0.0
    %4543 = vmatpush1.msra.mxu0 %v68
    %4544 = vmatprep.subr.mxu0 0.0
    %4545 = vmatpush1.msra.mxu0 %v67
    %4546 = vmatprep.subr.mxu0 0.0
    %4547 = vmatpush2.msra.mxu0 %v98
    %4548 = vmatprep.subr.mxu0 0.0
    %4549 = vmatpush2.msra.mxu0 %v97
    %4550 = vmatprep.subr.mxu0 0.0
    %4551 = vmatpush2.msra.mxu0 %v96
    %4552 = vmatprep.subr.mxu0 0.0
    %4553 = vmatpush2.msra.mxu0 %v95
    %4554 = vmatprep.subr.mxu0 0.0
    %4555 = vmatpush2.msra.mxu0 %v94
    %4556 = vmatprep.subr.mxu0 0.0
    %4557 = vmatpush2.msra.mxu0 %v93
    %4558 = vmatprep.subr.mxu0 0.0
    %4559 = vmatpush2.msra.mxu0 %v92
    %4560 = vmatprep.subr.mxu0 0.0
    %4561 = vmatpush2.msra.mxu0 %v91
    %4562 = vmatprep.subr.mxu0 0.0
    %4563 = vmatpush2.msra.mxu0 %v90
    %4564 = vmatprep.subr.mxu0 0.0
    %4565 = vmatpush2.msra.mxu0 %v89
    %4566 = vmatprep.subr.mxu0 0.0
    %4567 = vmatpush2.msra.mxu0 %v88
    %4568 = vmatprep.subr.mxu0 0.0
    %4569 = vmatpush2.msra.mxu0 %v87
    %4570 = vmatprep.subr.mxu0 0.0
    %4571 = vmatpush2.msra.mxu0 %v86
    %4572 = vmatprep.subr.mxu0 0.0
    %4573 = vmatpush2.msra.mxu0 %v85
    %4574 = vmatprep.subr.mxu0 0.0
    %4575 = vmatpush2.msra.mxu0 %v84
    %4576 = vmatprep.subr.mxu0 0.0
    %4577 = vmatpush2.msra.mxu0 %v83
    %4578 = vmatprep.mubr.f32.mxu0 %v4487
    %4579 = vmatmul.mubr.f32.gmra.mxu0 %v4479
    %v4580 = vpop.f32.mrf.mxu0
    %v4581 = vadd.f32 %v4469, %v4580
    %v4582 = vpop.f32.mrf.mxu0
    %4583 = vdwg.mxu0
    %4584 = vmatprep.subr.mxu0 0.0
    %4585 = vmatpush1.msra.mxu0 %v114
    %4586 = vmatprep.subr.mxu0 0.0
    %4587 = vmatpush1.msra.mxu0 %v113
    %4588 = vmatprep.subr.mxu0 0.0
    %4589 = vmatpush1.msra.mxu0 %v112
    %4590 = vmatprep.subr.mxu0 0.0
    %4591 = vmatpush1.msra.mxu0 %v111
    %4592 = vmatprep.subr.mxu0 0.0
    %4593 = vmatpush1.msra.mxu0 %v110
    %4594 = vmatprep.subr.mxu0 0.0
    %4595 = vmatpush1.msra.mxu0 %v109
    %4596 = vmatprep.subr.mxu0 0.0
    %4597 = vmatpush1.msra.mxu0 %v108
    %4598 = vmatprep.subr.mxu0 0.0
    %4599 = vmatpush1.msra.mxu0 %v107
    %4600 = vmatprep.subr.mxu0 0.0
    %4601 = vmatpush1.msra.mxu0 %v106
    %4602 = vmatprep.subr.mxu0 0.0
    %4603 = vmatpush1.msra.mxu0 %v105
    %4604 = vmatprep.subr.mxu0 0.0
    %4605 = vmatpush1.msra.mxu0 %v104
    %4606 = vmatprep.subr.mxu0 0.0
    %4607 = vmatpush1.msra.mxu0 %v103
    %4608 = vmatprep.subr.mxu0 0.0
    %4609 = vmatpush1.msra.mxu0 %v102
    %4610 = vmatprep.subr.mxu0 0.0
    %4611 = vmatpush1.msra.mxu0 %v101
    %4612 = vmatprep.subr.mxu0 0.0
    %4613 = vmatpush1.msra.mxu0 %v100
    %4614 = vmatprep.subr.mxu0 0.0
    %4615 = vmatpush1.msra.mxu0 %v99
    %4616 = vmatprep.subr.mxu0 0.0
    %4617 = vmatpush2.msra.mxu0 %v130
    %4618 = vmatprep.subr.mxu0 0.0
    %4619 = vmatpush2.msra.mxu0 %v129
    %4620 = vmatprep.subr.mxu0 0.0
    %4621 = vmatpush2.msra.mxu0 %v128
    %4622 = vmatprep.subr.mxu0 0.0
    %4623 = vmatpush2.msra.mxu0 %v127
    %4624 = vmatprep.subr.mxu0 0.0
    %4625 = vmatpush2.msra.mxu0 %v126
    %4626 = vmatprep.subr.mxu0 0.0
    %4627 = vmatpush2.msra.mxu0 %v125
    %4628 = vmatprep.subr.mxu0 0.0
    %4629 = vmatpush2.msra.mxu0 %v124
    %4630 = vmatprep.subr.mxu0 0.0
    %4631 = vmatpush2.msra.mxu0 %v123
    %4632 = vmatprep.subr.mxu0 0.0
    %4633 = vmatpush2.msra.mxu0 %v122
    %4634 = vmatprep.subr.mxu0 0.0
    %4635 = vmatpush2.msra.mxu0 %v121
    %4636 = vmatprep.subr.mxu0 0.0
    %4637 = vmatpush2.msra.mxu0 %v120
    %4638 = vmatprep.subr.mxu0 0.0
    %4639 = vmatpush2.msra.mxu0 %v119
    %4640 = vmatprep.subr.mxu0 0.0
    %4641 = vmatpush2.msra.mxu0 %v118
    %4642 = vmatprep.subr.mxu0 0.0
    %4643 = vmatpush2.msra.mxu0 %v117
    %4644 = vmatprep.subr.mxu0 0.0
    %4645 = vmatpush2.msra.mxu0 %v116
    %4646 = vmatprep.subr.mxu0 0.0
    %4647 = vmatpush2.msra.mxu0 %v115
    %4648 = vmatprep.mubr.f32.mxu0 %v4488
    %4649 = vmatmul.mubr.f32.gmra.mxu0 %v4486
    %v4650 = vpop.f32.mrf.mxu0
    %v4651 = vadd.f32 %v4581, %v4650
    %v4652 = vpop.f32.mrf.mxu0
    %4653 = vdwg.mxu0
    %4654 = vmatprep.subr.mxu0 0.0
    %4655 = vmatpush1.msra.mxu0 %v146
    %4656 = vmatprep.subr.mxu0 0.0
    %4657 = vmatpush1.msra.mxu0 %v145
    %4658 = vmatprep.subr.mxu0 0.0
    %4659 = vmatpush1.msra.mxu0 %v144
    %4660 = vmatprep.subr.mxu0 0.0
    %4661 = vmatpush1.msra.mxu0 %v143
    %4662 = vmatprep.subr.mxu0 0.0
    %4663 = vmatpush1.msra.mxu0 %v142
    %4664 = vmatprep.subr.mxu0 0.0
    %4665 = vmatpush1.msra.mxu0 %v141
    %4666 = vmatprep.subr.mxu0 0.0
    %4667 = vmatpush1.msra.mxu0 %v140
    %4668 = vmatprep.subr.mxu0 0.0
    %4669 = vmatpush1.msra.mxu0 %v139
    %4670 = vmatprep.subr.mxu0 0.0
    %4671 = vmatpush1.msra.mxu0 %v138
    %4672 = vmatprep.subr.mxu0 0.0
    %4673 = vmatpush1.msra.mxu0 %v137
    %4674 = vmatprep.subr.mxu0 0.0
    %4675 = vmatpush1.msra.mxu0 %v136
    %4676 = vmatprep.subr.mxu0 0.0
    %4677 = vmatpush1.msra.mxu0 %v135
    %4678 = vmatprep.subr.mxu0 0.0
    %4679 = vmatpush1.msra.mxu0 %v134
    %4680 = vmatprep.subr.mxu0 0.0
    %4681 = vmatpush1.msra.mxu0 %v133
    %4682 = vmatprep.subr.mxu0 0.0
    %4683 = vmatpush1.msra.mxu0 %v132
    %4684 = vmatprep.subr.mxu0 0.0
    %4685 = vmatpush1.msra.mxu0 %v131
    %4686 = vmatprep.subr.mxu0 0.0
    %4687 = vmatpush2.msra.mxu0 %v162
    %4688 = vmatprep.subr.mxu0 0.0
    %4689 = vmatpush2.msra.mxu0 %v161
    %4690 = vmatprep.subr.mxu0 0.0
    %4691 = vmatpush2.msra.mxu0 %v160
    %4692 = vmatprep.subr.mxu0 0.0
    %4693 = vmatpush2.msra.mxu0 %v159
    %4694 = vmatprep.subr.mxu0 0.0
    %4695 = vmatpush2.msra.mxu0 %v158
    %4696 = vmatprep.subr.mxu0 0.0
    %4697 = vmatpush2.msra.mxu0 %v157
    %4698 = vmatprep.subr.mxu0 0.0
    %4699 = vmatpush2.msra.mxu0 %v156
    %4700 = vmatprep.subr.mxu0 0.0
    %4701 = vmatpush2.msra.mxu0 %v155
    %4702 = vmatprep.subr.mxu0 0.0
    %4703 = vmatpush2.msra.mxu0 %v154
    %4704 = vmatprep.subr.mxu0 0.0
    %4705 = vmatpush2.msra.mxu0 %v153
    %4706 = vmatprep.subr.mxu0 0.0
    %4707 = vmatpush2.msra.mxu0 %v152
    %4708 = vmatprep.subr.mxu0 0.0
    %4709 = vmatpush2.msra.mxu0 %v151
    %4710 = vmatprep.subr.mxu0 0.0
    %4711 = vmatpush2.msra.mxu0 %v150
    %4712 = vmatprep.subr.mxu0 0.0
    %4713 = vmatpush2.msra.mxu0 %v149
    %4714 = vmatprep.subr.mxu0 0.0
    %4715 = vmatpush2.msra.mxu0 %v148
    %4716 = vmatprep.subr.mxu0 0.0
    %4717 = vmatpush2.msra.mxu0 %v147
    %4718 = vmatprep.mubr.f32.mxu0 %v4504
    %4719 = vmatmul.mubr.f32.gmra.mxu0 %v4496
    %v4720 = vpop.f32.mrf.mxu0
    %v4721 = vadd.f32 %v4651, %v4720
    %v4722 = vpop.f32.mrf.mxu0
    %4723 = vdwg.mxu0
    %4724 = vmatprep.subr.mxu0 0.0
    %4725 = vmatpush1.msra.mxu0 %v178
    %4726 = vmatprep.subr.mxu0 0.0
    %4727 = vmatpush1.msra.mxu0 %v177
    %4728 = vmatprep.subr.mxu0 0.0
    %4729 = vmatpush1.msra.mxu0 %v176
    %4730 = vmatprep.subr.mxu0 0.0
    %4731 = vmatpush1.msra.mxu0 %v175
    %4732 = vmatprep.subr.mxu0 0.0
    %4733 = vmatpush1.msra.mxu0 %v174
    %4734 = vmatprep.subr.mxu0 0.0
    %4735 = vmatpush1.msra.mxu0 %v173
    %4736 = vmatprep.subr.mxu0 0.0
    %4737 = vmatpush1.msra.mxu0 %v172
    %4738 = vmatprep.subr.mxu0 0.0
    %4739 = vmatpush1.msra.mxu0 %v171
    %4740 = vmatprep.subr.mxu0 0.0
    %4741 = vmatpush1.msra.mxu0 %v170
    %4742 = vmatprep.subr.mxu0 0.0
    %4743 = vmatpush1.msra.mxu0 %v169
    %4744 = vmatprep.subr.mxu0 0.0
    %4745 = vmatpush1.msra.mxu0 %v168
    %4746 = vmatprep.subr.mxu0 0.0
    %4747 = vmatpush1.msra.mxu0 %v167
    %4748 = vmatprep.subr.mxu0 0.0
    %4749 = vmatpush1.msra.mxu0 %v166
    %4750 = vmatprep.subr.mxu0 0.0
    %4751 = vmatpush1.msra.mxu0 %v165
    %4752 = vmatprep.subr.mxu0 0.0
    %4753 = vmatpush1.msra.mxu0 %v164
    %4754 = vmatprep.subr.mxu0 0.0
    %4755 = vmatpush1.msra.mxu0 %v163
    %4756 = vmatprep.subr.mxu0 0.0
    %4757 = vmatpush2.msra.mxu0 %v194
    %4758 = vmatprep.subr.mxu0 0.0
    %4759 = vmatpush2.msra.mxu0 %v193
    %4760 = vmatprep.subr.mxu0 0.0
    %4761 = vmatpush2.msra.mxu0 %v192
    %4762 = vmatprep.subr.mxu0 0.0
    %4763 = vmatpush2.msra.mxu0 %v191
    %4764 = vmatprep.subr.mxu0 0.0
    %4765 = vmatpush2.msra.mxu0 %v190
    %4766 = vmatprep.subr.mxu0 0.0
    %4767 = vmatpush2.msra.mxu0 %v189
    %4768 = vmatprep.subr.mxu0 0.0
    %4769 = vmatpush2.msra.mxu0 %v188
    %4770 = vmatprep.subr.mxu0 0.0
    %4771 = vmatpush2.msra.mxu0 %v187
    %4772 = vmatprep.subr.mxu0 0.0
    %4773 = vmatpush2.msra.mxu0 %v186
    %4774 = vmatprep.subr.mxu0 0.0
    %4775 = vmatpush2.msra.mxu0 %v185
    %4776 = vmatprep.subr.mxu0 0.0
    %4777 = vmatpush2.msra.mxu0 %v184
    %4778 = vmatprep.subr.mxu0 0.0
    %4779 = vmatpush2.msra.mxu0 %v183
    %4780 = vmatprep.subr.mxu0 0.0
    %4781 = vmatpush2.msra.mxu0 %v182
    %4782 = vmatprep.subr.mxu0 0.0
    %4783 = vmatpush2.msra.mxu0 %v181
    %4784 = vmatprep.subr.mxu0 0.0
    %4785 = vmatpush2.msra.mxu0 %v180
    %4786 = vmatprep.subr.mxu0 0.0
    %4787 = vmatpush2.msra.mxu0 %v179
    %4788 = vmatprep.mubr.f32.mxu0 %v4505
    %4789 = vmatmul.mubr.f32.gmra.mxu0 %v4503
    %v4790 = vpop.f32.mrf.mxu0
    %v4791 = vadd.f32 %v4721, %v4790
    %v4792 = vpop.f32.mrf.mxu0
    %4793 = vdwg.mxu0
    %v4794 = vmax.f32 %v4791, 0.0
    %4795 = vmatprep.subr.mxu0 %v316
    %4796 = vmatpush1.msra.mxu0 %v315
    %4797 = vmatprep.subr.mxu0 %v308
    %4798 = vmatpush1.msra.mxu0 %v307
    %4799 = vmatprep.subr.mxu0 %v300
    %4800 = vmatpush1.msra.mxu0 %v299
    %4801 = vmatprep.subr.mxu0 %v292
    %4802 = vmatpush1.msra.mxu0 %v291
    %4803 = vmatprep.subr.mxu0 %v284
    %4804 = vmatpush1.msra.mxu0 %v283
    %4805 = vmatprep.subr.mxu0 %v276
    %4806 = vmatpush1.msra.mxu0 %v275
    %4807 = vmatprep.subr.mxu0 %v268
    %4808 = vmatpush1.msra.mxu0 %v267
    %4809 = vmatprep.subr.mxu0 %v260
    %4810 = vmatpush1.msra.mxu0 %v259
    %4811 = vmatprep.subr.mxu0 %v252
    %4812 = vmatpush1.msra.mxu0 %v251
    %4813 = vmatprep.subr.mxu0 %v244
    %4814 = vmatpush1.msra.mxu0 %v243
    %4815 = vmatprep.subr.mxu0 %v236
    %4816 = vmatpush1.msra.mxu0 %v235
    %4817 = vmatprep.subr.mxu0 %v228
    %4818 = vmatpush1.msra.mxu0 %v227
    %4819 = vmatprep.subr.mxu0 %v220
    %4820 = vmatpush1.msra.mxu0 %v219
    %4821 = vmatprep.subr.mxu0 %v212
    %4822 = vmatpush1.msra.mxu0 %v211
    %4823 = vmatprep.subr.mxu0 %v204
    %4824 = vmatpush1.msra.mxu0 %v203
    %4825 = vmatprep.subr.mxu0 %v196
    %4826 = vmatpush1.msra.mxu0 %v195
    %4827 = vmatprep.subr.mxu0 0.0
    %4828 = vmatpush2.msra.mxu0 0.0
    %4829 = vmatprep.subr.mxu0 0.0
    %4830 = vmatpush2.msra.mxu0 0.0
    %4831 = vmatprep.subr.mxu0 0.0
    %4832 = vmatpush2.msra.mxu0 0.0
    %4833 = vmatprep.subr.mxu0 0.0
    %4834 = vmatpush2.msra.mxu0 0.0
    %4835 = vmatprep.subr.mxu0 0.0
    %4836 = vmatpush2.msra.mxu0 0.0
    %4837 = vmatprep.subr.mxu0 0.0
    %4838 = vmatpush2.msra.mxu0 0.0
    %4839 = vmatprep.subr.mxu0 0.0
    %4840 = vmatpush2.msra.mxu0 0.0
    %4841 = vmatprep.subr.mxu0 0.0
    %4842 = vmatpush2.msra.mxu0 0.0
    %4843 = vmatprep.subr.mxu0 0.0
    %4844 = vmatpush2.msra.mxu0 0.0
    %4845 = vmatprep.subr.mxu0 0.0
    %4846 = vmatpush2.msra.mxu0 0.0
    %4847 = vmatprep.subr.mxu0 0.0
    %4848 = vmatpush2.msra.mxu0 0.0
    %4849 = vmatprep.subr.mxu0 0.0
    %4850 = vmatpush2.msra.mxu0 0.0
    %4851 = vmatprep.subr.mxu0 0.0
    %4852 = vmatpush2.msra.mxu0 0.0
    %4853 = vmatprep.subr.mxu0 0.0
    %4854 = vmatpush2.msra.mxu0 0.0
    %4855 = vmatprep.subr.mxu0 0.0
    %4856 = vmatpush2.msra.mxu0 0.0
    %4857 = vmatprep.subr.mxu0 0.0
    %4858 = vmatpush2.msra.mxu0 0.0
    %4859 = vmatprep.mubr.f32.mxu0 0.0
    %4860 = vmatmul.mubr.f32.gmra.mxu0 %v4794
    %v4861 = vpop.f32.mrf.mxu0
    %v4862 = vadd.f32 %v660, %v4861
    %v4863 = vpop.f32.mrf.mxu0
    %v4864 = vadd.f32 %v664, %v4863
    %4865 = vdwg.mxu0
    %4866 = vmatprep.subr.mxu0 %v318
    %4867 = vmatpush1.msra.mxu0 %v317
    %4868 = vmatprep.subr.mxu0 %v310
    %4869 = vmatpush1.msra.mxu0 %v309
    %4870 = vmatprep.subr.mxu0 %v302
    %4871 = vmatpush1.msra.mxu0 %v301
    %4872 = vmatprep.subr.mxu0 %v294
    %4873 = vmatpush1.msra.mxu0 %v293
    %4874 = vmatprep.subr.mxu0 %v286
    %4875 = vmatpush1.msra.mxu0 %v285
    %4876 = vmatprep.subr.mxu0 %v278
    %4877 = vmatpush1.msra.mxu0 %v277
    %4878 = vmatprep.subr.mxu0 %v270
    %4879 = vmatpush1.msra.mxu0 %v269
    %4880 = vmatprep.subr.mxu0 %v262
    %4881 = vmatpush1.msra.mxu0 %v261
    %4882 = vmatprep.subr.mxu0 %v254
    %4883 = vmatpush1.msra.mxu0 %v253
    %4884 = vmatprep.subr.mxu0 %v246
    %4885 = vmatpush1.msra.mxu0 %v245
    %4886 = vmatprep.subr.mxu0 %v238
    %4887 = vmatpush1.msra.mxu0 %v237
    %4888 = vmatprep.subr.mxu0 %v230
    %4889 = vmatpush1.msra.mxu0 %v229
    %4890 = vmatprep.subr.mxu0 %v222
    %4891 = vmatpush1.msra.mxu0 %v221
    %4892 = vmatprep.subr.mxu0 %v214
    %4893 = vmatpush1.msra.mxu0 %v213
    %4894 = vmatprep.subr.mxu0 %v206
    %4895 = vmatpush1.msra.mxu0 %v205
    %4896 = vmatprep.subr.mxu0 %v198
    %4897 = vmatpush1.msra.mxu0 %v197
    %4898 = vmatprep.subr.mxu0 0.0
    %4899 = vmatpush2.msra.mxu0 0.0
    %4900 = vmatprep.subr.mxu0 0.0
    %4901 = vmatpush2.msra.mxu0 0.0
    %4902 = vmatprep.subr.mxu0 0.0
    %4903 = vmatpush2.msra.mxu0 0.0
    %4904 = vmatprep.subr.mxu0 0.0
    %4905 = vmatpush2.msra.mxu0 0.0
    %4906 = vmatprep.subr.mxu0 0.0
    %4907 = vmatpush2.msra.mxu0 0.0
    %4908 = vmatprep.subr.mxu0 0.0
    %4909 = vmatpush2.msra.mxu0 0.0
    %4910 = vmatprep.subr.mxu0 0.0
    %4911 = vmatpush2.msra.mxu0 0.0
    %4912 = vmatprep.subr.mxu0 0.0
    %4913 = vmatpush2.msra.mxu0 0.0
    %4914 = vmatprep.subr.mxu0 0.0
    %4915 = vmatpush2.msra.mxu0 0.0
    %4916 = vmatprep.subr.mxu0 0.0
    %4917 = vmatpush2.msra.mxu0 0.0
    %4918 = vmatprep.subr.mxu0 0.0
    %4919 = vmatpush2.msra.mxu0 0.0
    %4920 = vmatprep.subr.mxu0 0.0
    %4921 = vmatpush2.msra.mxu0 0.0
    %4922 = vmatprep.subr.mxu0 0.0
    %4923 = vmatpush2.msra.mxu0 0.0
    %4924 = vmatprep.subr.mxu0 0.0
    %4925 = vmatpush2.msra.mxu0 0.0
    %4926 = vmatprep.subr.mxu0 0.0
    %4927 = vmatpush2.msra.mxu0 0.0
    %4928 = vmatprep.subr.mxu0 0.0
    %4929 = vmatpush2.msra.mxu0 0.0
    %4930 = vmatprep.mubr.f32.mxu0 0.0
    %4931 = vmatmul.mubr.f32.gmra.mxu0 %v4794
    %v4932 = vpop.f32.mrf.mxu0
    %v4933 = vadd.f32 %v668, %v4932
    %v4934 = vpop.f32.mrf.mxu0
    %v4935 = vadd.f32 %v672, %v4934
    %4936 = vdwg.mxu0
    %4937 = vmatprep.subr.mxu0 %v320
    %4938 = vmatpush1.msra.mxu0 %v319
    %4939 = vmatprep.subr.mxu0 %v312
    %4940 = vmatpush1.msra.mxu0 %v311
    %4941 = vmatprep.subr.mxu0 %v304
    %4942 = vmatpush1.msra.mxu0 %v303
    %4943 = vmatprep.subr.mxu0 %v296
    %4944 = vmatpush1.msra.mxu0 %v295
    %4945 = vmatprep.subr.mxu0 %v288
    %4946 = vmatpush1.msra.mxu0 %v287
    %4947 = vmatprep.subr.mxu0 %v280
    %4948 = vmatpush1.msra.mxu0 %v279
    %4949 = vmatprep.subr.mxu0 %v272
    %4950 = vmatpush1.msra.mxu0 %v271
    %4951 = vmatprep.subr.mxu0 %v264
    %4952 = vmatpush1.msra.mxu0 %v263
    %4953 = vmatprep.subr.mxu0 %v256
    %4954 = vmatpush1.msra.mxu0 %v255
    %4955 = vmatprep.subr.mxu0 %v248
    %4956 = vmatpush1.msra.mxu0 %v247
    %4957 = vmatprep.subr.mxu0 %v240
    %4958 = vmatpush1.msra.mxu0 %v239
    %4959 = vmatprep.subr.mxu0 %v232
    %4960 = vmatpush1.msra.mxu0 %v231
    %4961 = vmatprep.subr.mxu0 %v224
    %4962 = vmatpush1.msra.mxu0 %v223
    %4963 = vmatprep.subr.mxu0 %v216
    %4964 = vmatpush1.msra.mxu0 %v215
    %4965 = vmatprep.subr.mxu0 %v208
    %4966 = vmatpush1.msra.mxu0 %v207
    %4967 = vmatprep.subr.mxu0 %v200
    %4968 = vmatpush1.msra.mxu0 %v199
    %4969 = vmatprep.subr.mxu0 0.0
    %4970 = vmatpush2.msra.mxu0 0.0
    %4971 = vmatprep.subr.mxu0 0.0
    %4972 = vmatpush2.msra.mxu0 0.0
    %4973 = vmatprep.subr.mxu0 0.0
    %4974 = vmatpush2.msra.mxu0 0.0
    %4975 = vmatprep.subr.mxu0 0.0
    %4976 = vmatpush2.msra.mxu0 0.0
    %4977 = vmatprep.subr.mxu0 0.0
    %4978 = vmatpush2.msra.mxu0 0.0
    %4979 = vmatprep.subr.mxu0 0.0
    %4980 = vmatpush2.msra.mxu0 0.0
    %4981 = vmatprep.subr.mxu0 0.0
    %4982 = vmatpush2.msra.mxu0 0.0
    %4983 = vmatprep.subr.mxu0 0.0
    %4984 = vmatpush2.msra.mxu0 0.0
    %4985 = vmatprep.subr.mxu0 0.0
    %4986 = vmatpush2.msra.mxu0 0.0
    %4987 = vmatprep.subr.mxu0 0.0
    %4988 = vmatpush2.msra.mxu0 0.0
    %4989 = vmatprep.subr.mxu0 0.0
    %4990 = vmatpush2.msra.mxu0 0.0
    %4991 = vmatprep.subr.mxu0 0.0
    %4992 = vmatpush2.msra.mxu0 0.0
    %4993 = vmatprep.subr.mxu0 0.0
    %4994 = vmatpush2.msra.mxu0 0.0
    %4995 = vmatprep.subr.mxu0 0.0
    %4996 = vmatpush2.msra.mxu0 0.0
    %4997 = vmatprep.subr.mxu0 0.0
    %4998 = vmatpush2.msra.mxu0 0.0
    %4999 = vmatprep.subr.mxu0 0.0
    %5000 = vmatpush2.msra.mxu0 0.0
    %5001 = vmatprep.mubr.f32.mxu0 0.0
    %5002 = vmatmul.mubr.f32.gmra.mxu0 %v4794
    %v5003 = vpop.f32.mrf.mxu0
    %v5004 = vadd.f32 %v676, %v5003
    %v5005 = vpop.f32.mrf.mxu0
    %v5006 = vadd.f32 %v680, %v5005
    %5007 = vdwg.mxu0
    %5008 = vmatprep.subr.mxu0 %v322
    %5009 = vmatpush1.msra.mxu0 %v321
    %5010 = vmatprep.subr.mxu0 %v314
    %5011 = vmatpush1.msra.mxu0 %v313
    %5012 = vmatprep.subr.mxu0 %v306
    %5013 = vmatpush1.msra.mxu0 %v305
    %5014 = vmatprep.subr.mxu0 %v298
    %5015 = vmatpush1.msra.mxu0 %v297
    %5016 = vmatprep.subr.mxu0 %v290
    %5017 = vmatpush1.msra.mxu0 %v289
    %5018 = vmatprep.subr.mxu0 %v282
    %5019 = vmatpush1.msra.mxu0 %v281
    %5020 = vmatprep.subr.mxu0 %v274
    %5021 = vmatpush1.msra.mxu0 %v273
    %5022 = vmatprep.subr.mxu0 %v266
    %5023 = vmatpush1.msra.mxu0 %v265
    %5024 = vmatprep.subr.mxu0 %v258
    %5025 = vmatpush1.msra.mxu0 %v257
    %5026 = vmatprep.subr.mxu0 %v250
    %5027 = vmatpush1.msra.mxu0 %v249
    %5028 = vmatprep.subr.mxu0 %v242
    %5029 = vmatpush1.msra.mxu0 %v241
    %5030 = vmatprep.subr.mxu0 %v234
    %5031 = vmatpush1.msra.mxu0 %v233
    %5032 = vmatprep.subr.mxu0 %v226
    %5033 = vmatpush1.msra.mxu0 %v225
    %5034 = vmatprep.subr.mxu0 %v218
    %5035 = vmatpush1.msra.mxu0 %v217
    %5036 = vmatprep.subr.mxu0 %v210
    %5037 = vmatpush1.msra.mxu0 %v209
    %5038 = vmatprep.subr.mxu0 %v202
    %5039 = vmatpush1.msra.mxu0 %v201
    %5040 = vmatprep.subr.mxu0 0.0
    %5041 = vmatpush2.msra.mxu0 0.0
    %5042 = vmatprep.subr.mxu0 0.0
    %5043 = vmatpush2.msra.mxu0 0.0
    %5044 = vmatprep.subr.mxu0 0.0
    %5045 = vmatpush2.msra.mxu0 0.0
    %5046 = vmatprep.subr.mxu0 0.0
    %5047 = vmatpush2.msra.mxu0 0.0
    %5048 = vmatprep.subr.mxu0 0.0
    %5049 = vmatpush2.msra.mxu0 0.0
    %5050 = vmatprep.subr.mxu0 0.0
    %5051 = vmatpush2.msra.mxu0 0.0
    %5052 = vmatprep.subr.mxu0 0.0
    %5053 = vmatpush2.msra.mxu0 0.0
    %5054 = vmatprep.subr.mxu0 0.0
    %5055 = vmatpush2.msra.mxu0 0.0
    %5056 = vmatprep.subr.mxu0 0.0
    %5057 = vmatpush2.msra.mxu0 0.0
    %5058 = vmatprep.subr.mxu0 0.0
    %5059 = vmatpush2.msra.mxu0 0.0
    %5060 = vmatprep.subr.mxu0 0.0
    %5061 = vmatpush2.msra.mxu0 0.0
    %5062 = vmatprep.subr.mxu0 0.0
    %5063 = vmatpush2.msra.mxu0 0.0
    %5064 = vmatprep.subr.mxu0 0.0
    %5065 = vmatpush2.msra.mxu0 0.0
    %5066 = vmatprep.subr.mxu0 0.0
    %5067 = vmatpush2.msra.mxu0 0.0
    %5068 = vmatprep.subr.mxu0 0.0
    %5069 = vmatpush2.msra.mxu0 0.0
    %5070 = vmatprep.subr.mxu0 0.0
    %5071 = vmatpush2.msra.mxu0 0.0
    %5072 = vmatprep.mubr.f32.mxu0 0.0
    %5073 = vmatmul.mubr.f32.gmra.mxu0 %v4794
    %v5074 = vpop.f32.mrf.mxu0
    %v5075 = vadd.f32 %v684, %v5074
    %v5076 = vpop.f32.mrf.mxu0
    %v5077 = vadd.f32 %v688, %v5076
    %5078 = vdwg.mxu0
    %s5079 = sld [smem:[#allocation2 + $0x80]]
    %s5080 = sld [smem:[#allocation2 + $0x81]]
    %v5081 = vstv %s5080
    %v5082 = vmul.f32 %v5081, %v4862
    %v5083 = vmul.f32 %v5081, %v4864
    %v5084 = vmul.f32 %v5081, %v4933
    %v5085 = vmul.f32 %v5081, %v4935
    %v5086 = vmul.f32 %v5081, %v5004
    %v5087 = vmul.f32 %v5081, %v5006
    %v5088 = vmul.f32 %v5081, %v5075
    %v5089 = vmul.f32 %v5081, %v5077
    %v5098 = vcombine.low %v5082, %v5083
    %v5099 = vcombine.low %v5084, %v5085
    %v5101 = vunpack.c.l.s4 1983009808
    %v5102 = vunpack.c.0.s8 %v5101
    %v5103 = vlaneseq
    %v5104 = vshrl.u32 %v5103, 7
    %v5105 = vsub.s32 %v5102, %v5104
    %v5106 = vrot.slane %v5098, %v5105
    %v5108 = vunpack.c.l.s4 1983009808
    %v5109 = vunpack.c.0.s8 %v5108
    %v5110 = vlaneseq
    %v5111 = vshrl.u32 %v5110, 7
    %v5112 = vsub.s32 %v5109, %v5111
    %v5113 = vrot.slane %v5099, %v5112
    %v5114 = vcombine.low %v5106, %v5113
    %v5115 = vcombine.low %v5086, %v5087
    %v5116 = vcombine.low %v5088, %v5089
    %v5118 = vunpack.c.l.s4 1983009808
    %v5119 = vunpack.c.0.s8 %v5118
    %v5120 = vlaneseq
    %v5121 = vshrl.u32 %v5120, 7
    %v5122 = vsub.s32 %v5119, %v5121
    %v5123 = vrot.slane %v5115, %v5122
    %v5125 = vunpack.c.l.s4 1983009808
    %v5126 = vunpack.c.0.s8 %v5125
    %v5127 = vlaneseq
    %v5128 = vshrl.u32 %v5127, 7
    %v5129 = vsub.s32 %v5126, %v5128
    %v5130 = vrot.slane %v5116, %v5129
    %v5131 = vcombine.low %v5123, %v5130
    %v5134 = vsub.f32 %v4463, %v5114
    %v5135 = vsub.f32 %v4464, %v5131
    %v5136 = vstv %s5079
    %v5137 = vmul.f32 %v5136, %v5134
    %v5138 = vmul.f32 %v5136, %v5135
    %s5139 = sld [smem:[#allocation2 + $0x82]]
    %s5140 = scalar_lea.vmem %s2, 16
    %v5141 = vld [vmem:[%s5140] sm:$0xff]
    %v5142 = vld [vmem:[%s5140 + $0x8] sm:$0xff]
    %v5143 = vstv %s5139
    %v5144 = vmul.f32 %v5143, %v5141
    %v5145 = vmul.f32 %v5143, %v5142
    %v5146 = vadd.f32 %v5137, %v5144
    %v5147 = vadd.f32 %v5138, %v5145
    %v5148 = vld [vmem:[%s3] sm:$0x1]
    %v5149 = vlaneseq
    %v5150 = vshrl.u32 %v5149, 7
    %v5151 = vsub.s32 0, %v5150
    %v5152 = vrot.slane %v5148, %v5151
    %v5155 = vcombine.high %v5146, %v5146
    %v5157 = vunpack.c.l.s4 1983009808
    %v5158 = vunpack.c.0.s8 %v5157
    %v5159 = vlaneseq
    %v5160 = vshrl.u32 %v5159, 7
    %v5161 = vsub.s32 %v5158, %v5160
    %v5162 = vrot.slane %v5146, %v5161
    %v5164 = vunpack.c.l.s4 1983009808
    %v5165 = vunpack.c.0.s8 %v5164
    %v5166 = vlaneseq
    %v5167 = vshrl.u32 %v5166, 7
    %v5168 = vsub.s32 %v5165, %v5167
    %v5169 = vrot.slane %v5155, %v5168
    %v5170 = vcombine.high %v5162, %v5162
    %v5171 = vcombine.high %v5169, %v5169
    %v5172 = vcombine.high %v5147, %v5147
    %v5174 = vunpack.c.l.s4 1983009808
    %v5175 = vunpack.c.0.s8 %v5174
    %v5176 = vlaneseq
    %v5177 = vshrl.u32 %v5176, 7
    %v5178 = vsub.s32 %v5175, %v5177
    %v5179 = vrot.slane %v5147, %v5178
    %v5181 = vunpack.c.l.s4 1983009808
    %v5182 = vunpack.c.0.s8 %v5181
    %v5183 = vlaneseq
    %v5184 = vshrl.u32 %v5183, 7
    %v5185 = vsub.s32 %v5182, %v5184
    %v5186 = vrot.slane %v5172, %v5185
    %v5187 = vcombine.high %v5179, %v5179
    %v5188 = vcombine.high %v5186, %v5186
    %5197 = vmatprep.subr.mxu0 0.0
    %5198 = vmatpush1.msra.mxu0 %v82
    %5199 = vmatprep.subr.mxu0 0.0
    %5200 = vmatpush1.msra.mxu0 %v81
    %5201 = vmatprep.subr.mxu0 0.0
    %5202 = vmatpush1.msra.mxu0 %v80
    %5203 = vmatprep.subr.mxu0 0.0
    %5204 = vmatpush1.msra.mxu0 %v79
    %5205 = vmatprep.subr.mxu0 0.0
    %5206 = vmatpush1.msra.mxu0 %v78
    %5207 = vmatprep.subr.mxu0 0.0
    %5208 = vmatpush1.msra.mxu0 %v77
    %5209 = vmatprep.subr.mxu0 0.0
    %5210 = vmatpush1.msra.mxu0 %v76
    %5211 = vmatprep.subr.mxu0 0.0
    %5212 = vmatpush1.msra.mxu0 %v75
    %5213 = vmatprep.subr.mxu0 0.0
    %5214 = vmatpush1.msra.mxu0 %v74
    %5215 = vmatprep.subr.mxu0 0.0
    %5216 = vmatpush1.msra.mxu0 %v73
    %5217 = vmatprep.subr.mxu0 0.0
    %5218 = vmatpush1.msra.mxu0 %v72
    %5219 = vmatprep.subr.mxu0 0.0
    %5220 = vmatpush1.msra.mxu0 %v71
    %5221 = vmatprep.subr.mxu0 0.0
    %5222 = vmatpush1.msra.mxu0 %v70
    %5223 = vmatprep.subr.mxu0 0.0
    %5224 = vmatpush1.msra.mxu0 %v69
    %5225 = vmatprep.subr.mxu0 0.0
    %5226 = vmatpush1.msra.mxu0 %v68
    %5227 = vmatprep.subr.mxu0 0.0
    %5228 = vmatpush1.msra.mxu0 %v67
    %5229 = vmatprep.subr.mxu0 0.0
    %5230 = vmatpush2.msra.mxu0 %v98
    %5231 = vmatprep.subr.mxu0 0.0
    %5232 = vmatpush2.msra.mxu0 %v97
    %5233 = vmatprep.subr.mxu0 0.0
    %5234 = vmatpush2.msra.mxu0 %v96
    %5235 = vmatprep.subr.mxu0 0.0
    %5236 = vmatpush2.msra.mxu0 %v95
    %5237 = vmatprep.subr.mxu0 0.0
    %5238 = vmatpush2.msra.mxu0 %v94
    %5239 = vmatprep.subr.mxu0 0.0
    %5240 = vmatpush2.msra.mxu0 %v93
    %5241 = vmatprep.subr.mxu0 0.0
    %5242 = vmatpush2.msra.mxu0 %v92
    %5243 = vmatprep.subr.mxu0 0.0
    %5244 = vmatpush2.msra.mxu0 %v91
    %5245 = vmatprep.subr.mxu0 0.0
    %5246 = vmatpush2.msra.mxu0 %v90
    %5247 = vmatprep.subr.mxu0 0.0
    %5248 = vmatpush2.msra.mxu0 %v89
    %5249 = vmatprep.subr.mxu0 0.0
    %5250 = vmatpush2.msra.mxu0 %v88
    %5251 = vmatprep.subr.mxu0 0.0
    %5252 = vmatpush2.msra.mxu0 %v87
    %5253 = vmatprep.subr.mxu0 0.0
    %5254 = vmatpush2.msra.mxu0 %v86
    %5255 = vmatprep.subr.mxu0 0.0
    %5256 = vmatpush2.msra.mxu0 %v85
    %5257 = vmatprep.subr.mxu0 0.0
    %5258 = vmatpush2.msra.mxu0 %v84
    %5259 = vmatprep.subr.mxu0 0.0
    %5260 = vmatpush2.msra.mxu0 %v83
    %5261 = vmatprep.mubr.f32.mxu0 %v5170
    %5262 = vmatmul.mubr.f32.gmra.mxu0 %v5162
    %v5263 = vpop.f32.mrf.mxu0
    %v5264 = vadd.f32 %v5152, %v5263
    %v5265 = vpop.f32.mrf.mxu0
    %5266 = vdwg.mxu0
    %5267 = vmatprep.subr.mxu0 0.0
    %5268 = vmatpush1.msra.mxu0 %v114
    %5269 = vmatprep.subr.mxu0 0.0
    %5270 = vmatpush1.msra.mxu0 %v113
    %5271 = vmatprep.subr.mxu0 0.0
    %5272 = vmatpush1.msra.mxu0 %v112
    %5273 = vmatprep.subr.mxu0 0.0
    %5274 = vmatpush1.msra.mxu0 %v111
    %5275 = vmatprep.subr.mxu0 0.0
    %5276 = vmatpush1.msra.mxu0 %v110
    %5277 = vmatprep.subr.mxu0 0.0
    %5278 = vmatpush1.msra.mxu0 %v109
    %5279 = vmatprep.subr.mxu0 0.0
    %5280 = vmatpush1.msra.mxu0 %v108
    %5281 = vmatprep.subr.mxu0 0.0
    %5282 = vmatpush1.msra.mxu0 %v107
    %5283 = vmatprep.subr.mxu0 0.0
    %5284 = vmatpush1.msra.mxu0 %v106
    %5285 = vmatprep.subr.mxu0 0.0
    %5286 = vmatpush1.msra.mxu0 %v105
    %5287 = vmatprep.subr.mxu0 0.0
    %5288 = vmatpush1.msra.mxu0 %v104
    %5289 = vmatprep.subr.mxu0 0.0
    %5290 = vmatpush1.msra.mxu0 %v103
    %5291 = vmatprep.subr.mxu0 0.0
    %5292 = vmatpush1.msra.mxu0 %v102
    %5293 = vmatprep.subr.mxu0 0.0
    %5294 = vmatpush1.msra.mxu0 %v101
    %5295 = vmatprep.subr.mxu0 0.0
    %5296 = vmatpush1.msra.mxu0 %v100
    %5297 = vmatprep.subr.mxu0 0.0
    %5298 = vmatpush1.msra.mxu0 %v99
    %5299 = vmatprep.subr.mxu0 0.0
    %5300 = vmatpush2.msra.mxu0 %v130
    %5301 = vmatprep.subr.mxu0 0.0
    %5302 = vmatpush2.msra.mxu0 %v129
    %5303 = vmatprep.subr.mxu0 0.0
    %5304 = vmatpush2.msra.mxu0 %v128
    %5305 = vmatprep.subr.mxu0 0.0
    %5306 = vmatpush2.msra.mxu0 %v127
    %5307 = vmatprep.subr.mxu0 0.0
    %5308 = vmatpush2.msra.mxu0 %v126
    %5309 = vmatprep.subr.mxu0 0.0
    %5310 = vmatpush2.msra.mxu0 %v125
    %5311 = vmatprep.subr.mxu0 0.0
    %5312 = vmatpush2.msra.mxu0 %v124
    %5313 = vmatprep.subr.mxu0 0.0
    %5314 = vmatpush2.msra.mxu0 %v123
    %5315 = vmatprep.subr.mxu0 0.0
    %5316 = vmatpush2.msra.mxu0 %v122
    %5317 = vmatprep.subr.mxu0 0.0
    %5318 = vmatpush2.msra.mxu0 %v121
    %5319 = vmatprep.subr.mxu0 0.0
    %5320 = vmatpush2.msra.mxu0 %v120
    %5321 = vmatprep.subr.mxu0 0.0
    %5322 = vmatpush2.msra.mxu0 %v119
    %5323 = vmatprep.subr.mxu0 0.0
    %5324 = vmatpush2.msra.mxu0 %v118
    %5325 = vmatprep.subr.mxu0 0.0
    %5326 = vmatpush2.msra.mxu0 %v117
    %5327 = vmatprep.subr.mxu0 0.0
    %5328 = vmatpush2.msra.mxu0 %v116
    %5329 = vmatprep.subr.mxu0 0.0
    %5330 = vmatpush2.msra.mxu0 %v115
    %5331 = vmatprep.mubr.f32.mxu0 %v5171
    %5332 = vmatmul.mubr.f32.gmra.mxu0 %v5169
    %v5333 = vpop.f32.mrf.mxu0
    %v5334 = vadd.f32 %v5264, %v5333
    %v5335 = vpop.f32.mrf.mxu0
    %5336 = vdwg.mxu0
    %5337 = vmatprep.subr.mxu0 0.0
    %5338 = vmatpush1.msra.mxu0 %v146
    %5339 = vmatprep.subr.mxu0 0.0
    %5340 = vmatpush1.msra.mxu0 %v145
    %5341 = vmatprep.subr.mxu0 0.0
    %5342 = vmatpush1.msra.mxu0 %v144
    %5343 = vmatprep.subr.mxu0 0.0
    %5344 = vmatpush1.msra.mxu0 %v143
    %5345 = vmatprep.subr.mxu0 0.0
    %5346 = vmatpush1.msra.mxu0 %v142
    %5347 = vmatprep.subr.mxu0 0.0
    %5348 = vmatpush1.msra.mxu0 %v141
    %5349 = vmatprep.subr.mxu0 0.0
    %5350 = vmatpush1.msra.mxu0 %v140
    %5351 = vmatprep.subr.mxu0 0.0
    %5352 = vmatpush1.msra.mxu0 %v139
    %5353 = vmatprep.subr.mxu0 0.0
    %5354 = vmatpush1.msra.mxu0 %v138
    %5355 = vmatprep.subr.mxu0 0.0
    %5356 = vmatpush1.msra.mxu0 %v137
    %5357 = vmatprep.subr.mxu0 0.0
    %5358 = vmatpush1.msra.mxu0 %v136
    %5359 = vmatprep.subr.mxu0 0.0
    %5360 = vmatpush1.msra.mxu0 %v135
    %5361 = vmatprep.subr.mxu0 0.0
    %5362 = vmatpush1.msra.mxu0 %v134
    %5363 = vmatprep.subr.mxu0 0.0
    %5364 = vmatpush1.msra.mxu0 %v133
    %5365 = vmatprep.subr.mxu0 0.0
    %5366 = vmatpush1.msra.mxu0 %v132
    %5367 = vmatprep.subr.mxu0 0.0
    %5368 = vmatpush1.msra.mxu0 %v131
    %5369 = vmatprep.subr.mxu0 0.0
    %5370 = vmatpush2.msra.mxu0 %v162
    %5371 = vmatprep.subr.mxu0 0.0
    %5372 = vmatpush2.msra.mxu0 %v161
    %5373 = vmatprep.subr.mxu0 0.0
    %5374 = vmatpush2.msra.mxu0 %v160
    %5375 = vmatprep.subr.mxu0 0.0
    %5376 = vmatpush2.msra.mxu0 %v159
    %5377 = vmatprep.subr.mxu0 0.0
    %5378 = vmatpush2.msra.mxu0 %v158
    %5379 = vmatprep.subr.mxu0 0.0
    %5380 = vmatpush2.msra.mxu0 %v157
    %5381 = vmatprep.subr.mxu0 0.0
    %5382 = vmatpush2.msra.mxu0 %v156
    %5383 = vmatprep.subr.mxu0 0.0
    %5384 = vmatpush2.msra.mxu0 %v155
    %5385 = vmatprep.subr.mxu0 0.0
    %5386 = vmatpush2.msra.mxu0 %v154
    %5387 = vmatprep.subr.mxu0 0.0
    %5388 = vmatpush2.msra.mxu0 %v153
    %5389 = vmatprep.subr.mxu0 0.0
    %5390 = vmatpush2.msra.mxu0 %v152
    %5391 = vmatprep.subr.mxu0 0.0
    %5392 = vmatpush2.msra.mxu0 %v151
    %5393 = vmatprep.subr.mxu0 0.0
    %5394 = vmatpush2.msra.mxu0 %v150
    %5395 = vmatprep.subr.mxu0 0.0
    %5396 = vmatpush2.msra.mxu0 %v149
    %5397 = vmatprep.subr.mxu0 0.0
    %5398 = vmatpush2.msra.mxu0 %v148
    %5399 = vmatprep.subr.mxu0 0.0
    %5400 = vmatpush2.msra.mxu0 %v147
    %5401 = vmatprep.mubr.f32.mxu0 %v5187
    %5402 = vmatmul.mubr.f32.gmra.mxu0 %v5179
    %v5403 = vpop.f32.mrf.mxu0
    %v5404 = vadd.f32 %v5334, %v5403
    %v5405 = vpop.f32.mrf.mxu0
    %5406 = vdwg.mxu0
    %5407 = vmatprep.subr.mxu0 0.0
    %5408 = vmatpush1.msra.mxu0 %v178
    %5409 = vmatprep.subr.mxu0 0.0
    %5410 = vmatpush1.msra.mxu0 %v177
    %5411 = vmatprep.subr.mxu0 0.0
    %5412 = vmatpush1.msra.mxu0 %v176
    %5413 = vmatprep.subr.mxu0 0.0
    %5414 = vmatpush1.msra.mxu0 %v175
    %5415 = vmatprep.subr.mxu0 0.0
    %5416 = vmatpush1.msra.mxu0 %v174
    %5417 = vmatprep.subr.mxu0 0.0
    %5418 = vmatpush1.msra.mxu0 %v173
    %5419 = vmatprep.subr.mxu0 0.0
    %5420 = vmatpush1.msra.mxu0 %v172
    %5421 = vmatprep.subr.mxu0 0.0
    %5422 = vmatpush1.msra.mxu0 %v171
    %5423 = vmatprep.subr.mxu0 0.0
    %5424 = vmatpush1.msra.mxu0 %v170
    %5425 = vmatprep.subr.mxu0 0.0
    %5426 = vmatpush1.msra.mxu0 %v169
    %5427 = vmatprep.subr.mxu0 0.0
    %5428 = vmatpush1.msra.mxu0 %v168
    %5429 = vmatprep.subr.mxu0 0.0
    %5430 = vmatpush1.msra.mxu0 %v167
    %5431 = vmatprep.subr.mxu0 0.0
    %5432 = vmatpush1.msra.mxu0 %v166
    %5433 = vmatprep.subr.mxu0 0.0
    %5434 = vmatpush1.msra.mxu0 %v165
    %5435 = vmatprep.subr.mxu0 0.0
    %5436 = vmatpush1.msra.mxu0 %v164
    %5437 = vmatprep.subr.mxu0 0.0
    %5438 = vmatpush1.msra.mxu0 %v163
    %5439 = vmatprep.subr.mxu0 0.0
    %5440 = vmatpush2.msra.mxu0 %v194
    %5441 = vmatprep.subr.mxu0 0.0
    %5442 = vmatpush2.msra.mxu0 %v193
    %5443 = vmatprep.subr.mxu0 0.0
    %5444 = vmatpush2.msra.mxu0 %v192
    %5445 = vmatprep.subr.mxu0 0.0
    %5446 = vmatpush2.msra.mxu0 %v191
    %5447 = vmatprep.subr.mxu0 0.0
    %5448 = vmatpush2.msra.mxu0 %v190
    %5449 = vmatprep.subr.mxu0 0.0
    %5450 = vmatpush2.msra.mxu0 %v189
    %5451 = vmatprep.subr.mxu0 0.0
    %5452 = vmatpush2.msra.mxu0 %v188
    %5453 = vmatprep.subr.mxu0 0.0
    %5454 = vmatpush2.msra.mxu0 %v187
    %5455 = vmatprep.subr.mxu0 0.0
    %5456 = vmatpush2.msra.mxu0 %v186
    %5457 = vmatprep.subr.mxu0 0.0
    %5458 = vmatpush2.msra.mxu0 %v185
    %5459 = vmatprep.subr.mxu0 0.0
    %5460 = vmatpush2.msra.mxu0 %v184
    %5461 = vmatprep.subr.mxu0 0.0
    %5462 = vmatpush2.msra.mxu0 %v183
    %5463 = vmatprep.subr.mxu0 0.0
    %5464 = vmatpush2.msra.mxu0 %v182
    %5465 = vmatprep.subr.mxu0 0.0
    %5466 = vmatpush2.msra.mxu0 %v181
    %5467 = vmatprep.subr.mxu0 0.0
    %5468 = vmatpush2.msra.mxu0 %v180
    %5469 = vmatprep.subr.mxu0 0.0
    %5470 = vmatpush2.msra.mxu0 %v179
    %5471 = vmatprep.mubr.f32.mxu0 %v5188
    %5472 = vmatmul.mubr.f32.gmra.mxu0 %v5186
    %v5473 = vpop.f32.mrf.mxu0
    %v5474 = vadd.f32 %v5404, %v5473
    %v5475 = vpop.f32.mrf.mxu0
    %5476 = vdwg.mxu0
    %v5477 = vmax.f32 %v5474, 0.0
    %5478 = vmatprep.subr.mxu0 %v316
    %5479 = vmatpush1.msra.mxu0 %v315
    %5480 = vmatprep.subr.mxu0 %v308
    %5481 = vmatpush1.msra.mxu0 %v307
    %5482 = vmatprep.subr.mxu0 %v300
    %5483 = vmatpush1.msra.mxu0 %v299
    %5484 = vmatprep.subr.mxu0 %v292
    %5485 = vmatpush1.msra.mxu0 %v291
    %5486 = vmatprep.subr.mxu0 %v284
    %5487 = vmatpush1.msra.mxu0 %v283
    %5488 = vmatprep.subr.mxu0 %v276
    %5489 = vmatpush1.msra.mxu0 %v275
    %5490 = vmatprep.subr.mxu0 %v268
    %5491 = vmatpush1.msra.mxu0 %v267
    %5492 = vmatprep.subr.mxu0 %v260
    %5493 = vmatpush1.msra.mxu0 %v259
    %5494 = vmatprep.subr.mxu0 %v252
    %5495 = vmatpush1.msra.mxu0 %v251
    %5496 = vmatprep.subr.mxu0 %v244
    %5497 = vmatpush1.msra.mxu0 %v243
    %5498 = vmatprep.subr.mxu0 %v236
    %5499 = vmatpush1.msra.mxu0 %v235
    %5500 = vmatprep.subr.mxu0 %v228
    %5501 = vmatpush1.msra.mxu0 %v227
    %5502 = vmatprep.subr.mxu0 %v220
    %5503 = vmatpush1.msra.mxu0 %v219
    %5504 = vmatprep.subr.mxu0 %v212
    %5505 = vmatpush1.msra.mxu0 %v211
    %5506 = vmatprep.subr.mxu0 %v204
    %5507 = vmatpush1.msra.mxu0 %v203
    %5508 = vmatprep.subr.mxu0 %v196
    %5509 = vmatpush1.msra.mxu0 %v195
    %5510 = vmatprep.subr.mxu0 0.0
    %5511 = vmatpush2.msra.mxu0 0.0
    %5512 = vmatprep.subr.mxu0 0.0
    %5513 = vmatpush2.msra.mxu0 0.0
    %5514 = vmatprep.subr.mxu0 0.0
    %5515 = vmatpush2.msra.mxu0 0.0
    %5516 = vmatprep.subr.mxu0 0.0
    %5517 = vmatpush2.msra.mxu0 0.0
    %5518 = vmatprep.subr.mxu0 0.0
    %5519 = vmatpush2.msra.mxu0 0.0
    %5520 = vmatprep.subr.mxu0 0.0
    %5521 = vmatpush2.msra.mxu0 0.0
    %5522 = vmatprep.subr.mxu0 0.0
    %5523 = vmatpush2.msra.mxu0 0.0
    %5524 = vmatprep.subr.mxu0 0.0
    %5525 = vmatpush2.msra.mxu0 0.0
    %5526 = vmatprep.subr.mxu0 0.0
    %5527 = vmatpush2.msra.mxu0 0.0
    %5528 = vmatprep.subr.mxu0 0.0
    %5529 = vmatpush2.msra.mxu0 0.0
    %5530 = vmatprep.subr.mxu0 0.0
    %5531 = vmatpush2.msra.mxu0 0.0
    %5532 = vmatprep.subr.mxu0 0.0
    %5533 = vmatpush2.msra.mxu0 0.0
    %5534 = vmatprep.subr.mxu0 0.0
    %5535 = vmatpush2.msra.mxu0 0.0
    %5536 = vmatprep.subr.mxu0 0.0
    %5537 = vmatpush2.msra.mxu0 0.0
    %5538 = vmatprep.subr.mxu0 0.0
    %5539 = vmatpush2.msra.mxu0 0.0
    %5540 = vmatprep.subr.mxu0 0.0
    %5541 = vmatpush2.msra.mxu0 0.0
    %5542 = vmatprep.mubr.f32.mxu0 0.0
    %5543 = vmatmul.mubr.f32.gmra.mxu0 %v5477
    %v5544 = vpop.f32.mrf.mxu0
    %v5545 = vadd.f32 %v660, %v5544
    %v5546 = vpop.f32.mrf.mxu0
    %v5547 = vadd.f32 %v664, %v5546
    %5548 = vdwg.mxu0
    %5549 = vmatprep.subr.mxu0 %v318
    %5550 = vmatpush1.msra.mxu0 %v317
    %5551 = vmatprep.subr.mxu0 %v310
    %5552 = vmatpush1.msra.mxu0 %v309
    %5553 = vmatprep.subr.mxu0 %v302
    %5554 = vmatpush1.msra.mxu0 %v301
    %5555 = vmatprep.subr.mxu0 %v294
    %5556 = vmatpush1.msra.mxu0 %v293
    %5557 = vmatprep.subr.mxu0 %v286
    %5558 = vmatpush1.msra.mxu0 %v285
    %5559 = vmatprep.subr.mxu0 %v278
    %5560 = vmatpush1.msra.mxu0 %v277
    %5561 = vmatprep.subr.mxu0 %v270
    %5562 = vmatpush1.msra.mxu0 %v269
    %5563 = vmatprep.subr.mxu0 %v262
    %5564 = vmatpush1.msra.mxu0 %v261
    %5565 = vmatprep.subr.mxu0 %v254
    %5566 = vmatpush1.msra.mxu0 %v253
    %5567 = vmatprep.subr.mxu0 %v246
    %5568 = vmatpush1.msra.mxu0 %v245
    %5569 = vmatprep.subr.mxu0 %v238
    %5570 = vmatpush1.msra.mxu0 %v237
    %5571 = vmatprep.subr.mxu0 %v230
    %5572 = vmatpush1.msra.mxu0 %v229
    %5573 = vmatprep.subr.mxu0 %v222
    %5574 = vmatpush1.msra.mxu0 %v221
    %5575 = vmatprep.subr.mxu0 %v214
    %5576 = vmatpush1.msra.mxu0 %v213
    %5577 = vmatprep.subr.mxu0 %v206
    %5578 = vmatpush1.msra.mxu0 %v205
    %5579 = vmatprep.subr.mxu0 %v198
    %5580 = vmatpush1.msra.mxu0 %v197
    %5581 = vmatprep.subr.mxu0 0.0
    %5582 = vmatpush2.msra.mxu0 0.0
    %5583 = vmatprep.subr.mxu0 0.0
    %5584 = vmatpush2.msra.mxu0 0.0
    %5585 = vmatprep.subr.mxu0 0.0
    %5586 = vmatpush2.msra.mxu0 0.0
    %5587 = vmatprep.subr.mxu0 0.0
    %5588 = vmatpush2.msra.mxu0 0.0
    %5589 = vmatprep.subr.mxu0 0.0
    %5590 = vmatpush2.msra.mxu0 0.0
    %5591 = vmatprep.subr.mxu0 0.0
    %5592 = vmatpush2.msra.mxu0 0.0
    %5593 = vmatprep.subr.mxu0 0.0
    %5594 = vmatpush2.msra.mxu0 0.0
    %5595 = vmatprep.subr.mxu0 0.0
    %5596 = vmatpush2.msra.mxu0 0.0
    %5597 = vmatprep.subr.mxu0 0.0
    %5598 = vmatpush2.msra.mxu0 0.0
    %5599 = vmatprep.subr.mxu0 0.0
    %5600 = vmatpush2.msra.mxu0 0.0
    %5601 = vmatprep.subr.mxu0 0.0
    %5602 = vmatpush2.msra.mxu0 0.0
    %5603 = vmatprep.subr.mxu0 0.0
    %5604 = vmatpush2.msra.mxu0 0.0
    %5605 = vmatprep.subr.mxu0 0.0
    %5606 = vmatpush2.msra.mxu0 0.0
    %5607 = vmatprep.subr.mxu0 0.0
    %5608 = vmatpush2.msra.mxu0 0.0
    %5609 = vmatprep.subr.mxu0 0.0
    %5610 = vmatpush2.msra.mxu0 0.0
    %5611 = vmatprep.subr.mxu0 0.0
    %5612 = vmatpush2.msra.mxu0 0.0
    %5613 = vmatprep.mubr.f32.mxu0 0.0
    %5614 = vmatmul.mubr.f32.gmra.mxu0 %v5477
    %v5615 = vpop.f32.mrf.mxu0
    %v5616 = vadd.f32 %v668, %v5615
    %v5617 = vpop.f32.mrf.mxu0
    %v5618 = vadd.f32 %v672, %v5617
    %5619 = vdwg.mxu0
    %5620 = vmatprep.subr.mxu0 %v320
    %5621 = vmatpush1.msra.mxu0 %v319
    %5622 = vmatprep.subr.mxu0 %v312
    %5623 = vmatpush1.msra.mxu0 %v311
    %5624 = vmatprep.subr.mxu0 %v304
    %5625 = vmatpush1.msra.mxu0 %v303
    %5626 = vmatprep.subr.mxu0 %v296
    %5627 = vmatpush1.msra.mxu0 %v295
    %5628 = vmatprep.subr.mxu0 %v288
    %5629 = vmatpush1.msra.mxu0 %v287
    %5630 = vmatprep.subr.mxu0 %v280
    %5631 = vmatpush1.msra.mxu0 %v279
    %5632 = vmatprep.subr.mxu0 %v272
    %5633 = vmatpush1.msra.mxu0 %v271
    %5634 = vmatprep.subr.mxu0 %v264
    %5635 = vmatpush1.msra.mxu0 %v263
    %5636 = vmatprep.subr.mxu0 %v256
    %5637 = vmatpush1.msra.mxu0 %v255
    %5638 = vmatprep.subr.mxu0 %v248
    %5639 = vmatpush1.msra.mxu0 %v247
    %5640 = vmatprep.subr.mxu0 %v240
    %5641 = vmatpush1.msra.mxu0 %v239
    %5642 = vmatprep.subr.mxu0 %v232
    %5643 = vmatpush1.msra.mxu0 %v231
    %5644 = vmatprep.subr.mxu0 %v224
    %5645 = vmatpush1.msra.mxu0 %v223
    %5646 = vmatprep.subr.mxu0 %v216
    %5647 = vmatpush1.msra.mxu0 %v215
    %5648 = vmatprep.subr.mxu0 %v208
    %5649 = vmatpush1.msra.mxu0 %v207
    %5650 = vmatprep.subr.mxu0 %v200
    %5651 = vmatpush1.msra.mxu0 %v199
    %5652 = vmatprep.subr.mxu0 0.0
    %5653 = vmatpush2.msra.mxu0 0.0
    %5654 = vmatprep.subr.mxu0 0.0
    %5655 = vmatpush2.msra.mxu0 0.0
    %5656 = vmatprep.subr.mxu0 0.0
    %5657 = vmatpush2.msra.mxu0 0.0
    %5658 = vmatprep.subr.mxu0 0.0
    %5659 = vmatpush2.msra.mxu0 0.0
    %5660 = vmatprep.subr.mxu0 0.0
    %5661 = vmatpush2.msra.mxu0 0.0
    %5662 = vmatprep.subr.mxu0 0.0
    %5663 = vmatpush2.msra.mxu0 0.0
    %5664 = vmatprep.subr.mxu0 0.0
    %5665 = vmatpush2.msra.mxu0 0.0
    %5666 = vmatprep.subr.mxu0 0.0
    %5667 = vmatpush2.msra.mxu0 0.0
    %5668 = vmatprep.subr.mxu0 0.0
    %5669 = vmatpush2.msra.mxu0 0.0
    %5670 = vmatprep.subr.mxu0 0.0
    %5671 = vmatpush2.msra.mxu0 0.0
    %5672 = vmatprep.subr.mxu0 0.0
    %5673 = vmatpush2.msra.mxu0 0.0
    %5674 = vmatprep.subr.mxu0 0.0
    %5675 = vmatpush2.msra.mxu0 0.0
    %5676 = vmatprep.subr.mxu0 0.0
    %5677 = vmatpush2.msra.mxu0 0.0
    %5678 = vmatprep.subr.mxu0 0.0
    %5679 = vmatpush2.msra.mxu0 0.0
    %5680 = vmatprep.subr.mxu0 0.0
    %5681 = vmatpush2.msra.mxu0 0.0
    %5682 = vmatprep.subr.mxu0 0.0
    %5683 = vmatpush2.msra.mxu0 0.0
    %5684 = vmatprep.mubr.f32.mxu0 0.0
    %5685 = vmatmul.mubr.f32.gmra.mxu0 %v5477
    %v5686 = vpop.f32.mrf.mxu0
    %v5687 = vadd.f32 %v676, %v5686
    %v5688 = vpop.f32.mrf.mxu0
    %v5689 = vadd.f32 %v680, %v5688
    %5690 = vdwg.mxu0
    %5691 = vmatprep.subr.mxu0 %v322
    %5692 = vmatpush1.msra.mxu0 %v321
    %5693 = vmatprep.subr.mxu0 %v314
    %5694 = vmatpush1.msra.mxu0 %v313
    %5695 = vmatprep.subr.mxu0 %v306
    %5696 = vmatpush1.msra.mxu0 %v305
    %5697 = vmatprep.subr.mxu0 %v298
    %5698 = vmatpush1.msra.mxu0 %v297
    %5699 = vmatprep.subr.mxu0 %v290
    %5700 = vmatpush1.msra.mxu0 %v289
    %5701 = vmatprep.subr.mxu0 %v282
    %5702 = vmatpush1.msra.mxu0 %v281
    %5703 = vmatprep.subr.mxu0 %v274
    %5704 = vmatpush1.msra.mxu0 %v273
    %5705 = vmatprep.subr.mxu0 %v266
    %5706 = vmatpush1.msra.mxu0 %v265
    %5707 = vmatprep.subr.mxu0 %v258
    %5708 = vmatpush1.msra.mxu0 %v257
    %5709 = vmatprep.subr.mxu0 %v250
    %5710 = vmatpush1.msra.mxu0 %v249
    %5711 = vmatprep.subr.mxu0 %v242
    %5712 = vmatpush1.msra.mxu0 %v241
    %5713 = vmatprep.subr.mxu0 %v234
    %5714 = vmatpush1.msra.mxu0 %v233
    %5715 = vmatprep.subr.mxu0 %v226
    %5716 = vmatpush1.msra.mxu0 %v225
    %5717 = vmatprep.subr.mxu0 %v218
    %5718 = vmatpush1.msra.mxu0 %v217
    %5719 = vmatprep.subr.mxu0 %v210
    %5720 = vmatpush1.msra.mxu0 %v209
    %5721 = vmatprep.subr.mxu0 %v202
    %5722 = vmatpush1.msra.mxu0 %v201
    %5723 = vmatprep.subr.mxu0 0.0
    %5724 = vmatpush2.msra.mxu0 0.0
    %5725 = vmatprep.subr.mxu0 0.0
    %5726 = vmatpush2.msra.mxu0 0.0
    %5727 = vmatprep.subr.mxu0 0.0
    %5728 = vmatpush2.msra.mxu0 0.0
    %5729 = vmatprep.subr.mxu0 0.0
    %5730 = vmatpush2.msra.mxu0 0.0
    %5731 = vmatprep.subr.mxu0 0.0
    %5732 = vmatpush2.msra.mxu0 0.0
    %5733 = vmatprep.subr.mxu0 0.0
    %5734 = vmatpush2.msra.mxu0 0.0
    %5735 = vmatprep.subr.mxu0 0.0
    %5736 = vmatpush2.msra.mxu0 0.0
    %5737 = vmatprep.subr.mxu0 0.0
    %5738 = vmatpush2.msra.mxu0 0.0
    %5739 = vmatprep.subr.mxu0 0.0
    %5740 = vmatpush2.msra.mxu0 0.0
    %5741 = vmatprep.subr.mxu0 0.0
    %5742 = vmatpush2.msra.mxu0 0.0
    %5743 = vmatprep.subr.mxu0 0.0
    %5744 = vmatpush2.msra.mxu0 0.0
    %5745 = vmatprep.subr.mxu0 0.0
    %5746 = vmatpush2.msra.mxu0 0.0
    %5747 = vmatprep.subr.mxu0 0.0
    %5748 = vmatpush2.msra.mxu0 0.0
    %5749 = vmatprep.subr.mxu0 0.0
    %5750 = vmatpush2.msra.mxu0 0.0
    %5751 = vmatprep.subr.mxu0 0.0
    %5752 = vmatpush2.msra.mxu0 0.0
    %5753 = vmatprep.subr.mxu0 0.0
    %5754 = vmatpush2.msra.mxu0 0.0
    %5755 = vmatprep.mubr.f32.mxu0 0.0
    %5756 = vmatmul.mubr.f32.gmra.mxu0 %v5477
    %v5757 = vpop.f32.mrf.mxu0
    %v5758 = vadd.f32 %v684, %v5757
    %v5759 = vpop.f32.mrf.mxu0
    %v5760 = vadd.f32 %v688, %v5759
    %5761 = vdwg.mxu0
    %s5762 = sld [smem:[#allocation2]]
    %s5763 = sld [smem:[#allocation2 + $0x1]]
    %v5764 = vstv %s5763
    %v5765 = vmul.f32 %v5764, %v5545
    %v5766 = vmul.f32 %v5764, %v5547
    %v5767 = vmul.f32 %v5764, %v5616
    %v5768 = vmul.f32 %v5764, %v5618
    %v5769 = vmul.f32 %v5764, %v5687
    %v5770 = vmul.f32 %v5764, %v5689
    %v5771 = vmul.f32 %v5764, %v5758
    %v5772 = vmul.f32 %v5764, %v5760
    %v5781 = vcombine.low %v5765, %v5766
    %v5782 = vcombine.low %v5767, %v5768
    %v5784 = vunpack.c.l.s4 1983009808
    %v5785 = vunpack.c.0.s8 %v5784
    %v5786 = vlaneseq
    %v5787 = vshrl.u32 %v5786, 7
    %v5788 = vsub.s32 %v5785, %v5787
    %v5789 = vrot.slane %v5781, %v5788
    %v5791 = vunpack.c.l.s4 1983009808
    %v5792 = vunpack.c.0.s8 %v5791
    %v5793 = vlaneseq
    %v5794 = vshrl.u32 %v5793, 7
    %v5795 = vsub.s32 %v5792, %v5794
    %v5796 = vrot.slane %v5782, %v5795
    %v5797 = vcombine.low %v5789, %v5796
    %v5798 = vcombine.low %v5769, %v5770
    %v5799 = vcombine.low %v5771, %v5772
    %v5801 = vunpack.c.l.s4 1983009808
    %v5802 = vunpack.c.0.s8 %v5801
    %v5803 = vlaneseq
    %v5804 = vshrl.u32 %v5803, 7
    %v5805 = vsub.s32 %v5802, %v5804
    %v5806 = vrot.slane %v5798, %v5805
    %v5808 = vunpack.c.l.s4 1983009808
    %v5809 = vunpack.c.0.s8 %v5808
    %v5810 = vlaneseq
    %v5811 = vshrl.u32 %v5810, 7
    %v5812 = vsub.s32 %v5809, %v5811
    %v5813 = vrot.slane %v5799, %v5812
    %v5814 = vcombine.low %v5806, %v5813
    %v5817 = vsub.f32 %v5146, %v5797
    %v5818 = vsub.f32 %v5147, %v5814
    %v5819 = vstv %s5762
    %v5820 = vmul.f32 %v5819, %v5817
    %v5821 = vmul.f32 %v5819, %v5818
    %5822 = vst [vmem:[%s7] sm:$0xff] %v5820
    %5823 = vst [vmem:[%s7 + $0x8] sm:$0xff] %v5821
    // Predicated region
    $region42: #{_forward_jit.1} parent=1 // pred_check
      _
    $region43: #{_forward_jit.1} parent=1 // pred_check_branch
      %5825 = sbr.rel (0) target = $region45
    $region44: #{_forward_jit.1} parent=1 // pred_region
      _
    $region45: #{_forward_jit.1} parent=1 // pred_fallthru
      _
    // Predicated region
    $region46: #{_forward_jit.1} parent=1 // pred_check
      _
    $region47: #{_forward_jit.1} parent=1 // pred_check_branch
      %5827 = sbr.rel (0) target = $region49
    $region48: #{_forward_jit.1} parent=1 // pred_region
      _
    $region49: #{_forward_jit.1} parent=1 // pred_fallthru
      _
    %5828 = vsyncpa [#allocation3], 1
    %5829 = vsyncpa [#allocation7], 1
    %5830 = vsyncpa [#allocation4], 1

</llo_original>
